<compile_context>
chip_gen: v7x
topology: tpu7x:2x2x1
jax: 0.10.0
libtpu: 0.0.40
codegen_flags: <defaults>
</compile_context>

<pallas_src>
import functools
import math

import jax
import jax.numpy as jnp
from jax.experimental import pallas as pl
from jax.experimental.pallas import tpu as pltpu

NEG_INF = -1e9  # large negative for padded label columns (keeps f32 finite)


def _tile(dim, target, align):
    """Largest tile <= target that divides `dim`; falls back to the full dim."""
    if dim <= target or dim % align != 0:
        return dim
    t = max(align, (target // align) * align)
    while dim % t != 0:
        t -= align
    return t


def _gelu_tanh(y):
    # tanh-approximate GELU kept in f32 (v5e has no bf16 VPU/EUP).
    # TODO(synk): HF BERT uses exact erf-GELU; erf has no clean Mosaic lowering.
    c = math.sqrt(2.0 / math.pi)
    return 0.5 * y * (1.0 + jnp.tanh(c * (y + 0.044715 * y * y * y)))


# ----------------------------------------------------------------------------
# Fused linear (+bias, optional GELU): bf16 MXU operands, f32 accumulation
# ----------------------------------------------------------------------------

def _linear_kernel(x_ref, w_ref, b_ref, o_ref, acc_ref, *, activation):
    @pl.when(pl.program_id(2) == 0)
    def _():
        acc_ref[...] = jnp.zeros(acc_ref.shape, jnp.float32)

    acc_ref[...] += jnp.dot(x_ref[...], w_ref[...],
                            preferred_element_type=jnp.float32)

    @pl.when(pl.program_id(2) == pl.num_programs(2) - 1)
    def _():
        y = acc_ref[...] + b_ref[...]
        if activation == "gelu":
            y = _gelu_tanh(y)
        o_ref[...] = y.astype(o_ref.dtype)


def linear(x, w, b, activation=None, out_dtype=jnp.float32):
    """x: (M, K), w: (K, N), b: (N,) -> (M, N). bf16 operands on the MXU."""
    M, K = x.shape
    _, N = w.shape
    tm = _tile(M, 128, 8)     # 128-row tiles fill the MXU on v5e/v6e/v7x
    tn = _tile(N, 256, 128)   # lane-dense 128/256-wide output tiles
    tk = _tile(K, 512, 128)
    return pl.pallas_call(
        functools.partial(_linear_kernel, activation=activation),
        out_shape=jax.ShapeDtypeStruct((M, N), out_dtype),
        grid=(M // tm, N // tn, K // tk),
        in_specs=[
            pl.BlockSpec((tm, tk), lambda i, j, k: (i, k)),
            pl.BlockSpec((tk, tn), lambda i, j, k: (k, j)),
            pl.BlockSpec((1, tn), lambda i, j, k: (0, j)),
        ],
        out_specs=pl.BlockSpec((tm, tn), lambda i, j, k: (i, j)),
        scratch_shapes=[pltpu.VMEM((tm, tn), jnp.float32)],
        compiler_params=pltpu.CompilerParams(
            dimension_semantics=("parallel", "parallel", "arbitrary")),
    )(x.astype(jnp.bfloat16), w.astype(jnp.bfloat16),
      b.reshape(1, N).astype(jnp.float32))


# ----------------------------------------------------------------------------
# Fused linear + bias + residual add + LayerNorm (single epilogue)
# ----------------------------------------------------------------------------

def _linear_add_ln_kernel(x_ref, w_ref, b_ref, r_ref, g_ref, bt_ref,
                          o_ref, acc_ref, *, eps):
    @pl.when(pl.program_id(1) == 0)
    def _():
        acc_ref[...] = jnp.zeros(acc_ref.shape, jnp.float32)

    acc_ref[...] += jnp.dot(x_ref[...], w_ref[...],
                            preferred_element_type=jnp.float32)

    @pl.when(pl.program_id(1) == pl.num_programs(1) - 1)
    def _():
        y = acc_ref[...] + b_ref[...] + r_ref[...]
        mu = jnp.mean(y, axis=-1, keepdims=True)
        yc = y - mu
        var = jnp.mean(yc * yc, axis=-1, keepdims=True)
        o_ref[...] = yc * jax.lax.rsqrt(var + eps) * g_ref[...] + bt_ref[...]


def linear_add_layernorm(x, w, b, resid, gamma, beta, eps=1e-12):
    """LayerNorm(x @ w + b + resid); projection output never touches HBM."""
    M, K = x.shape
    _, N = w.shape
    tm = _tile(M, 128, 8)
    tk = _tile(K, 512, 128)
    return pl.pallas_call(
        functools.partial(_linear_add_ln_kernel, eps=eps),
        out_shape=jax.ShapeDtypeStruct((M, N), jnp.float32),
        grid=(M // tm, K // tk),
        in_specs=[
            pl.BlockSpec((tm, tk), lambda i, k: (i, k)),
            pl.BlockSpec((tk, N), lambda i, k: (k, 0)),
            pl.BlockSpec((1, N), lambda i, k: (0, 0)),
            pl.BlockSpec((tm, N), lambda i, k: (i, 0)),
            pl.BlockSpec((1, N), lambda i, k: (0, 0)),
            pl.BlockSpec((1, N), lambda i, k: (0, 0)),
        ],
        out_specs=pl.BlockSpec((tm, N), lambda i, k: (i, 0)),
        scratch_shapes=[pltpu.VMEM((tm, N), jnp.float32)],
        compiler_params=pltpu.CompilerParams(
            dimension_semantics=("parallel", "arbitrary")),
    )(x.astype(jnp.bfloat16), w.astype(jnp.bfloat16),
      b.reshape(1, N).astype(jnp.float32), resid.astype(jnp.float32),
      gamma.reshape(1, N).astype(jnp.float32),
      beta.reshape(1, N).astype(jnp.float32))


# ----------------------------------------------------------------------------
# LayerNorm (embedding output), row-tiled
# ----------------------------------------------------------------------------

def _ln_kernel(x_ref, g_ref, b_ref, o_ref, *, eps):
    x = x_ref[...]
    mu = jnp.mean(x, axis=-1, keepdims=True)
    xc = x - mu
    var = jnp.mean(xc * xc, axis=-1, keepdims=True)
    o_ref[...] = xc * jax.lax.rsqrt(var + eps) * g_ref[...] + b_ref[...]


def layernorm(x, gamma, beta, eps=1e-12):
    M, H = x.shape
    tm = _tile(M, 512, 8)
    return pl.pallas_call(
        functools.partial(_ln_kernel, eps=eps),
        out_shape=jax.ShapeDtypeStruct((M, H), jnp.float32),
        grid=(M // tm,),
        in_specs=[pl.BlockSpec((tm, H), lambda i: (i, 0)),
                  pl.BlockSpec((1, H), lambda i: (0, 0)),
                  pl.BlockSpec((1, H), lambda i: (0, 0))],
        out_specs=pl.BlockSpec((tm, H), lambda i: (i, 0)),
        compiler_params=pltpu.CompilerParams(dimension_semantics=("parallel",)),
    )(x, gamma.reshape(1, H), beta.reshape(1, H))


# ----------------------------------------------------------------------------
# Flash-style attention: online softmax, no full (B, nH, S, S) score tensor
# ----------------------------------------------------------------------------

def _flash_attn_kernel(q_ref, k_ref, v_ref, mb_ref, o_ref,
                       m_sc, l_sc, acc_sc, *, scale):
    kv = pl.program_id(3)

    @pl.when(kv == 0)
    def _():
        m_sc[...] = jnp.full(m_sc.shape, -jnp.inf, jnp.float32)
        l_sc[...] = jnp.zeros(l_sc.shape, jnp.float32)
        acc_sc[...] = jnp.zeros(acc_sc.shape, jnp.float32)

    q = q_ref[0, 0]                                  # (tq, dh) bf16
    k = k_ref[0, 0]                                  # (tk, dh) bf16
    v = v_ref[0, 0]                                  # (tk, dh) bf16
    s = jax.lax.dot_general(q, k, (((1,), (1,)), ((), ())),
                            preferred_element_type=jnp.float32) * scale
    s = s + mb_ref[0]                                # (1, tk) additive mask bias

    m_new = jnp.maximum(m_sc[...], jnp.max(s, axis=-1, keepdims=True))
    alpha = jnp.exp(m_sc[...] - m_new)
    p = jnp.exp(s - m_new)
    l_sc[...] = alpha * l_sc[...] + jnp.sum(p, axis=-1, keepdims=True)
    acc_sc[...] = alpha * acc_sc[...] + jnp.dot(p.astype(v.dtype), v,
                                                preferred_element_type=jnp.float32)
    m_sc[...] = m_new

    @pl.when(kv == pl.num_programs(3) - 1)
    def _():
        # EUP approximate reciprocal: runs in the otherwise-idle EUP slot.
        inv_l = pl.reciprocal(l_sc[...], approx=True)
        o_ref[0, 0] = (acc_sc[...] * inv_l).astype(o_ref.dtype)


def attention(q, k, v, mask_bias, scale):
    B, nH, S, dh = q.shape
    tq = _tile(S, 256, 8)
    tkv = _tile(S, 256, 128)
    return pl.pallas_call(
        functools.partial(_flash_attn_kernel, scale=scale),
        out_shape=jax.ShapeDtypeStruct((B, nH, S, dh), jnp.bfloat16),
        grid=(B, nH, S // tq, S // tkv),
        in_specs=[
            pl.BlockSpec((1, 1, tq, dh), lambda b, h, i, j: (b, h, i, 0)),
            pl.BlockSpec((1, 1, tkv, dh), lambda b, h, i, j: (b, h, j, 0)),
            pl.BlockSpec((1, 1, tkv, dh), lambda b, h, i, j: (b, h, j, 0)),
            pl.BlockSpec((1, 1, tkv), lambda b, h, i, j: (b, 0, j)),
        ],
        out_specs=pl.BlockSpec((1, 1, tq, dh), lambda b, h, i, j: (b, h, i, 0)),
        scratch_shapes=[pltpu.VMEM((tq, 1), jnp.float32),
                        pltpu.VMEM((tq, 1), jnp.float32),
                        pltpu.VMEM((tq, dh), jnp.float32)],
        compiler_params=pltpu.CompilerParams(
            dimension_semantics=("parallel", "parallel", "parallel", "arbitrary")),
    )(q.astype(jnp.bfloat16), k.astype(jnp.bfloat16), v.astype(jnp.bfloat16),
      mask_bias)


# ----------------------------------------------------------------------------
# CRF log-likelihood: gold-path score (vectorized) + forward algorithm (fori_loop)
# ----------------------------------------------------------------------------

def _crf_kernel(em_ref, oh_ref, mk_ref, t_ref, tt_ref, st_ref, en_ref, llh_ref,
                *, seq_len):
    S = seq_len
    em = em_ref[0]                                   # (S, LP) emissions
    oh = oh_ref[0]                                   # (S, LP) one-hot gold tags
    mk = mk_ref[0]                                   # (S, 1)  float mask
    T = t_ref[...]                                   # (LP, LP) transitions[i, j]
    Tt = tt_ref[...]                                 # (LP, LP) transposed
    st = st_ref[...]                                 # (1, LP) start transitions
    en = en_ref[...]                                 # (1, LP) end transitions

    # ---- numerator: gold-path score (torchcrf._compute_score), no seq loop ----
    em_sc = jnp.sum(oh * em, axis=-1, keepdims=True)                       # (S, 1)
    start_sc = jnp.sum(st * oh[0:1, :], axis=-1, keepdims=True)            # (1, 1)
    tr = jnp.sum(jnp.dot(oh[:S - 1, :], T, preferred_element_type=jnp.float32)
                 * oh[1:, :], axis=-1, keepdims=True)                      # (S-1, 1)
    step_sc = jnp.sum((tr + em_sc[1:, :]) * mk[1:, :], axis=0, keepdims=True)

    length = jnp.sum(mk, axis=0, keepdims=True).astype(jnp.int32)          # (1, 1)
    pos = jax.lax.broadcasted_iota(jnp.int32, (S, 1), 0)
    sel = (pos == length - 1).astype(jnp.float32)                          # (S, 1)
    last_oh = jnp.sum(sel * oh, axis=0, keepdims=True)                     # (1, LP)
    end_sc = jnp.sum(last_oh * en, axis=-1, keepdims=True)                 # (1, 1)
    numerator = start_sc + em_sc[0:1, :] + step_sc + end_sc                # (1, 1)

    # ---- denominator: forward algorithm (torchcrf._compute_normalizer) ----
    alpha0 = st + em[0:1, :]                                               # (1, LP)

    def body(s, alpha):
        em_s = em_ref[0, pl.ds(s, 1), :]                                   # (1, LP)
        keep = mk_ref[0, pl.ds(s, 1), :]                                   # (1, 1)
        m = alpha + Tt                                   # (LP, LP): alpha_i + T[i, j]
        mx = jnp.max(m, axis=-1, keepdims=True)                            # (LP, 1)
        lse = jnp.log(jnp.sum(jnp.exp(m - mx), axis=-1, keepdims=True)) + mx
        new = jnp.transpose(lse) + em_s                                    # (1, LP)
        return keep * new + (1.0 - keep) * alpha

    alpha = jax.lax.fori_loop(1, S, body, alpha0, unroll=(S <= 16))

    final = alpha + en                                                     # (1, LP)
    mx = jnp.max(final, axis=-1, keepdims=True)
    logz = jnp.log(jnp.sum(jnp.exp(final - mx), axis=-1, keepdims=True)) + mx

    llh_ref[0] = numerator - logz                                          # (1, 1)


def crf_log_likelihood(emissions, one_hot, mask_col, trans, trans_t, start, end):
    B, S, LP = emissions.shape
    return pl.pallas_call(
        functools.partial(_crf_kernel, seq_len=S),
        out_shape=jax.ShapeDtypeStruct((B, 1, 1), jnp.float32),
        grid=(B,),
        in_specs=[
            pl.BlockSpec((1, S, LP), lambda b: (b, 0, 0)),
            pl.BlockSpec((1, S, LP), lambda b: (b, 0, 0)),
            pl.BlockSpec((1, S, 1), lambda b: (b, 0, 0)),
            pl.BlockSpec((LP, LP), lambda b: (0, 0)),
            pl.BlockSpec((LP, LP), lambda b: (0, 0)),
            pl.BlockSpec((1, LP), lambda b: (0, 0)),
            pl.BlockSpec((1, LP), lambda b: (0, 0)),
        ],
        out_specs=pl.BlockSpec((1, 1, 1), lambda b: (b, 0, 0)),
        compiler_params=pltpu.CompilerParams(dimension_semantics=("parallel",)),
    )(emissions, one_hot, mask_col, trans, trans_t, start, end)


# ----------------------------------------------------------------------------
# Model glue (plain JAX): embeddings, head reshapes, parameter plumbing
# ----------------------------------------------------------------------------

def bert_layer(x, lp, mask_bias, num_heads):
    B, S, H = x.shape
    dh = H // num_heads
    xf = x.reshape(B * S, H)

    # fused QKV projection: one wide MXU pass instead of three narrow ones;
    # output stays bf16 (its only consumer is the bf16 attention kernel).
    qkv_w = jnp.concatenate([lp["q_w"], lp["k_w"], lp["v_w"]], axis=1)   # (H, 3H)
    qkv_b = jnp.concatenate([lp["q_b"], lp["k_b"], lp["v_b"]], axis=0)   # (3H,)
    qkv = linear(xf, qkv_w, qkv_b, out_dtype=jnp.bfloat16)               # (B*S, 3H)

    def heads(t):
        return t.reshape(B, S, num_heads, dh).transpose(0, 2, 1, 3)

    q = heads(qkv[:, :H])
    k = heads(qkv[:, H:2 * H])
    v = heads(qkv[:, 2 * H:])

    ctx = attention(q, k, v, mask_bias, scale=1.0 / math.sqrt(dh))
    ctx = ctx.transpose(0, 2, 1, 3).reshape(B * S, H)

    # attention-output projection + residual + LayerNorm fused (single kernel,
    # no HBM round-trip of the projection result)
    x1 = linear_add_layernorm(ctx, lp["ao_w"], lp["ao_b"], xf,
                              lp["ln1_g"], lp["ln1_b"])

    # FFN: GELU fused into the first matmul epilogue (bf16 intermediate),
    # second matmul fused with residual + LayerNorm.
    inter = linear(x1, lp["i_w"], lp["i_b"], activation="gelu",
                   out_dtype=jnp.bfloat16)
    x2 = linear_add_layernorm(inter, lp["o_w"], lp["o_b"], x1,
                              lp["ln2_g"], lp["ln2_b"])
    return x2.reshape(B, S, H)


def bert_crf_forward(params, input_ids, attention_mask, labels, *, num_heads):
    B, S = input_ids.shape
    H = params["word_emb"].shape[1]
    L = params["cls_w"].shape[1]
    LP = ((L + 127) // 128) * 128          # lane-dense classifier / CRF width

    # embeddings (gather/adds are glue; LN is a Pallas kernel)
    emb = (jnp.take(params["word_emb"], input_ids, axis=0)
           + params["pos_emb"][:S][None, :, :]
           + params["type_emb"][0][None, None, :])
    x = layernorm(emb.reshape(B * S, H),
                  params["emb_ln_g"], params["emb_ln_b"]).reshape(B, S, H)

    mask_f = attention_mask.astype(jnp.float32)                   # (B, S)
    mask_bias = ((1.0 - mask_f) * -10000.0).reshape(B, 1, S)      # additive bias

    for lp in params["layers"]:
        x = bert_layer(x, lp, mask_bias, num_heads)

    # token classifier: pad output to a 128-lane slab (unmasked vst stores)
    cls_w = jnp.pad(params["cls_w"], ((0, 0), (0, LP - L)))
    cls_b = jnp.pad(params["cls_b"], (0, LP - L))
    logits_p = linear(x.reshape(B * S, H), cls_w, cls_b).reshape(B, S, LP)
    logits = logits_p[..., :L]

    # CRF on the 128-padded label slab: invalid columns get -1e9 emissions so
    # they never contribute to logsumexp; padded transition entries are zeros.
    valid = jnp.arange(LP) < L
    emissions = jnp.where(valid[None, None, :], logits_p, NEG_INF)
    one_hot = jax.nn.one_hot(labels, LP, dtype=jnp.float32)
    trans = jnp.pad(params["crf_trans"], ((0, LP - L), (0, LP - L)))
    start = jnp.pad(params["crf_start"], (0, LP - L)).reshape(1, LP)
    end = jnp.pad(params["crf_end"], (0, LP - L)).reshape(1, LP)

    llh = crf_log_likelihood(emissions, one_hot, mask_f.reshape(B, S, 1),
                             trans, trans.T, start, end)

    # torchcrf reduction='sum' -> scalar; the reference .mean() of that scalar
    # is a no-op, so loss = -(sum over batch of per-sequence log-likelihood).
    loss = -jnp.sum(llh)
    return loss, logits


# ----------------------------------------------------------------------------
# Deterministic synthetic parameters
# ----------------------------------------------------------------------------

def init_params(key, *, vocab, hidden, heads, inter, labels, layers, max_pos):
    del heads  # static model config; intentionally NOT stored in the traced pytree
    keys = jax.random.split(key, 256)
    idx = [0]

    def nxt():
        k = keys[idx[0]]
        idx[0] += 1
        return k

    def nrm(shape):
        return jax.random.normal(nxt(), shape, jnp.float32) * 0.02

    def unif(shape):
        return jax.random.uniform(nxt(), shape, jnp.float32, -0.1, 0.1)

    p = {
        "word_emb": nrm((vocab, hidden)),
        "pos_emb": nrm((max_pos, hidden)),
        "type_emb": nrm((2, hidden)),
        "emb_ln_g": jnp.ones((hidden,), jnp.float32),
        "emb_ln_b": jnp.zeros((hidden,), jnp.float32),
        "layers": [],
        "cls_w": nrm((hidden, labels)),
        "cls_b": jnp.zeros((labels,), jnp.float32),
        "crf_start": unif((labels,)),
        "crf_end": unif((labels,)),
        "crf_trans": unif((labels, labels)),
    }
    for _ in range(layers):
        p["layers"].append({
            "q_w": nrm((hidden, hidden)), "q_b": jnp.zeros((hidden,), jnp.float32),
            "k_w": nrm((hidden, hidden)), "k_b": jnp.zeros((hidden,), jnp.float32),
            "v_w": nrm((hidden, hidden)), "v_b": jnp.zeros((hidden,), jnp.float32),
            "ao_w": nrm((hidden, hidden)), "ao_b": jnp.zeros((hidden,), jnp.float32),
            "ln1_g": jnp.ones((hidden,), jnp.float32),
            "ln1_b": jnp.zeros((hidden,), jnp.float32),
            "i_w": nrm((hidden, inter)), "i_b": jnp.zeros((inter,), jnp.float32),
            "o_w": nrm((inter, hidden)), "o_b": jnp.zeros((hidden,), jnp.float32),
            "ln2_g": jnp.ones((hidden,), jnp.float32),
            "ln2_b": jnp.zeros((hidden,), jnp.float32),
        })
    return p


# ----------------------------------------------------------------------------
# Main
# ----------------------------------------------------------------------------

if __name__ == "__main__":
    B, S = 2, 8
    VOCAB, H, NH, INTER, NUM_LABELS, NUM_LAYERS, MAX_POS = 64, 32, 2, 64, 5, 2, 16

    root = jax.random.PRNGKey(0)
    k_ids, k_lab, k_par = jax.random.split(root, 3)

    input_ids = jax.random.randint(k_ids, (B, S), 0, VOCAB, dtype=jnp.int32)
    # mask[:, 0] must be 1 (torchcrf requirement); second sequence has padding.
    attention_mask = jnp.array([[1, 1, 1, 1, 1, 1, 1, 1],
                                [1, 1, 1, 1, 1, 1, 0, 0]], dtype=jnp.int32)
    labels = jax.random.randint(k_lab, (B, S), 0, NUM_LABELS, dtype=jnp.int32)

    params = init_params(k_par, vocab=VOCAB, hidden=H, heads=NH, inter=INTER,
                         labels=NUM_LABELS, layers=NUM_LAYERS, max_pos=MAX_POS)

    # num_heads is static model config (bound via partial, NOT a traced arg).
    fwd = jax.jit(functools.partial(bert_crf_forward, num_heads=NH))
    loss, logits = fwd(params, input_ids, attention_mask, labels)
    jax.block_until_ready((loss, logits))

    assert logits.shape == (B, S, NUM_LABELS)
    assert loss.shape == ()
    assert bool(jnp.isfinite(loss))
    print("KERNEL_OK")
</pallas_src>

<mosaic_0001>
module attributes {stable_mosaic.version = 11 : i64} {
  func.func @_ln_kernel(%arg0: i32, %arg1: memref<16x32xf32, #tpu.memory_space<vmem>>, %arg2: memref<1x32xf32, #tpu.memory_space<vmem>>, %arg3: memref<1x32xf32, #tpu.memory_space<vmem>>, %arg4: memref<16x32xf32, #tpu.memory_space<vmem>>) attributes {dimension_semantics = [#tpu.dimension_semantics<parallel>], iteration_bounds = array<i64: 1>, scalar_prefetch = 0 : i64, scratch_operands = 0 : i64, tpu.core_type = #tpu.core_type<tc>, window_params = [{transform_indices = @transform_0, window_bounds = array<i64: 16, 32>}, {pipeline_mode = #tpu.pipeline_mode<synchronous>, transform_indices = @transform_1, window_bounds = array<i64: 1, 32>}, {pipeline_mode = #tpu.pipeline_mode<synchronous>, transform_indices = @transform_2, window_bounds = array<i64: 1, 32>}, {transform_indices = @transform_3, window_bounds = array<i64: 16, 32>}]} {
    %c0 = arith.constant 0 : index
    %c0_0 = arith.constant 0 : index
    %0 = vector.load %arg1[%c0, %c0_0] : memref<16x32xf32, #tpu.memory_space<vmem>>, vector<16x32xf32>
    %cst = arith.constant dense<0.000000e+00> : vector<16xf32>
    %1 = vector.multi_reduction <add>, %0, %cst [1] : vector<16x32xf32> to vector<16xf32>
    %2 = vector.shape_cast %1 : vector<16xf32> to vector<16x1xf32>
    %cst_1 = arith.constant 3.200000e+01 : f32
    %3 = vector.broadcast %cst_1 : f32 to vector<16x1xf32>
    %4 = arith.divf %2, %3 : vector<16x1xf32>
    %5 = vector.broadcast %4 : vector<16x1xf32> to vector<16x32xf32>
    %6 = arith.subf %0, %5 : vector<16x32xf32>
    %7 = arith.mulf %6, %6 : vector<16x32xf32>
    %cst_2 = arith.constant dense<0.000000e+00> : vector<16xf32>
    %8 = vector.multi_reduction <add>, %7, %cst_2 [1] : vector<16x32xf32> to vector<16xf32>
    %9 = vector.shape_cast %8 : vector<16xf32> to vector<16x1xf32>
    %cst_3 = arith.constant 3.200000e+01 : f32
    %10 = vector.broadcast %cst_3 : f32 to vector<16x1xf32>
    %11 = arith.divf %9, %10 : vector<16x1xf32>
    %cst_4 = arith.constant 9.99999996E-13 : f32
    %12 = vector.broadcast %cst_4 : f32 to vector<16x1xf32>
    %13 = arith.addf %11, %12 : vector<16x1xf32>
    %14 = math.rsqrt %13 : vector<16x1xf32>
    %15 = vector.broadcast %14 : vector<16x1xf32> to vector<16x32xf32>
    %16 = arith.mulf %6, %15 : vector<16x32xf32>
    %c0_5 = arith.constant 0 : index
    %c0_6 = arith.constant 0 : index
    %17 = vector.load %arg2[%c0_5, %c0_6] : memref<1x32xf32, #tpu.memory_space<vmem>>, vector<1x32xf32>
    %18 = vector.broadcast %17 : vector<1x32xf32> to vector<16x32xf32>
    %19 = arith.mulf %16, %18 : vector<16x32xf32>
    %c0_7 = arith.constant 0 : index
    %c0_8 = arith.constant 0 : index
    %20 = vector.load %arg3[%c0_7, %c0_8] : memref<1x32xf32, #tpu.memory_space<vmem>>, vector<1x32xf32>
    %21 = vector.broadcast %20 : vector<1x32xf32> to vector<16x32xf32>
    %22 = arith.addf %19, %21 : vector<16x32xf32>
    %c0_9 = arith.constant 0 : index
    %c0_10 = arith.constant 0 : index
    %23 = vector.load %arg4[%c0_9, %c0_10] : memref<16x32xf32, #tpu.memory_space<vmem>>, vector<16x32xf32>
    tpu.vector_store %arg4[%c0_9, %c0_10], %22 {strides = array<i32>} : memref<16x32xf32, #tpu.memory_space<vmem>>, vector<16x32xf32>,
    return
  }
  func.func @transform_0(%arg0: i32) -> (i32, i32) {
    %c0_i32 = arith.constant 0 : i32
    %c0_i32_0 = arith.constant 0 : i32
    return %arg0, %c0_i32 : i32, i32
  }
  func.func @transform_1(%arg0: i32) -> (i32, i32) {
    %c0_i32 = arith.constant 0 : i32
    %c0_i32_0 = arith.constant 0 : i32
    %c0_i32_1 = arith.constant 0 : i32
    return %c0_i32, %c0_i32_0 : i32, i32
  }
  func.func @transform_2(%arg0: i32) -> (i32, i32) {
    %c0_i32 = arith.constant 0 : i32
    %c0_i32_0 = arith.constant 0 : i32
    %c0_i32_1 = arith.constant 0 : i32
    return %c0_i32, %c0_i32_0 : i32, i32
  }
  func.func @transform_3(%arg0: i32) -> (i32, i32) {
    %c0_i32 = arith.constant 0 : i32
    %c0_i32_0 = arith.constant 0 : i32
    return %arg0, %c0_i32 : i32, i32
  }
}

module attributes {stable_mosaic.version = 11 : i64} {
  func.func @_linear_kernel(%arg0: i32, %arg1: i32, %arg2: i32, %arg3: memref<16x32xbf16, #tpu.memory_space<vmem>>, %arg4: memref<32x96xbf16, #tpu.memory_space<vmem>>, %arg5: memref<1x96xf32, #tpu.memory_space<vmem>>, %arg6: memref<16x96xbf16, #tpu.memory_space<vmem>>, %arg7: memref<16x96xf32, #tpu.memory_space<vmem>>) attributes {dimension_semantics = [#tpu.dimension_semantics<parallel>, #tpu.dimension_semantics<parallel>, #tpu.dimension_semantics<arbitrary>], iteration_bounds = array<i64: 1, 1, 1>, scalar_prefetch = 0 : i64, scratch_operands = 1 : i64, tpu.core_type = #tpu.core_type<tc>, window_params = [{transform_indices = @transform_0, window_bounds = array<i64: 16, 32>}, {transform_indices = @transform_1, window_bounds = array<i64: 32, 96>}, {transform_indices = @transform_2, window_bounds = array<i64: 1, 96>}, {transform_indices = @transform_3, window_bounds = array<i64: 16, 96>}]} {
    %c0_i32 = arith.constant 0 : i32
    %0 = arith.cmpi eq, %arg2, %c0_i32 : i32
    %1 = arith.extui %0 : i1 to i32
    %c0_i32_0 = arith.constant 0 : i32
    %2 = arith.cmpi ne, %1, %c0_i32_0 : i32
    scf.if %2 {
      %cst_10 = arith.constant 0.000000e+00 : f32
      %12 = vector.broadcast %cst_10 : f32 to vector<16x96xf32>
      %c0_11 = arith.constant 0 : index
      %c0_12 = arith.constant 0 : index
      %13 = vector.load %arg7[%c0_11, %c0_12] : memref<16x96xf32, #tpu.memory_space<vmem>>, vector<16x96xf32>
      tpu.vector_store %arg7[%c0_11, %c0_12], %12 {strides = array<i32>} : memref<16x96xf32, #tpu.memory_space<vmem>>, vector<16x96xf32>,
    } else {
    }
    %c0 = arith.constant 0 : index
    %c0_1 = arith.constant 0 : index
    %3 = vector.load %arg7[%c0, %c0_1] : memref<16x96xf32, #tpu.memory_space<vmem>>, vector<16x96xf32>
    %c0_2 = arith.constant 0 : index
    %c0_3 = arith.constant 0 : index
    %4 = vector.load %arg3[%c0_2, %c0_3] : memref<16x32xbf16, #tpu.memory_space<vmem>>, vector<16x32xbf16>
    %c0_4 = arith.constant 0 : index
    %c0_5 = arith.constant 0 : index
    %5 = vector.load %arg4[%c0_4, %c0_5] : memref<32x96xbf16, #tpu.memory_space<vmem>>, vector<32x96xbf16>
    %cst = arith.constant dense<0.000000e+00> : vector<16x96xf32>
    %6 = tpu.matmul %4, %5, %cst {dimension_numbers = #tpu.dot_dimension_numbers<[1], [0], [0], [1], [0, 0, 1, 1], [], []>} : vector<16x32xbf16>, vector<32x96xbf16>, vector<16x96xf32> -> vector<16x96xf32>
    %7 = arith.addf %3, %6 : vector<16x96xf32>
    %c0_6 = arith.constant 0 : index
    %c0_7 = arith.constant 0 : index
    %8 = vector.load %arg7[%c0_6, %c0_7] : memref<16x96xf32, #tpu.memory_space<vmem>>, vector<16x96xf32>
    tpu.vector_store %arg7[%c0_6, %c0_7], %7 {strides = array<i32>} : memref<16x96xf32, #tpu.memory_space<vmem>>, vector<16x96xf32>,
    %c0_i32_8 = arith.constant 0 : i32
    %9 = arith.cmpi eq, %arg2, %c0_i32_8 : i32
    %10 = arith.extui %9 : i1 to i32
    %c0_i32_9 = arith.constant 0 : i32
    %11 = arith.cmpi ne, %10, %c0_i32_9 : i32
    scf.if %11 {
      %c0_10 = arith.constant 0 : index
      %c0_11 = arith.constant 0 : index
      %12 = vector.load %arg7[%c0_10, %c0_11] : memref<16x96xf32, #tpu.memory_space<vmem>>, vector<16x96xf32>
      %c0_12 = arith.constant 0 : index
      %c0_13 = arith.constant 0 : index
      %13 = vector.load %arg5[%c0_12, %c0_13] : memref<1x96xf32, #tpu.memory_space<vmem>>, vector<1x96xf32>
      %14 = vector.broadcast %13 : vector<1x96xf32> to vector<16x96xf32>
      %15 = arith.addf %12, %14 : vector<16x96xf32>
      %16 = arith.truncf %15 : vector<16x96xf32> to vector<16x96xbf16>
      %c0_14 = arith.constant 0 : index
      %c0_15 = arith.constant 0 : index
      %17 = vector.load %arg6[%c0_14, %c0_15] : memref<16x96xbf16, #tpu.memory_space<vmem>>, vector<16x96xbf16>
      tpu.vector_store %arg6[%c0_14, %c0_15], %16 {strides = array<i32>} : memref<16x96xbf16, #tpu.memory_space<vmem>>, vector<16x96xbf16>,
    } else {
    }
    return
  }
  func.func @transform_0(%arg0: i32, %arg1: i32, %arg2: i32) -> (i32, i32) {
    %c0_i32 = arith.constant 0 : i32
    return %arg0, %arg2 : i32, i32
  }
  func.func @transform_1(%arg0: i32, %arg1: i32, %arg2: i32) -> (i32, i32) {
    %c0_i32 = arith.constant 0 : i32
    return %arg2, %arg1 : i32, i32
  }
  func.func @transform_2(%arg0: i32, %arg1: i32, %arg2: i32) -> (i32, i32) {
    %c0_i32 = arith.constant 0 : i32
    %c0_i32_0 = arith.constant 0 : i32
    return %c0_i32, %arg1 : i32, i32
  }
  func.func @transform_3(%arg0: i32, %arg1: i32, %arg2: i32) -> (i32, i32) {
    %c0_i32 = arith.constant 0 : i32
    return %arg0, %arg1 : i32, i32
  }
}

module attributes {stable_mosaic.version = 11 : i64} {
  func.func @_flash_attn_kernel(%arg0: i32, %arg1: i32, %arg2: i32, %arg3: i32, %arg4: memref<1x1x8x16xbf16, #tpu.memory_space<vmem>>, %arg5: memref<1x1x8x16xbf16, #tpu.memory_space<vmem>>, %arg6: memref<1x1x8x16xbf16, #tpu.memory_space<vmem>>, %arg7: memref<1x1x8xf32, #tpu.memory_space<vmem>>, %arg8: memref<1x1x8x16xbf16, #tpu.memory_space<vmem>>, %arg9: memref<8x1xf32, #tpu.memory_space<vmem>>, %arg10: memref<8x1xf32, #tpu.memory_space<vmem>>, %arg11: memref<8x16xf32, #tpu.memory_space<vmem>>) attributes {dimension_semantics = [#tpu.dimension_semantics<parallel>, #tpu.dimension_semantics<parallel>, #tpu.dimension_semantics<parallel>, #tpu.dimension_semantics<arbitrary>], iteration_bounds = array<i64: 2, 2, 1, 1>, scalar_prefetch = 0 : i64, scratch_operands = 3 : i64, tpu.core_type = #tpu.core_type<tc>, window_params = [{transform_indices = @transform_0, window_bounds = array<i64: 1, 1, 8, 16>}, {transform_indices = @transform_1, window_bounds = array<i64: 1, 1, 8, 16>}, {transform_indices = @transform_2, window_bounds = array<i64: 1, 1, 8, 16>}, {transform_indices = @transform_3, window_bounds = array<i64: 1, 1, 8>}, {transform_indices = @transform_4, window_bounds = array<i64: 1, 1, 8, 16>}]} {
    %c0_i32 = arith.constant 0 : i32
    %0 = arith.cmpi eq, %arg3, %c0_i32 : i32
    %1 = arith.extui %0 : i1 to i32
    %c0_i32_0 = arith.constant 0 : i32
    %2 = arith.cmpi ne, %1, %c0_i32_0 : i32
    scf.if %2 {
      %cst_35 = arith.constant 0xFF800000 : f32
      %43 = vector.broadcast %cst_35 : f32 to vector<8x1xf32>
      %c0_36 = arith.constant 0 : index
      %c0_37 = arith.constant 0 : index
      %44 = vector.load %arg9[%c0_36, %c0_37] : memref<8x1xf32, #tpu.memory_space<vmem>>, vector<8x1xf32>
      tpu.vector_store %arg9[%c0_36, %c0_37], %43 {strides = array<i32>} : memref<8x1xf32, #tpu.memory_space<vmem>>, vector<8x1xf32>,
      %cst_38 = arith.constant 0.000000e+00 : f32
      %45 = vector.broadcast %cst_38 : f32 to vector<8x1xf32>
      %c0_39 = arith.constant 0 : index
      %c0_40 = arith.constant 0 : index
      %46 = vector.load %arg10[%c0_39, %c0_40] : memref<8x1xf32, #tpu.memory_space<vmem>>, vector<8x1xf32>
      tpu.vector_store %arg10[%c0_39, %c0_40], %45 {strides = array<i32>} : memref<8x1xf32, #tpu.memory_space<vmem>>, vector<8x1xf32>,
      %cst_41 = arith.constant 0.000000e+00 : f32
      %47 = vector.broadcast %cst_41 : f32 to vector<8x16xf32>
      %c0_42 = arith.constant 0 : index
      %c0_43 = arith.constant 0 : index
      %48 = vector.load %arg11[%c0_42, %c0_43] : memref<8x16xf32, #tpu.memory_space<vmem>>, vector<8x16xf32>
      tpu.vector_store %arg11[%c0_42, %c0_43], %47 {strides = array<i32>} : memref<8x16xf32, #tpu.memory_space<vmem>>, vector<8x16xf32>,
    } else {
    }
    %c0 = arith.constant 0 : index
    %c0_1 = arith.constant 0 : index
    %c0_2 = arith.constant 0 : index
    %c0_3 = arith.constant 0 : index
    %3 = vector.load %arg4[%c0, %c0_1, %c0_2, %c0_3] : memref<1x1x8x16xbf16, #tpu.memory_space<vmem>>, vector<1x1x8x16xbf16>
    %4 = vector.shape_cast %3 : vector<1x1x8x16xbf16> to vector<8x16xbf16>
    %c0_4 = arith.constant 0 : index
    %c0_5 = arith.constant 0 : index
    %c0_6 = arith.constant 0 : index
    %c0_7 = arith.constant 0 : index
    %5 = vector.load %arg5[%c0_4, %c0_5, %c0_6, %c0_7] : memref<1x1x8x16xbf16, #tpu.memory_space<vmem>>, vector<1x1x8x16xbf16>
    %6 = vector.shape_cast %5 : vector<1x1x8x16xbf16> to vector<8x16xbf16>
    %c0_8 = arith.constant 0 : index
    %c0_9 = arith.constant 0 : index
    %c0_10 = arith.constant 0 : index
    %c0_11 = arith.constant 0 : index
    %7 = vector.load %arg6[%c0_8, %c0_9, %c0_10, %c0_11] : memref<1x1x8x16xbf16, #tpu.memory_space<vmem>>, vector<1x1x8x16xbf16>
    %8 = vector.shape_cast %7 : vector<1x1x8x16xbf16> to vector<8x16xbf16>
    %cst = arith.constant dense<0.000000e+00> : vector<8x8xf32>
    %9 = tpu.matmul %4, %6, %cst {dimension_numbers = #tpu.dot_dimension_numbers<[1], [1], [0], [0], [0, 0, 1, 0], [], []>} : vector<8x16xbf16>, vector<8x16xbf16>, vector<8x8xf32> -> vector<8x8xf32>
    %cst_12 = arith.constant 2.500000e-01 : f32
    %10 = vector.broadcast %cst_12 : f32 to vector<8x8xf32>
    %11 = arith.mulf %9, %10 : vector<8x8xf32>
    %c0_13 = arith.constant 0 : index
    %c0_14 = arith.constant 0 : index
    %c0_15 = arith.constant 0 : index
    %12 = vector.load %arg7[%c0_13, %c0_14, %c0_15] : memref<1x1x8xf32, #tpu.memory_space<vmem>>, vector<1x1x8xf32>
    %13 = vector.shape_cast %12 : vector<1x1x8xf32> to vector<1x8xf32>
    %14 = vector.broadcast %13 : vector<1x8xf32> to vector<8x8xf32>
    %15 = arith.addf %11, %14 : vector<8x8xf32>
    %c0_16 = arith.constant 0 : index
    %c0_17 = arith.constant 0 : index
    %16 = vector.load %arg9[%c0_16, %c0_17] : memref<8x1xf32, #tpu.memory_space<vmem>>, vector<8x1xf32>
    %cst_18 = arith.constant dense<0xFF800000> : vector<8xf32>
    %17 = vector.multi_reduction <maximumf>, %15, %cst_18 [1] : vector<8x8xf32> to vector<8xf32>
    %18 = vector.shape_cast %17 : vector<8xf32> to vector<8x1xf32>
    %19 = arith.maximumf %16, %18 : vector<8x1xf32>
    %c0_19 = arith.constant 0 : index
    %c0_20 = arith.constant 0 : index
    %20 = vector.load %arg9[%c0_19, %c0_20] : memref<8x1xf32, #tpu.memory_space<vmem>>, vector<8x1xf32>
    %21 = arith.subf %20, %19 : vector<8x1xf32>
    %22 = math.exp %21 : vector<8x1xf32>
    %23 = vector.broadcast %19 : vector<8x1xf32> to vector<8x8xf32>
    %24 = arith.subf %15, %23 : vector<8x8xf32>
    %25 = math.exp %24 : vector<8x8xf32>
    %c0_21 = arith.constant 0 : index
    %c0_22 = arith.constant 0 : index
    %26 = vector.load %arg10[%c0_21, %c0_22] : memref<8x1xf32, #tpu.memory_space<vmem>>, vector<8x1xf32>
    %27 = arith.mulf %22, %26 : vector<8x1xf32>
    %cst_23 = arith.constant dense<0.000000e+00> : vector<8xf32>
    %28 = vector.multi_reduction <add>, %25, %cst_23 [1] : vector<8x8xf32> to vector<8xf32>
    %29 = vector.shape_cast %28 : vector<8xf32> to vector<8x1xf32>
    %30 = arith.addf %27, %29 : vector<8x1xf32>
    %c0_24 = arith.constant 0 : index
    %c0_25 = arith.constant 0 : index
    %31 = vector.load %arg10[%c0_24, %c0_25] : memref<8x1xf32, #tpu.memory_space<vmem>>, vector<8x1xf32>
    tpu.vector_store %arg10[%c0_24, %c0_25], %30 {strides = array<i32>} : memref<8x1xf32, #tpu.memory_space<vmem>>, vector<8x1xf32>,
    %c0_26 = arith.constant 0 : index
    %c0_27 = arith.constant 0 : index
    %32 = vector.load %arg11[%c0_26, %c0_27] : memref<8x16xf32, #tpu.memory_space<vmem>>, vector<8x16xf32>
    %33 = vector.broadcast %22 : vector<8x1xf32> to vector<8x16xf32>
    %34 = arith.mulf %33, %32 : vector<8x16xf32>
    %35 = arith.truncf %25 : vector<8x8xf32> to vector<8x8xbf16>
    %cst_28 = arith.constant dense<0.000000e+00> : vector<8x16xf32>
    %36 = tpu.matmul %35, %8, %cst_28 {dimension_numbers = #tpu.dot_dimension_numbers<[1], [0], [0], [1], [0, 0, 1, 1], [], []>} : vector<8x8xbf16>, vector<8x16xbf16>, vector<8x16xf32> -> vector<8x16xf32>
    %37 = arith.addf %34, %36 : vector<8x16xf32>
    %c0_29 = arith.constant 0 : index
    %c0_30 = arith.constant 0 : index
    %38 = vector.load %arg11[%c0_29, %c0_30] : memref<8x16xf32, #tpu.memory_space<vmem>>, vector<8x16xf32>
    tpu.vector_store %arg11[%c0_29, %c0_30], %37 {strides = array<i32>} : memref<8x16xf32, #tpu.memory_space<vmem>>, vector<8x16xf32>,
    %c0_31 = arith.constant 0 : index
    %c0_32 = arith.constant 0 : index
    %39 = vector.load %arg9[%c0_31, %c0_32] : memref<8x1xf32, #tpu.memory_space<vmem>>, vector<8x1xf32>
    tpu.vector_store %arg9[%c0_31, %c0_32], %19 {strides = array<i32>} : memref<8x1xf32, #tpu.memory_space<vmem>>, vector<8x1xf32>,
    %c0_i32_33 = arith.constant 0 : i32
    %40 = arith.cmpi eq, %arg3, %c0_i32_33 : i32
    %41 = arith.extui %40 : i1 to i32
    %c0_i32_34 = arith.constant 0 : i32
    %42 = arith.cmpi ne, %41, %c0_i32_34 : i32
    scf.if %42 {
      %c0_35 = arith.constant 0 : index
      %c0_36 = arith.constant 0 : index
      %43 = vector.load %arg10[%c0_35, %c0_36] : memref<8x1xf32, #tpu.memory_space<vmem>>, vector<8x1xf32>
      %44 = tpu.reciprocal %43 {approx = true} : vector<8x1xf32> -> vector<8x1xf32>
      %c0_37 = arith.constant 0 : index
      %c0_38 = arith.constant 0 : index
      %45 = vector.load %arg11[%c0_37, %c0_38] : memref<8x16xf32, #tpu.memory_space<vmem>>, vector<8x16xf32>
      %46 = vector.broadcast %44 : vector<8x1xf32> to vector<8x16xf32>
      %47 = arith.mulf %45, %46 : vector<8x16xf32>
      %48 = arith.truncf %47 : vector<8x16xf32> to vector<8x16xbf16>
      %c0_39 = arith.constant 0 : index
      %c0_40 = arith.constant 0 : index
      %c0_41 = arith.constant 0 : index
      %c0_42 = arith.constant 0 : index
      %49 = vector.load %arg8[%c0_39, %c0_40, %c0_41, %c0_42] : memref<1x1x8x16xbf16, #tpu.memory_space<vmem>>, vector<1x1x8x16xbf16>
      %50 = vector.shape_cast %49 : vector<1x1x8x16xbf16> to vector<8x16xbf16>
      %51 = vector.shape_cast %48 : vector<8x16xbf16> to vector<1x1x8x16xbf16>
      tpu.vector_store %arg8[%c0_39, %c0_40, %c0_41, %c0_42], %51 {strides = array<i32>} : memref<1x1x8x16xbf16, #tpu.memory_space<vmem>>, vector<1x1x8x16xbf16>,
    } else {
    }
    return
  }
  func.func @transform_0(%arg0: i32, %arg1: i32, %arg2: i32, %arg3: i32) -> (i32, i32, i32, i32) {
    %c0_i32 = arith.constant 0 : i32
    %c0_i32_0 = arith.constant 0 : i32
    return %arg0, %arg1, %arg2, %c0_i32 : i32, i32, i32, i32
  }
  func.func @transform_1(%arg0: i32, %arg1: i32, %arg2: i32, %arg3: i32) -> (i32, i32, i32, i32) {
    %c0_i32 = arith.constant 0 : i32
    %c0_i32_0 = arith.constant 0 : i32
    return %arg0, %arg1, %arg3, %c0_i32 : i32, i32, i32, i32
  }
  func.func @transform_2(%arg0: i32, %arg1: i32, %arg2: i32, %arg3: i32) -> (i32, i32, i32, i32) {
    %c0_i32 = arith.constant 0 : i32
    %c0_i32_0 = arith.constant 0 : i32
    return %arg0, %arg1, %arg3, %c0_i32 : i32, i32, i32, i32
  }
  func.func @transform_3(%arg0: i32, %arg1: i32, %arg2: i32, %arg3: i32) -> (i32, i32, i32) {
    %c0_i32 = arith.constant 0 : i32
    %c0_i32_0 = arith.constant 0 : i32
    return %arg0, %c0_i32, %arg3 : i32, i32, i32
  }
  func.func @transform_4(%arg0: i32, %arg1: i32, %arg2: i32, %arg3: i32) -> (i32, i32, i32, i32) {
    %c0_i32 = arith.constant 0 : i32
    %c0_i32_0 = arith.constant 0 : i32
    return %arg0, %arg1, %arg2, %c0_i32 : i32, i32, i32, i32
  }
}

module attributes {stable_mosaic.version = 11 : i64} {
  func.func @_linear_add_ln_kernel(%arg0: i32, %arg1: i32, %arg2: memref<16x32xbf16, #tpu.memory_space<vmem>>, %arg3: memref<32x32xbf16, #tpu.memory_space<vmem>>, %arg4: memref<1x32xf32, #tpu.memory_space<vmem>>, %arg5: memref<16x32xf32, #tpu.memory_space<vmem>>, %arg6: memref<1x32xf32, #tpu.memory_space<vmem>>, %arg7: memref<1x32xf32, #tpu.memory_space<vmem>>, %arg8: memref<16x32xf32, #tpu.memory_space<vmem>>, %arg9: memref<16x32xf32, #tpu.memory_space<vmem>>) attributes {dimension_semantics = [#tpu.dimension_semantics<parallel>, #tpu.dimension_semantics<arbitrary>], iteration_bounds = array<i64: 1, 1>, scalar_prefetch = 0 : i64, scratch_operands = 1 : i64, tpu.core_type = #tpu.core_type<tc>, window_params = [{transform_indices = @transform_0, window_bounds = array<i64: 16, 32>}, {transform_indices = @transform_1, window_bounds = array<i64: 32, 32>}, {pipeline_mode = #tpu.pipeline_mode<synchronous>, transform_indices = @transform_2, window_bounds = array<i64: 1, 32>}, {transform_indices = @transform_3, window_bounds = array<i64: 16, 32>}, {pipeline_mode = #tpu.pipeline_mode<synchronous>, transform_indices = @transform_4, window_bounds = array<i64: 1, 32>}, {pipeline_mode = #tpu.pipeline_mode<synchronous>, transform_indices = @transform_5, window_bounds = array<i64: 1, 32>}, {transform_indices = @transform_6, window_bounds = array<i64: 16, 32>}]} {
    %c0_i32 = arith.constant 0 : i32
    %0 = arith.cmpi eq, %arg1, %c0_i32 : i32
    %1 = arith.extui %0 : i1 to i32
    %c0_i32_0 = arith.constant 0 : i32
    %2 = arith.cmpi ne, %1, %c0_i32_0 : i32
    scf.if %2 {
      %cst_10 = arith.constant 0.000000e+00 : f32
      %12 = vector.broadcast %cst_10 : f32 to vector<16x32xf32>
      %c0_11 = arith.constant 0 : index
      %c0_12 = arith.constant 0 : index
      %13 = vector.load %arg9[%c0_11, %c0_12] : memref<16x32xf32, #tpu.memory_space<vmem>>, vector<16x32xf32>
      tpu.vector_store %arg9[%c0_11, %c0_12], %12 {strides = array<i32>} : memref<16x32xf32, #tpu.memory_space<vmem>>, vector<16x32xf32>,
    } else {
    }
    %c0 = arith.constant 0 : index
    %c0_1 = arith.constant 0 : index
    %3 = vector.load %arg9[%c0, %c0_1] : memref<16x32xf32, #tpu.memory_space<vmem>>, vector<16x32xf32>
    %c0_2 = arith.constant 0 : index
    %c0_3 = arith.constant 0 : index
    %4 = vector.load %arg2[%c0_2, %c0_3] : memref<16x32xbf16, #tpu.memory_space<vmem>>, vector<16x32xbf16>
    %c0_4 = arith.constant 0 : index
    %c0_5 = arith.constant 0 : index
    %5 = vector.load %arg3[%c0_4, %c0_5] : memref<32x32xbf16, #tpu.memory_space<vmem>>, vector<32x32xbf16>
    %cst = arith.constant dense<0.000000e+00> : vector<16x32xf32>
    %6 = tpu.matmul %4, %5, %cst {dimension_numbers = #tpu.dot_dimension_numbers<[1], [0], [0], [1], [0, 0, 1, 1], [], []>} : vector<16x32xbf16>, vector<32x32xbf16>, vector<16x32xf32> -> vector<16x32xf32>
    %7 = arith.addf %3, %6 : vector<16x32xf32>
    %c0_6 = arith.constant 0 : index
    %c0_7 = arith.constant 0 : index
    %8 = vector.load %arg9[%c0_6, %c0_7] : memref<16x32xf32, #tpu.memory_space<vmem>>, vector<16x32xf32>
    tpu.vector_store %arg9[%c0_6, %c0_7], %7 {strides = array<i32>} : memref<16x32xf32, #tpu.memory_space<vmem>>, vector<16x32xf32>,
    %c0_i32_8 = arith.constant 0 : i32
    %9 = arith.cmpi eq, %arg1, %c0_i32_8 : i32
    %10 = arith.extui %9 : i1 to i32
    %c0_i32_9 = arith.constant 0 : i32
    %11 = arith.cmpi ne, %10, %c0_i32_9 : i32
    scf.if %11 {
      %c0_10 = arith.constant 0 : index
      %c0_11 = arith.constant 0 : index
      %12 = vector.load %arg9[%c0_10, %c0_11] : memref<16x32xf32, #tpu.memory_space<vmem>>, vector<16x32xf32>
      %c0_12 = arith.constant 0 : index
      %c0_13 = arith.constant 0 : index
      %13 = vector.load %arg4[%c0_12, %c0_13] : memref<1x32xf32, #tpu.memory_space<vmem>>, vector<1x32xf32>
      %14 = vector.broadcast %13 : vector<1x32xf32> to vector<16x32xf32>
      %15 = arith.addf %12, %14 : vector<16x32xf32>
      %c0_14 = arith.constant 0 : index
      %c0_15 = arith.constant 0 : index
      %16 = vector.load %arg5[%c0_14, %c0_15] : memref<16x32xf32, #tpu.memory_space<vmem>>, vector<16x32xf32>
      %17 = arith.addf %15, %16 : vector<16x32xf32>
      %cst_16 = arith.constant dense<0.000000e+00> : vector<16xf32>
      %18 = vector.multi_reduction <add>, %17, %cst_16 [1] : vector<16x32xf32> to vector<16xf32>
      %19 = vector.shape_cast %18 : vector<16xf32> to vector<16x1xf32>
      %cst_17 = arith.constant 3.200000e+01 : f32
      %20 = vector.broadcast %cst_17 : f32 to vector<16x1xf32>
      %21 = arith.divf %19, %20 : vector<16x1xf32>
      %22 = vector.broadcast %21 : vector<16x1xf32> to vector<16x32xf32>
      %23 = arith.subf %17, %22 : vector<16x32xf32>
      %24 = arith.mulf %23, %23 : vector<16x32xf32>
      %cst_18 = arith.constant dense<0.000000e+00> : vector<16xf32>
      %25 = vector.multi_reduction <add>, %24, %cst_18 [1] : vector<16x32xf32> to vector<16xf32>
      %26 = vector.shape_cast %25 : vector<16xf32> to vector<16x1xf32>
      %cst_19 = arith.constant 3.200000e+01 : f32
      %27 = vector.broadcast %cst_19 : f32 to vector<16x1xf32>
      %28 = arith.divf %26, %27 : vector<16x1xf32>
      %cst_20 = arith.constant 9.99999996E-13 : f32
      %29 = vector.broadcast %cst_20 : f32 to vector<16x1xf32>
      %30 = arith.addf %28, %29 : vector<16x1xf32>
      %31 = math.rsqrt %30 : vector<16x1xf32>
      %32 = vector.broadcast %31 : vector<16x1xf32> to vector<16x32xf32>
      %33 = arith.mulf %23, %32 : vector<16x32xf32>
      %c0_21 = arith.constant 0 : index
      %c0_22 = arith.constant 0 : index
      %34 = vector.load %arg6[%c0_21, %c0_22] : memref<1x32xf32, #tpu.memory_space<vmem>>, vector<1x32xf32>
      %35 = vector.broadcast %34 : vector<1x32xf32> to vector<16x32xf32>
      %36 = arith.mulf %33, %35 : vector<16x32xf32>
      %c0_23 = arith.constant 0 : index
      %c0_24 = arith.constant 0 : index
      %37 = vector.load %arg7[%c0_23, %c0_24] : memref<1x32xf32, #tpu.memory_space<vmem>>, vector<1x32xf32>
      %38 = vector.broadcast %37 : vector<1x32xf32> to vector<16x32xf32>
      %39 = arith.addf %36, %38 : vector<16x32xf32>
      %c0_25 = arith.constant 0 : index
      %c0_26 = arith.constant 0 : index
      %40 = vector.load %arg8[%c0_25, %c0_26] : memref<16x32xf32, #tpu.memory_space<vmem>>, vector<16x32xf32>
      tpu.vector_store %arg8[%c0_25, %c0_26], %39 {strides = array<i32>} : memref<16x32xf32, #tpu.memory_space<vmem>>, vector<16x32xf32>,
    } else {
    }
    return
  }
  func.func @transform_0(%arg0: i32, %arg1: i32) -> (i32, i32) {
    %c0_i32 = arith.constant 0 : i32
    return %arg0, %arg1 : i32, i32
  }
  func.func @transform_1(%arg0: i32, %arg1: i32) -> (i32, i32) {
    %c0_i32 = arith.constant 0 : i32
    %c0_i32_0 = arith.constant 0 : i32
    return %arg1, %c0_i32 : i32, i32
  }
  func.func @transform_2(%arg0: i32, %arg1: i32) -> (i32, i32) {
    %c0_i32 = arith.constant 0 : i32
    %c0_i32_0 = arith.constant 0 : i32
    %c0_i32_1 = arith.constant 0 : i32
    return %c0_i32, %c0_i32_0 : i32, i32
  }
  func.func @transform_3(%arg0: i32, %arg1: i32) -> (i32, i32) {
    %c0_i32 = arith.constant 0 : i32
    %c0_i32_0 = arith.constant 0 : i32
    return %arg0, %c0_i32 : i32, i32
  }
  func.func @transform_4(%arg0: i32, %arg1: i32) -> (i32, i32) {
    %c0_i32 = arith.constant 0 : i32
    %c0_i32_0 = arith.constant 0 : i32
    %c0_i32_1 = arith.constant 0 : i32
    return %c0_i32, %c0_i32_0 : i32, i32
  }
  func.func @transform_5(%arg0: i32, %arg1: i32) -> (i32, i32) {
    %c0_i32 = arith.constant 0 : i32
    %c0_i32_0 = arith.constant 0 : i32
    %c0_i32_1 = arith.constant 0 : i32
    return %c0_i32, %c0_i32_0 : i32, i32
  }
  func.func @transform_6(%arg0: i32, %arg1: i32) -> (i32, i32) {
    %c0_i32 = arith.constant 0 : i32
    %c0_i32_0 = arith.constant 0 : i32
    return %arg0, %c0_i32 : i32, i32
  }
}

module attributes {stable_mosaic.version = 11 : i64} {
  func.func @_linear_kernel(%arg0: i32, %arg1: i32, %arg2: i32, %arg3: memref<16x32xbf16, #tpu.memory_space<vmem>>, %arg4: memref<32x64xbf16, #tpu.memory_space<vmem>>, %arg5: memref<1x64xf32, #tpu.memory_space<vmem>>, %arg6: memref<16x64xbf16, #tpu.memory_space<vmem>>, %arg7: memref<16x64xf32, #tpu.memory_space<vmem>>) attributes {dimension_semantics = [#tpu.dimension_semantics<parallel>, #tpu.dimension_semantics<parallel>, #tpu.dimension_semantics<arbitrary>], iteration_bounds = array<i64: 1, 1, 1>, scalar_prefetch = 0 : i64, scratch_operands = 1 : i64, tpu.core_type = #tpu.core_type<tc>, window_params = [{transform_indices = @transform_0, window_bounds = array<i64: 16, 32>}, {transform_indices = @transform_1, window_bounds = array<i64: 32, 64>}, {transform_indices = @transform_2, window_bounds = array<i64: 1, 64>}, {transform_indices = @transform_3, window_bounds = array<i64: 16, 64>}]} {
    %c0_i32 = arith.constant 0 : i32
    %0 = arith.cmpi eq, %arg2, %c0_i32 : i32
    %1 = arith.extui %0 : i1 to i32
    %c0_i32_0 = arith.constant 0 : i32
    %2 = arith.cmpi ne, %1, %c0_i32_0 : i32
    scf.if %2 {
      %cst_10 = arith.constant 0.000000e+00 : f32
      %12 = vector.broadcast %cst_10 : f32 to vector<16x64xf32>
      %c0_11 = arith.constant 0 : index
      %c0_12 = arith.constant 0 : index
      %13 = vector.load %arg7[%c0_11, %c0_12] : memref<16x64xf32, #tpu.memory_space<vmem>>, vector<16x64xf32>
      tpu.vector_store %arg7[%c0_11, %c0_12], %12 {strides = array<i32>} : memref<16x64xf32, #tpu.memory_space<vmem>>, vector<16x64xf32>,
    } else {
    }
    %c0 = arith.constant 0 : index
    %c0_1 = arith.constant 0 : index
    %3 = vector.load %arg7[%c0, %c0_1] : memref<16x64xf32, #tpu.memory_space<vmem>>, vector<16x64xf32>
    %c0_2 = arith.constant 0 : index
    %c0_3 = arith.constant 0 : index
    %4 = vector.load %arg3[%c0_2, %c0_3] : memref<16x32xbf16, #tpu.memory_space<vmem>>, vector<16x32xbf16>
    %c0_4 = arith.constant 0 : index
    %c0_5 = arith.constant 0 : index
    %5 = vector.load %arg4[%c0_4, %c0_5] : memref<32x64xbf16, #tpu.memory_space<vmem>>, vector<32x64xbf16>
    %cst = arith.constant dense<0.000000e+00> : vector<16x64xf32>
    %6 = tpu.matmul %4, %5, %cst {dimension_numbers = #tpu.dot_dimension_numbers<[1], [0], [0], [1], [0, 0, 1, 1], [], []>} : vector<16x32xbf16>, vector<32x64xbf16>, vector<16x64xf32> -> vector<16x64xf32>
    %7 = arith.addf %3, %6 : vector<16x64xf32>
    %c0_6 = arith.constant 0 : index
    %c0_7 = arith.constant 0 : index
    %8 = vector.load %arg7[%c0_6, %c0_7] : memref<16x64xf32, #tpu.memory_space<vmem>>, vector<16x64xf32>
    tpu.vector_store %arg7[%c0_6, %c0_7], %7 {strides = array<i32>} : memref<16x64xf32, #tpu.memory_space<vmem>>, vector<16x64xf32>,
    %c0_i32_8 = arith.constant 0 : i32
    %9 = arith.cmpi eq, %arg2, %c0_i32_8 : i32
    %10 = arith.extui %9 : i1 to i32
    %c0_i32_9 = arith.constant 0 : i32
    %11 = arith.cmpi ne, %10, %c0_i32_9 : i32
    scf.if %11 {
      %c0_10 = arith.constant 0 : index
      %c0_11 = arith.constant 0 : index
      %12 = vector.load %arg7[%c0_10, %c0_11] : memref<16x64xf32, #tpu.memory_space<vmem>>, vector<16x64xf32>
      %c0_12 = arith.constant 0 : index
      %c0_13 = arith.constant 0 : index
      %13 = vector.load %arg5[%c0_12, %c0_13] : memref<1x64xf32, #tpu.memory_space<vmem>>, vector<1x64xf32>
      %14 = vector.broadcast %13 : vector<1x64xf32> to vector<16x64xf32>
      %15 = arith.addf %12, %14 : vector<16x64xf32>
      %cst_14 = arith.constant 5.000000e-01 : f32
      %16 = vector.broadcast %cst_14 : f32 to vector<16x64xf32>
      %17 = arith.mulf %16, %15 : vector<16x64xf32>
      %cst_15 = arith.constant 4.471500e-02 : f32
      %18 = vector.broadcast %cst_15 : f32 to vector<16x64xf32>
      %19 = arith.mulf %18, %15 : vector<16x64xf32>
      %20 = arith.mulf %19, %15 : vector<16x64xf32>
      %21 = arith.mulf %20, %15 : vector<16x64xf32>
      %22 = arith.addf %15, %21 : vector<16x64xf32>
      %cst_16 = arith.constant 0.797884583 : f32
      %23 = vector.broadcast %cst_16 : f32 to vector<16x64xf32>
      %24 = arith.mulf %23, %22 : vector<16x64xf32>
      %25 = math.tanh %24 : vector<16x64xf32>
      %cst_17 = arith.constant 1.000000e+00 : f32
      %26 = vector.broadcast %cst_17 : f32 to vector<16x64xf32>
      %27 = arith.addf %26, %25 : vector<16x64xf32>
      %28 = arith.mulf %17, %27 : vector<16x64xf32>
      %29 = arith.truncf %28 : vector<16x64xf32> to vector<16x64xbf16>
      %c0_18 = arith.constant 0 : index
      %c0_19 = arith.constant 0 : index
      %30 = vector.load %arg6[%c0_18, %c0_19] : memref<16x64xbf16, #tpu.memory_space<vmem>>, vector<16x64xbf16>
      tpu.vector_store %arg6[%c0_18, %c0_19], %29 {strides = array<i32>} : memref<16x64xbf16, #tpu.memory_space<vmem>>, vector<16x64xbf16>,
    } else {
    }
    return
  }
  func.func @transform_0(%arg0: i32, %arg1: i32, %arg2: i32) -> (i32, i32) {
    %c0_i32 = arith.constant 0 : i32
    return %arg0, %arg2 : i32, i32
  }
  func.func @transform_1(%arg0: i32, %arg1: i32, %arg2: i32) -> (i32, i32) {
    %c0_i32 = arith.constant 0 : i32
    return %arg2, %arg1 : i32, i32
  }
  func.func @transform_2(%arg0: i32, %arg1: i32, %arg2: i32) -> (i32, i32) {
    %c0_i32 = arith.constant 0 : i32
    %c0_i32_0 = arith.constant 0 : i32
    return %c0_i32, %arg1 : i32, i32
  }
  func.func @transform_3(%arg0: i32, %arg1: i32, %arg2: i32) -> (i32, i32) {
    %c0_i32 = arith.constant 0 : i32
    return %arg0, %arg1 : i32, i32
  }
}

module attributes {stable_mosaic.version = 11 : i64} {
  func.func @_linear_add_ln_kernel(%arg0: i32, %arg1: i32, %arg2: memref<16x64xbf16, #tpu.memory_space<vmem>>, %arg3: memref<64x32xbf16, #tpu.memory_space<vmem>>, %arg4: memref<1x32xf32, #tpu.memory_space<vmem>>, %arg5: memref<16x32xf32, #tpu.memory_space<vmem>>, %arg6: memref<1x32xf32, #tpu.memory_space<vmem>>, %arg7: memref<1x32xf32, #tpu.memory_space<vmem>>, %arg8: memref<16x32xf32, #tpu.memory_space<vmem>>, %arg9: memref<16x32xf32, #tpu.memory_space<vmem>>) attributes {dimension_semantics = [#tpu.dimension_semantics<parallel>, #tpu.dimension_semantics<arbitrary>], iteration_bounds = array<i64: 1, 1>, scalar_prefetch = 0 : i64, scratch_operands = 1 : i64, tpu.core_type = #tpu.core_type<tc>, window_params = [{transform_indices = @transform_0, window_bounds = array<i64: 16, 64>}, {transform_indices = @transform_1, window_bounds = array<i64: 64, 32>}, {pipeline_mode = #tpu.pipeline_mode<synchronous>, transform_indices = @transform_2, window_bounds = array<i64: 1, 32>}, {transform_indices = @transform_3, window_bounds = array<i64: 16, 32>}, {pipeline_mode = #tpu.pipeline_mode<synchronous>, transform_indices = @transform_4, window_bounds = array<i64: 1, 32>}, {pipeline_mode = #tpu.pipeline_mode<synchronous>, transform_indices = @transform_5, window_bounds = array<i64: 1, 32>}, {transform_indices = @transform_6, window_bounds = array<i64: 16, 32>}]} {
    %c0_i32 = arith.constant 0 : i32
    %0 = arith.cmpi eq, %arg1, %c0_i32 : i32
    %1 = arith.extui %0 : i1 to i32
    %c0_i32_0 = arith.constant 0 : i32
    %2 = arith.cmpi ne, %1, %c0_i32_0 : i32
    scf.if %2 {
      %cst_10 = arith.constant 0.000000e+00 : f32
      %12 = vector.broadcast %cst_10 : f32 to vector<16x32xf32>
      %c0_11 = arith.constant 0 : index
      %c0_12 = arith.constant 0 : index
      %13 = vector.load %arg9[%c0_11, %c0_12] : memref<16x32xf32, #tpu.memory_space<vmem>>, vector<16x32xf32>
      tpu.vector_store %arg9[%c0_11, %c0_12], %12 {strides = array<i32>} : memref<16x32xf32, #tpu.memory_space<vmem>>, vector<16x32xf32>,
    } else {
    }
    %c0 = arith.constant 0 : index
    %c0_1 = arith.constant 0 : index
    %3 = vector.load %arg9[%c0, %c0_1] : memref<16x32xf32, #tpu.memory_space<vmem>>, vector<16x32xf32>
    %c0_2 = arith.constant 0 : index
    %c0_3 = arith.constant 0 : index
    %4 = vector.load %arg2[%c0_2, %c0_3] : memref<16x64xbf16, #tpu.memory_space<vmem>>, vector<16x64xbf16>
    %c0_4 = arith.constant 0 : index
    %c0_5 = arith.constant 0 : index
    %5 = vector.load %arg3[%c0_4, %c0_5] : memref<64x32xbf16, #tpu.memory_space<vmem>>, vector<64x32xbf16>
    %cst = arith.constant dense<0.000000e+00> : vector<16x32xf32>
    %6 = tpu.matmul %4, %5, %cst {dimension_numbers = #tpu.dot_dimension_numbers<[1], [0], [0], [1], [0, 0, 1, 1], [], []>} : vector<16x64xbf16>, vector<64x32xbf16>, vector<16x32xf32> -> vector<16x32xf32>
    %7 = arith.addf %3, %6 : vector<16x32xf32>
    %c0_6 = arith.constant 0 : index
    %c0_7 = arith.constant 0 : index
    %8 = vector.load %arg9[%c0_6, %c0_7] : memref<16x32xf32, #tpu.memory_space<vmem>>, vector<16x32xf32>
    tpu.vector_store %arg9[%c0_6, %c0_7], %7 {strides = array<i32>} : memref<16x32xf32, #tpu.memory_space<vmem>>, vector<16x32xf32>,
    %c0_i32_8 = arith.constant 0 : i32
    %9 = arith.cmpi eq, %arg1, %c0_i32_8 : i32
    %10 = arith.extui %9 : i1 to i32
    %c0_i32_9 = arith.constant 0 : i32
    %11 = arith.cmpi ne, %10, %c0_i32_9 : i32
    scf.if %11 {
      %c0_10 = arith.constant 0 : index
      %c0_11 = arith.constant 0 : index
      %12 = vector.load %arg9[%c0_10, %c0_11] : memref<16x32xf32, #tpu.memory_space<vmem>>, vector<16x32xf32>
      %c0_12 = arith.constant 0 : index
      %c0_13 = arith.constant 0 : index
      %13 = vector.load %arg4[%c0_12, %c0_13] : memref<1x32xf32, #tpu.memory_space<vmem>>, vector<1x32xf32>
      %14 = vector.broadcast %13 : vector<1x32xf32> to vector<16x32xf32>
      %15 = arith.addf %12, %14 : vector<16x32xf32>
      %c0_14 = arith.constant 0 : index
      %c0_15 = arith.constant 0 : index
      %16 = vector.load %arg5[%c0_14, %c0_15] : memref<16x32xf32, #tpu.memory_space<vmem>>, vector<16x32xf32>
      %17 = arith.addf %15, %16 : vector<16x32xf32>
      %cst_16 = arith.constant dense<0.000000e+00> : vector<16xf32>
      %18 = vector.multi_reduction <add>, %17, %cst_16 [1] : vector<16x32xf32> to vector<16xf32>
      %19 = vector.shape_cast %18 : vector<16xf32> to vector<16x1xf32>
      %cst_17 = arith.constant 3.200000e+01 : f32
      %20 = vector.broadcast %cst_17 : f32 to vector<16x1xf32>
      %21 = arith.divf %19, %20 : vector<16x1xf32>
      %22 = vector.broadcast %21 : vector<16x1xf32> to vector<16x32xf32>
      %23 = arith.subf %17, %22 : vector<16x32xf32>
      %24 = arith.mulf %23, %23 : vector<16x32xf32>
      %cst_18 = arith.constant dense<0.000000e+00> : vector<16xf32>
      %25 = vector.multi_reduction <add>, %24, %cst_18 [1] : vector<16x32xf32> to vector<16xf32>
      %26 = vector.shape_cast %25 : vector<16xf32> to vector<16x1xf32>
      %cst_19 = arith.constant 3.200000e+01 : f32
      %27 = vector.broadcast %cst_19 : f32 to vector<16x1xf32>
      %28 = arith.divf %26, %27 : vector<16x1xf32>
      %cst_20 = arith.constant 9.99999996E-13 : f32
      %29 = vector.broadcast %cst_20 : f32 to vector<16x1xf32>
      %30 = arith.addf %28, %29 : vector<16x1xf32>
      %31 = math.rsqrt %30 : vector<16x1xf32>
      %32 = vector.broadcast %31 : vector<16x1xf32> to vector<16x32xf32>
      %33 = arith.mulf %23, %32 : vector<16x32xf32>
      %c0_21 = arith.constant 0 : index
      %c0_22 = arith.constant 0 : index
      %34 = vector.load %arg6[%c0_21, %c0_22] : memref<1x32xf32, #tpu.memory_space<vmem>>, vector<1x32xf32>
      %35 = vector.broadcast %34 : vector<1x32xf32> to vector<16x32xf32>
      %36 = arith.mulf %33, %35 : vector<16x32xf32>
      %c0_23 = arith.constant 0 : index
      %c0_24 = arith.constant 0 : index
      %37 = vector.load %arg7[%c0_23, %c0_24] : memref<1x32xf32, #tpu.memory_space<vmem>>, vector<1x32xf32>
      %38 = vector.broadcast %37 : vector<1x32xf32> to vector<16x32xf32>
      %39 = arith.addf %36, %38 : vector<16x32xf32>
      %c0_25 = arith.constant 0 : index
      %c0_26 = arith.constant 0 : index
      %40 = vector.load %arg8[%c0_25, %c0_26] : memref<16x32xf32, #tpu.memory_space<vmem>>, vector<16x32xf32>
      tpu.vector_store %arg8[%c0_25, %c0_26], %39 {strides = array<i32>} : memref<16x32xf32, #tpu.memory_space<vmem>>, vector<16x32xf32>,
    } else {
    }
    return
  }
  func.func @transform_0(%arg0: i32, %arg1: i32) -> (i32, i32) {
    %c0_i32 = arith.constant 0 : i32
    return %arg0, %arg1 : i32, i32
  }
  func.func @transform_1(%arg0: i32, %arg1: i32) -> (i32, i32) {
    %c0_i32 = arith.constant 0 : i32
    %c0_i32_0 = arith.constant 0 : i32
    return %arg1, %c0_i32 : i32, i32
  }
  func.func @transform_2(%arg0: i32, %arg1: i32) -> (i32, i32) {
    %c0_i32 = arith.constant 0 : i32
    %c0_i32_0 = arith.constant 0 : i32
    %c0_i32_1 = arith.constant 0 : i32
    return %c0_i32, %c0_i32_0 : i32, i32
  }
  func.func @transform_3(%arg0: i32, %arg1: i32) -> (i32, i32) {
    %c0_i32 = arith.constant 0 : i32
    %c0_i32_0 = arith.constant 0 : i32
    return %arg0, %c0_i32 : i32, i32
  }
  func.func @transform_4(%arg0: i32, %arg1: i32) -> (i32, i32) {
    %c0_i32 = arith.constant 0 : i32
    %c0_i32_0 = arith.constant 0 : i32
    %c0_i32_1 = arith.constant 0 : i32
    return %c0_i32, %c0_i32_0 : i32, i32
  }
  func.func @transform_5(%arg0: i32, %arg1: i32) -> (i32, i32) {
    %c0_i32 = arith.constant 0 : i32
    %c0_i32_0 = arith.constant 0 : i32
    %c0_i32_1 = arith.constant 0 : i32
    return %c0_i32, %c0_i32_0 : i32, i32
  }
  func.func @transform_6(%arg0: i32, %arg1: i32) -> (i32, i32) {
    %c0_i32 = arith.constant 0 : i32
    %c0_i32_0 = arith.constant 0 : i32
    return %arg0, %c0_i32 : i32, i32
  }
}

module attributes {stable_mosaic.version = 11 : i64} {
  func.func @_linear_kernel(%arg0: i32, %arg1: i32, %arg2: i32, %arg3: memref<16x32xbf16, #tpu.memory_space<vmem>>, %arg4: memref<32x128xbf16, #tpu.memory_space<vmem>>, %arg5: memref<1x128xf32, #tpu.memory_space<vmem>>, %arg6: memref<16x128xf32, #tpu.memory_space<vmem>>, %arg7: memref<16x128xf32, #tpu.memory_space<vmem>>) attributes {dimension_semantics = [#tpu.dimension_semantics<parallel>, #tpu.dimension_semantics<parallel>, #tpu.dimension_semantics<arbitrary>], iteration_bounds = array<i64: 1, 1, 1>, scalar_prefetch = 0 : i64, scratch_operands = 1 : i64, tpu.core_type = #tpu.core_type<tc>, window_params = [{transform_indices = @transform_0, window_bounds = array<i64: 16, 32>}, {transform_indices = @transform_1, window_bounds = array<i64: 32, 128>}, {transform_indices = @transform_2, window_bounds = array<i64: 1, 128>}, {transform_indices = @transform_3, window_bounds = array<i64: 16, 128>}]} {
    %c0_i32 = arith.constant 0 : i32
    %0 = arith.cmpi eq, %arg2, %c0_i32 : i32
    %1 = arith.extui %0 : i1 to i32
    %c0_i32_0 = arith.constant 0 : i32
    %2 = arith.cmpi ne, %1, %c0_i32_0 : i32
    scf.if %2 {
      %cst_10 = arith.constant 0.000000e+00 : f32
      %12 = vector.broadcast %cst_10 : f32 to vector<16x128xf32>
      %c0_11 = arith.constant 0 : index
      %c0_12 = arith.constant 0 : index
      %13 = vector.load %arg7[%c0_11, %c0_12] : memref<16x128xf32, #tpu.memory_space<vmem>>, vector<16x128xf32>
      tpu.vector_store %arg7[%c0_11, %c0_12], %12 {strides = array<i32>} : memref<16x128xf32, #tpu.memory_space<vmem>>, vector<16x128xf32>,
    } else {
    }
    %c0 = arith.constant 0 : index
    %c0_1 = arith.constant 0 : index
    %3 = vector.load %arg7[%c0, %c0_1] : memref<16x128xf32, #tpu.memory_space<vmem>>, vector<16x128xf32>
    %c0_2 = arith.constant 0 : index
    %c0_3 = arith.constant 0 : index
    %4 = vector.load %arg3[%c0_2, %c0_3] : memref<16x32xbf16, #tpu.memory_space<vmem>>, vector<16x32xbf16>
    %c0_4 = arith.constant 0 : index
    %c0_5 = arith.constant 0 : index
    %5 = vector.load %arg4[%c0_4, %c0_5] : memref<32x128xbf16, #tpu.memory_space<vmem>>, vector<32x128xbf16>
    %cst = arith.constant dense<0.000000e+00> : vector<16x128xf32>
    %6 = tpu.matmul %4, %5, %cst {dimension_numbers = #tpu.dot_dimension_numbers<[1], [0], [0], [1], [0, 0, 1, 1], [], []>} : vector<16x32xbf16>, vector<32x128xbf16>, vector<16x128xf32> -> vector<16x128xf32>
    %7 = arith.addf %3, %6 : vector<16x128xf32>
    %c0_6 = arith.constant 0 : index
    %c0_7 = arith.constant 0 : index
    %8 = vector.load %arg7[%c0_6, %c0_7] : memref<16x128xf32, #tpu.memory_space<vmem>>, vector<16x128xf32>
    tpu.vector_store %arg7[%c0_6, %c0_7], %7 {strides = array<i32>} : memref<16x128xf32, #tpu.memory_space<vmem>>, vector<16x128xf32>,
    %c0_i32_8 = arith.constant 0 : i32
    %9 = arith.cmpi eq, %arg2, %c0_i32_8 : i32
    %10 = arith.extui %9 : i1 to i32
    %c0_i32_9 = arith.constant 0 : i32
    %11 = arith.cmpi ne, %10, %c0_i32_9 : i32
    scf.if %11 {
      %c0_10 = arith.constant 0 : index
      %c0_11 = arith.constant 0 : index
      %12 = vector.load %arg7[%c0_10, %c0_11] : memref<16x128xf32, #tpu.memory_space<vmem>>, vector<16x128xf32>
      %c0_12 = arith.constant 0 : index
      %c0_13 = arith.constant 0 : index
      %13 = vector.load %arg5[%c0_12, %c0_13] : memref<1x128xf32, #tpu.memory_space<vmem>>, vector<1x128xf32>
      %14 = vector.broadcast %13 : vector<1x128xf32> to vector<16x128xf32>
      %15 = arith.addf %12, %14 : vector<16x128xf32>
      %c0_14 = arith.constant 0 : index
      %c0_15 = arith.constant 0 : index
      %16 = vector.load %arg6[%c0_14, %c0_15] : memref<16x128xf32, #tpu.memory_space<vmem>>, vector<16x128xf32>
      tpu.vector_store %arg6[%c0_14, %c0_15], %15 {strides = array<i32>} : memref<16x128xf32, #tpu.memory_space<vmem>>, vector<16x128xf32>,
    } else {
    }
    return
  }
  func.func @transform_0(%arg0: i32, %arg1: i32, %arg2: i32) -> (i32, i32) {
    %c0_i32 = arith.constant 0 : i32
    return %arg0, %arg2 : i32, i32
  }
  func.func @transform_1(%arg0: i32, %arg1: i32, %arg2: i32) -> (i32, i32) {
    %c0_i32 = arith.constant 0 : i32
    return %arg2, %arg1 : i32, i32
  }
  func.func @transform_2(%arg0: i32, %arg1: i32, %arg2: i32) -> (i32, i32) {
    %c0_i32 = arith.constant 0 : i32
    %c0_i32_0 = arith.constant 0 : i32
    return %c0_i32, %arg1 : i32, i32
  }
  func.func @transform_3(%arg0: i32, %arg1: i32, %arg2: i32) -> (i32, i32) {
    %c0_i32 = arith.constant 0 : i32
    return %arg0, %arg1 : i32, i32
  }
}

module attributes {stable_mosaic.version = 11 : i64} {
  func.func @_crf_kernel(%arg0: i32, %arg1: memref<1x8x128xf32, #tpu.memory_space<vmem>>, %arg2: memref<1x8x128xf32, #tpu.memory_space<vmem>>, %arg3: memref<1x8x1xf32, #tpu.memory_space<vmem>>, %arg4: memref<128x128xf32, #tpu.memory_space<vmem>>, %arg5: memref<128x128xf32, #tpu.memory_space<vmem>>, %arg6: memref<1x128xf32, #tpu.memory_space<vmem>>, %arg7: memref<1x128xf32, #tpu.memory_space<vmem>>, %arg8: memref<1x1x1xf32, #tpu.memory_space<vmem>>) attributes {dimension_semantics = [#tpu.dimension_semantics<parallel>], iteration_bounds = array<i64: 2>, scalar_prefetch = 0 : i64, scratch_operands = 0 : i64, tpu.core_type = #tpu.core_type<tc>, window_params = [{transform_indices = @transform_0, window_bounds = array<i64: 1, 8, 128>}, {transform_indices = @transform_1, window_bounds = array<i64: 1, 8, 128>}, {transform_indices = @transform_2, window_bounds = array<i64: 1, 8, 1>}, {pipeline_mode = #tpu.pipeline_mode<synchronous>, transform_indices = @transform_3, window_bounds = array<i64: 128, 128>}, {pipeline_mode = #tpu.pipeline_mode<synchronous>, transform_indices = @transform_4, window_bounds = array<i64: 128, 128>}, {pipeline_mode = #tpu.pipeline_mode<synchronous>, transform_indices = @transform_5, window_bounds = array<i64: 1, 128>}, {pipeline_mode = #tpu.pipeline_mode<synchronous>, transform_indices = @transform_6, window_bounds = array<i64: 1, 128>}, {transform_indices = @transform_7, window_bounds = array<i64: 1, 1, 1>}]} {
    %c0 = arith.constant 0 : index
    %c0_0 = arith.constant 0 : index
    %c0_1 = arith.constant 0 : index
    %0 = vector.load %arg1[%c0, %c0_0, %c0_1] : memref<1x8x128xf32, #tpu.memory_space<vmem>>, vector<1x8x128xf32>
    %1 = vector.shape_cast %0 : vector<1x8x128xf32> to vector<8x128xf32>
    %c0_2 = arith.constant 0 : index
    %c0_3 = arith.constant 0 : index
    %c0_4 = arith.constant 0 : index
    %2 = vector.load %arg2[%c0_2, %c0_3, %c0_4] : memref<1x8x128xf32, #tpu.memory_space<vmem>>, vector<1x8x128xf32>
    %3 = vector.shape_cast %2 : vector<1x8x128xf32> to vector<8x128xf32>
    %c0_5 = arith.constant 0 : index
    %c0_6 = arith.constant 0 : index
    %c0_7 = arith.constant 0 : index
    %4 = vector.load %arg3[%c0_5, %c0_6, %c0_7] : memref<1x8x1xf32, #tpu.memory_space<vmem>>, vector<1x8x1xf32>
    %5 = vector.shape_cast %4 : vector<1x8x1xf32> to vector<8x1xf32>
    %c0_8 = arith.constant 0 : index
    %c0_9 = arith.constant 0 : index
    %6 = vector.load %arg4[%c0_8, %c0_9] : memref<128x128xf32, #tpu.memory_space<vmem>>, vector<128x128xf32>
    %c0_10 = arith.constant 0 : index
    %c0_11 = arith.constant 0 : index
    %7 = vector.load %arg5[%c0_10, %c0_11] : memref<128x128xf32, #tpu.memory_space<vmem>>, vector<128x128xf32>
    %c0_12 = arith.constant 0 : index
    %c0_13 = arith.constant 0 : index
    %8 = vector.load %arg6[%c0_12, %c0_13] : memref<1x128xf32, #tpu.memory_space<vmem>>, vector<1x128xf32>
    %c0_14 = arith.constant 0 : index
    %c0_15 = arith.constant 0 : index
    %9 = vector.load %arg7[%c0_14, %c0_15] : memref<1x128xf32, #tpu.memory_space<vmem>>, vector<1x128xf32>
    %10 = arith.mulf %3, %1 : vector<8x128xf32>
    %cst = arith.constant dense<0.000000e+00> : vector<8xf32>
    %11 = vector.multi_reduction <add>, %10, %cst [1] : vector<8x128xf32> to vector<8xf32>
    %12 = vector.shape_cast %11 : vector<8xf32> to vector<8x1xf32>
    %13 = vector.extract_strided_slice %3 {offsets = [0, 0], sizes = [1, 128], strides = [1, 1]} : vector<8x128xf32> to vector<1x128xf32>
    %14 = arith.mulf %8, %13 : vector<1x128xf32>
    %cst_16 = arith.constant dense<0.000000e+00> : vector<1xf32>
    %15 = vector.multi_reduction <add>, %14, %cst_16 [1] : vector<1x128xf32> to vector<1xf32>
    %16 = vector.shape_cast %15 : vector<1xf32> to vector<1x1xf32>
    %17 = vector.extract_strided_slice %3 {offsets = [0, 0], sizes = [7, 128], strides = [1, 1]} : vector<8x128xf32> to vector<7x128xf32>
    %cst_17 = arith.constant dense<0.000000e+00> : vector<7x128xf32>
    %18 = tpu.matmul %17, %6, %cst_17 {dimension_numbers = #tpu.dot_dimension_numbers<[1], [0], [0], [1], [0, 0, 1, 1], [], []>} : vector<7x128xf32>, vector<128x128xf32>, vector<7x128xf32> -> vector<7x128xf32>
    %19 = vector.extract_strided_slice %3 {offsets = [1, 0], sizes = [7, 128], strides = [1, 1]} : vector<8x128xf32> to vector<7x128xf32>
    %20 = arith.mulf %18, %19 : vector<7x128xf32>
    %cst_18 = arith.constant dense<0.000000e+00> : vector<7xf32>
    %21 = vector.multi_reduction <add>, %20, %cst_18 [1] : vector<7x128xf32> to vector<7xf32>
    %22 = vector.shape_cast %21 : vector<7xf32> to vector<7x1xf32>
    %23 = vector.extract_strided_slice %12 {offsets = [1, 0], sizes = [7, 1], strides = [1, 1]} : vector<8x1xf32> to vector<7x1xf32>
    %24 = arith.addf %22, %23 : vector<7x1xf32>
    %25 = vector.extract_strided_slice %5 {offsets = [1, 0], sizes = [7, 1], strides = [1, 1]} : vector<8x1xf32> to vector<7x1xf32>
    %26 = arith.mulf %24, %25 : vector<7x1xf32>
    %cst_19 = arith.constant dense<0.000000e+00> : vector<1xf32>
    %27 = vector.multi_reduction <add>, %26, %cst_19 [0] : vector<7x1xf32> to vector<1xf32>
    %28 = vector.shape_cast %27 : vector<1xf32> to vector<1x1xf32>
    %cst_20 = arith.constant dense<0.000000e+00> : vector<1xf32>
    %29 = vector.multi_reduction <add>, %5, %cst_20 [0] : vector<8x1xf32> to vector<1xf32>
    %30 = vector.shape_cast %29 : vector<1xf32> to vector<1x1xf32>
    %31 = arith.fptosi %30 : vector<1x1xf32> to vector<1x1xi32>
    %32 = tpu.iota {dimensions = array<i32: 0>} : vector<8x1xi32>
    %c1_i32 = arith.constant 1 : i32
    %33 = vector.broadcast %c1_i32 : i32 to vector<1x1xi32>
    %34 = arith.subi %31, %33 : vector<1x1xi32>
    %35 = vector.broadcast %34 : vector<1x1xi32> to vector<8x1xi32>
    %36 = arith.cmpi eq, %32, %35 : vector<8x1xi32>
    %37 = arith.extui %36 : vector<8x1xi1> to vector<8x1xi32>
    %38 = arith.sitofp %37 : vector<8x1xi32> to vector<8x1xf32>
    %39 = vector.broadcast %38 : vector<8x1xf32> to vector<8x128xf32>
    %40 = arith.mulf %39, %3 : vector<8x128xf32>
    %cst_21 = arith.constant dense<0.000000e+00> : vector<128xf32>
    %41 = vector.multi_reduction <add>, %40, %cst_21 [0] : vector<8x128xf32> to vector<128xf32>
    %42 = vector.shape_cast %41 : vector<128xf32> to vector<1x128xf32>
    %43 = arith.mulf %42, %9 : vector<1x128xf32>
    %cst_22 = arith.constant dense<0.000000e+00> : vector<1xf32>
    %44 = vector.multi_reduction <add>, %43, %cst_22 [1] : vector<1x128xf32> to vector<1xf32>
    %45 = vector.shape_cast %44 : vector<1xf32> to vector<1x1xf32>
    %46 = vector.extract_strided_slice %12 {offsets = [0, 0], sizes = [1, 1], strides = [1, 1]} : vector<8x1xf32> to vector<1x1xf32>
    %47 = arith.addf %16, %46 : vector<1x1xf32>
    %48 = arith.addf %47, %28 : vector<1x1xf32>
    %49 = arith.addf %48, %45 : vector<1x1xf32>
    %50 = vector.extract_strided_slice %1 {offsets = [0, 0], sizes = [1, 128], strides = [1, 1]} : vector<8x128xf32> to vector<1x128xf32>
    %51 = arith.addf %8, %50 : vector<1x128xf32>
    %c1_i32_23 = arith.constant 1 : i32
    %c0_24 = arith.constant 0 : index
    %52 = arith.index_cast %c1_i32_23 : i32 to index
    %c0_25 = arith.constant 0 : index
    %53 = vector.load %arg1[%c0_24, %52, %c0_25] : memref<1x8x128xf32, #tpu.memory_space<vmem>>, vector<1x1x128xf32>
    %54 = vector.shape_cast %53 : vector<1x1x128xf32> to vector<1x128xf32>
    %c0_26 = arith.constant 0 : index
    %55 = arith.index_cast %c1_i32_23 : i32 to index
    %c0_27 = arith.constant 0 : index
    %56 = vector.load %arg3[%c0_26, %55, %c0_27] : memref<1x8x1xf32, #tpu.memory_space<vmem>>, vector<1x1x1xf32>
    %57 = vector.shape_cast %56 : vector<1x1x1xf32> to vector<1x1xf32>
    %58 = vector.broadcast %51 : vector<1x128xf32> to vector<128x128xf32>
    %59 = arith.addf %58, %7 : vector<128x128xf32>
    %cst_28 = arith.constant dense<0xFF800000> : vector<128xf32>
    %60 = vector.multi_reduction <maximumf>, %59, %cst_28 [1] : vector<128x128xf32> to vector<128xf32>
    %61 = vector.shape_cast %60 : vector<128xf32> to vector<128x1xf32>
    %62 = vector.broadcast %61 : vector<128x1xf32> to vector<128x128xf32>
    %63 = arith.subf %59, %62 : vector<128x128xf32>
    %64 = math.exp %63 : vector<128x128xf32>
    %cst_29 = arith.constant dense<0.000000e+00> : vector<128xf32>
    %65 = vector.multi_reduction <add>, %64, %cst_29 [1] : vector<128x128xf32> to vector<128xf32>
    %66 = vector.shape_cast %65 : vector<128xf32> to vector<128x1xf32>
    %67 = math.log %66 : vector<128x1xf32>
    %68 = arith.addf %67, %61 : vector<128x1xf32>
    %69 = tpu.transpose %68, [1, 0] : vector<128x1xf32> -> vector<1x128xf32>
    %70 = arith.addf %69, %54 : vector<1x128xf32>
    %71 = vector.broadcast %57 : vector<1x1xf32> to vector<1x128xf32>
    %72 = arith.mulf %71, %70 : vector<1x128xf32>
    %cst_30 = arith.constant 1.000000e+00 : f32
    %73 = vector.broadcast %cst_30 : f32 to vector<1x1xf32>
    %74 = arith.subf %73, %57 : vector<1x1xf32>
    %75 = vector.broadcast %74 : vector<1x1xf32> to vector<1x128xf32>
    %76 = arith.mulf %75, %51 : vector<1x128xf32>
    %77 = arith.addf %72, %76 : vector<1x128xf32>
    %c2_i32 = arith.constant 2 : i32
    %c0_31 = arith.constant 0 : index
    %78 = arith.index_cast %c2_i32 : i32 to index
    %c0_32 = arith.constant 0 : index
    %79 = vector.load %arg1[%c0_31, %78, %c0_32] : memref<1x8x128xf32, #tpu.memory_space<vmem>>, vector<1x1x128xf32>
    %80 = vector.shape_cast %79 : vector<1x1x128xf32> to vector<1x128xf32>
    %c0_33 = arith.constant 0 : index
    %81 = arith.index_cast %c2_i32 : i32 to index
    %c0_34 = arith.constant 0 : index
    %82 = vector.load %arg3[%c0_33, %81, %c0_34] : memref<1x8x1xf32, #tpu.memory_space<vmem>>, vector<1x1x1xf32>
    %83 = vector.shape_cast %82 : vector<1x1x1xf32> to vector<1x1xf32>
    %84 = vector.broadcast %77 : vector<1x128xf32> to vector<128x128xf32>
    %85 = arith.addf %84, %7 : vector<128x128xf32>
    %cst_35 = arith.constant dense<0xFF800000> : vector<128xf32>
    %86 = vector.multi_reduction <maximumf>, %85, %cst_35 [1] : vector<128x128xf32> to vector<128xf32>
    %87 = vector.shape_cast %86 : vector<128xf32> to vector<128x1xf32>
    %88 = vector.broadcast %87 : vector<128x1xf32> to vector<128x128xf32>
    %89 = arith.subf %85, %88 : vector<128x128xf32>
    %90 = math.exp %89 : vector<128x128xf32>
    %cst_36 = arith.constant dense<0.000000e+00> : vector<128xf32>
    %91 = vector.multi_reduction <add>, %90, %cst_36 [1] : vector<128x128xf32> to vector<128xf32>
    %92 = vector.shape_cast %91 : vector<128xf32> to vector<128x1xf32>
    %93 = math.log %92 : vector<128x1xf32>
    %94 = arith.addf %93, %87 : vector<128x1xf32>
    %95 = tpu.transpose %94, [1, 0] : vector<128x1xf32> -> vector<1x128xf32>
    %96 = arith.addf %95, %80 : vector<1x128xf32>
    %97 = vector.broadcast %83 : vector<1x1xf32> to vector<1x128xf32>
    %98 = arith.mulf %97, %96 : vector<1x128xf32>
    %cst_37 = arith.constant 1.000000e+00 : f32
    %99 = vector.broadcast %cst_37 : f32 to vector<1x1xf32>
    %100 = arith.subf %99, %83 : vector<1x1xf32>
    %101 = vector.broadcast %100 : vector<1x1xf32> to vector<1x128xf32>
    %102 = arith.mulf %101, %77 : vector<1x128xf32>
    %103 = arith.addf %98, %102 : vector<1x128xf32>
    %c3_i32 = arith.constant 3 : i32
    %c0_38 = arith.constant 0 : index
    %104 = arith.index_cast %c3_i32 : i32 to index
    %c0_39 = arith.constant 0 : index
    %105 = vector.load %arg1[%c0_38, %104, %c0_39] : memref<1x8x128xf32, #tpu.memory_space<vmem>>, vector<1x1x128xf32>
    %106 = vector.shape_cast %105 : vector<1x1x128xf32> to vector<1x128xf32>
    %c0_40 = arith.constant 0 : index
    %107 = arith.index_cast %c3_i32 : i32 to index
    %c0_41 = arith.constant 0 : index
    %108 = vector.load %arg3[%c0_40, %107, %c0_41] : memref<1x8x1xf32, #tpu.memory_space<vmem>>, vector<1x1x1xf32>
    %109 = vector.shape_cast %108 : vector<1x1x1xf32> to vector<1x1xf32>
    %110 = vector.broadcast %103 : vector<1x128xf32> to vector<128x128xf32>
    %111 = arith.addf %110, %7 : vector<128x128xf32>
    %cst_42 = arith.constant dense<0xFF800000> : vector<128xf32>
    %112 = vector.multi_reduction <maximumf>, %111, %cst_42 [1] : vector<128x128xf32> to vector<128xf32>
    %113 = vector.shape_cast %112 : vector<128xf32> to vector<128x1xf32>
    %114 = vector.broadcast %113 : vector<128x1xf32> to vector<128x128xf32>
    %115 = arith.subf %111, %114 : vector<128x128xf32>
    %116 = math.exp %115 : vector<128x128xf32>
    %cst_43 = arith.constant dense<0.000000e+00> : vector<128xf32>
    %117 = vector.multi_reduction <add>, %116, %cst_43 [1] : vector<128x128xf32> to vector<128xf32>
    %118 = vector.shape_cast %117 : vector<128xf32> to vector<128x1xf32>
    %119 = math.log %118 : vector<128x1xf32>
    %120 = arith.addf %119, %113 : vector<128x1xf32>
    %121 = tpu.transpose %120, [1, 0] : vector<128x1xf32> -> vector<1x128xf32>
    %122 = arith.addf %121, %106 : vector<1x128xf32>
    %123 = vector.broadcast %109 : vector<1x1xf32> to vector<1x128xf32>
    %124 = arith.mulf %123, %122 : vector<1x128xf32>
    %cst_44 = arith.constant 1.000000e+00 : f32
    %125 = vector.broadcast %cst_44 : f32 to vector<1x1xf32>
    %126 = arith.subf %125, %109 : vector<1x1xf32>
    %127 = vector.broadcast %126 : vector<1x1xf32> to vector<1x128xf32>
    %128 = arith.mulf %127, %103 : vector<1x128xf32>
    %129 = arith.addf %124, %128 : vector<1x128xf32>
    %c4_i32 = arith.constant 4 : i32
    %c0_45 = arith.constant 0 : index
    %130 = arith.index_cast %c4_i32 : i32 to index
    %c0_46 = arith.constant 0 : index
    %131 = vector.load %arg1[%c0_45, %130, %c0_46] : memref<1x8x128xf32, #tpu.memory_space<vmem>>, vector<1x1x128xf32>
    %132 = vector.shape_cast %131 : vector<1x1x128xf32> to vector<1x128xf32>
    %c0_47 = arith.constant 0 : index
    %133 = arith.index_cast %c4_i32 : i32 to index
    %c0_48 = arith.constant 0 : index
    %134 = vector.load %arg3[%c0_47, %133, %c0_48] : memref<1x8x1xf32, #tpu.memory_space<vmem>>, vector<1x1x1xf32>
    %135 = vector.shape_cast %134 : vector<1x1x1xf32> to vector<1x1xf32>
    %136 = vector.broadcast %129 : vector<1x128xf32> to vector<128x128xf32>
    %137 = arith.addf %136, %7 : vector<128x128xf32>
    %cst_49 = arith.constant dense<0xFF800000> : vector<128xf32>
    %138 = vector.multi_reduction <maximumf>, %137, %cst_49 [1] : vector<128x128xf32> to vector<128xf32>
    %139 = vector.shape_cast %138 : vector<128xf32> to vector<128x1xf32>
    %140 = vector.broadcast %139 : vector<128x1xf32> to vector<128x128xf32>
    %141 = arith.subf %137, %140 : vector<128x128xf32>
    %142 = math.exp %141 : vector<128x128xf32>
    %cst_50 = arith.constant dense<0.000000e+00> : vector<128xf32>
    %143 = vector.multi_reduction <add>, %142, %cst_50 [1] : vector<128x128xf32> to vector<128xf32>
    %144 = vector.shape_cast %143 : vector<128xf32> to vector<128x1xf32>
    %145 = math.log %144 : vector<128x1xf32>
    %146 = arith.addf %145, %139 : vector<128x1xf32>
    %147 = tpu.transpose %146, [1, 0] : vector<128x1xf32> -> vector<1x128xf32>
    %148 = arith.addf %147, %132 : vector<1x128xf32>
    %149 = vector.broadcast %135 : vector<1x1xf32> to vector<1x128xf32>
    %150 = arith.mulf %149, %148 : vector<1x128xf32>
    %cst_51 = arith.constant 1.000000e+00 : f32
    %151 = vector.broadcast %cst_51 : f32 to vector<1x1xf32>
    %152 = arith.subf %151, %135 : vector<1x1xf32>
    %153 = vector.broadcast %152 : vector<1x1xf32> to vector<1x128xf32>
    %154 = arith.mulf %153, %129 : vector<1x128xf32>
    %155 = arith.addf %150, %154 : vector<1x128xf32>
    %c5_i32 = arith.constant 5 : i32
    %c0_52 = arith.constant 0 : index
    %156 = arith.index_cast %c5_i32 : i32 to index
    %c0_53 = arith.constant 0 : index
    %157 = vector.load %arg1[%c0_52, %156, %c0_53] : memref<1x8x128xf32, #tpu.memory_space<vmem>>, vector<1x1x128xf32>
    %158 = vector.shape_cast %157 : vector<1x1x128xf32> to vector<1x128xf32>
    %c0_54 = arith.constant 0 : index
    %159 = arith.index_cast %c5_i32 : i32 to index
    %c0_55 = arith.constant 0 : index
    %160 = vector.load %arg3[%c0_54, %159, %c0_55] : memref<1x8x1xf32, #tpu.memory_space<vmem>>, vector<1x1x1xf32>
    %161 = vector.shape_cast %160 : vector<1x1x1xf32> to vector<1x1xf32>
    %162 = vector.broadcast %155 : vector<1x128xf32> to vector<128x128xf32>
    %163 = arith.addf %162, %7 : vector<128x128xf32>
    %cst_56 = arith.constant dense<0xFF800000> : vector<128xf32>
    %164 = vector.multi_reduction <maximumf>, %163, %cst_56 [1] : vector<128x128xf32> to vector<128xf32>
    %165 = vector.shape_cast %164 : vector<128xf32> to vector<128x1xf32>
    %166 = vector.broadcast %165 : vector<128x1xf32> to vector<128x128xf32>
    %167 = arith.subf %163, %166 : vector<128x128xf32>
    %168 = math.exp %167 : vector<128x128xf32>
    %cst_57 = arith.constant dense<0.000000e+00> : vector<128xf32>
    %169 = vector.multi_reduction <add>, %168, %cst_57 [1] : vector<128x128xf32> to vector<128xf32>
    %170 = vector.shape_cast %169 : vector<128xf32> to vector<128x1xf32>
    %171 = math.log %170 : vector<128x1xf32>
    %172 = arith.addf %171, %165 : vector<128x1xf32>
    %173 = tpu.transpose %172, [1, 0] : vector<128x1xf32> -> vector<1x128xf32>
    %174 = arith.addf %173, %158 : vector<1x128xf32>
    %175 = vector.broadcast %161 : vector<1x1xf32> to vector<1x128xf32>
    %176 = arith.mulf %175, %174 : vector<1x128xf32>
    %cst_58 = arith.constant 1.000000e+00 : f32
    %177 = vector.broadcast %cst_58 : f32 to vector<1x1xf32>
    %178 = arith.subf %177, %161 : vector<1x1xf32>
    %179 = vector.broadcast %178 : vector<1x1xf32> to vector<1x128xf32>
    %180 = arith.mulf %179, %155 : vector<1x128xf32>
    %181 = arith.addf %176, %180 : vector<1x128xf32>
    %c6_i32 = arith.constant 6 : i32
    %c0_59 = arith.constant 0 : index
    %182 = arith.index_cast %c6_i32 : i32 to index
    %c0_60 = arith.constant 0 : index
    %183 = vector.load %arg1[%c0_59, %182, %c0_60] : memref<1x8x128xf32, #tpu.memory_space<vmem>>, vector<1x1x128xf32>
    %184 = vector.shape_cast %183 : vector<1x1x128xf32> to vector<1x128xf32>
    %c0_61 = arith.constant 0 : index
    %185 = arith.index_cast %c6_i32 : i32 to index
    %c0_62 = arith.constant 0 : index
    %186 = vector.load %arg3[%c0_61, %185, %c0_62] : memref<1x8x1xf32, #tpu.memory_space<vmem>>, vector<1x1x1xf32>
    %187 = vector.shape_cast %186 : vector<1x1x1xf32> to vector<1x1xf32>
    %188 = vector.broadcast %181 : vector<1x128xf32> to vector<128x128xf32>
    %189 = arith.addf %188, %7 : vector<128x128xf32>
    %cst_63 = arith.constant dense<0xFF800000> : vector<128xf32>
    %190 = vector.multi_reduction <maximumf>, %189, %cst_63 [1] : vector<128x128xf32> to vector<128xf32>
    %191 = vector.shape_cast %190 : vector<128xf32> to vector<128x1xf32>
    %192 = vector.broadcast %191 : vector<128x1xf32> to vector<128x128xf32>
    %193 = arith.subf %189, %192 : vector<128x128xf32>
    %194 = math.exp %193 : vector<128x128xf32>
    %cst_64 = arith.constant dense<0.000000e+00> : vector<128xf32>
    %195 = vector.multi_reduction <add>, %194, %cst_64 [1] : vector<128x128xf32> to vector<128xf32>
    %196 = vector.shape_cast %195 : vector<128xf32> to vector<128x1xf32>
    %197 = math.log %196 : vector<128x1xf32>
    %198 = arith.addf %197, %191 : vector<128x1xf32>
    %199 = tpu.transpose %198, [1, 0] : vector<128x1xf32> -> vector<1x128xf32>
    %200 = arith.addf %199, %184 : vector<1x128xf32>
    %201 = vector.broadcast %187 : vector<1x1xf32> to vector<1x128xf32>
    %202 = arith.mulf %201, %200 : vector<1x128xf32>
    %cst_65 = arith.constant 1.000000e+00 : f32
    %203 = vector.broadcast %cst_65 : f32 to vector<1x1xf32>
    %204 = arith.subf %203, %187 : vector<1x1xf32>
    %205 = vector.broadcast %204 : vector<1x1xf32> to vector<1x128xf32>
    %206 = arith.mulf %205, %181 : vector<1x128xf32>
    %207 = arith.addf %202, %206 : vector<1x128xf32>
    %c7_i32 = arith.constant 7 : i32
    %c0_66 = arith.constant 0 : index
    %208 = arith.index_cast %c7_i32 : i32 to index
    %c0_67 = arith.constant 0 : index
    %209 = vector.load %arg1[%c0_66, %208, %c0_67] : memref<1x8x128xf32, #tpu.memory_space<vmem>>, vector<1x1x128xf32>
    %210 = vector.shape_cast %209 : vector<1x1x128xf32> to vector<1x128xf32>
    %c0_68 = arith.constant 0 : index
    %211 = arith.index_cast %c7_i32 : i32 to index
    %c0_69 = arith.constant 0 : index
    %212 = vector.load %arg3[%c0_68, %211, %c0_69] : memref<1x8x1xf32, #tpu.memory_space<vmem>>, vector<1x1x1xf32>
    %213 = vector.shape_cast %212 : vector<1x1x1xf32> to vector<1x1xf32>
    %214 = vector.broadcast %207 : vector<1x128xf32> to vector<128x128xf32>
    %215 = arith.addf %214, %7 : vector<128x128xf32>
    %cst_70 = arith.constant dense<0xFF800000> : vector<128xf32>
    %216 = vector.multi_reduction <maximumf>, %215, %cst_70 [1] : vector<128x128xf32> to vector<128xf32>
    %217 = vector.shape_cast %216 : vector<128xf32> to vector<128x1xf32>
    %218 = vector.broadcast %217 : vector<128x1xf32> to vector<128x128xf32>
    %219 = arith.subf %215, %218 : vector<128x128xf32>
    %220 = math.exp %219 : vector<128x128xf32>
    %cst_71 = arith.constant dense<0.000000e+00> : vector<128xf32>
    %221 = vector.multi_reduction <add>, %220, %cst_71 [1] : vector<128x128xf32> to vector<128xf32>
    %222 = vector.shape_cast %221 : vector<128xf32> to vector<128x1xf32>
    %223 = math.log %222 : vector<128x1xf32>
    %224 = arith.addf %223, %217 : vector<128x1xf32>
    %225 = tpu.transpose %224, [1, 0] : vector<128x1xf32> -> vector<1x128xf32>
    %226 = arith.addf %225, %210 : vector<1x128xf32>
    %227 = vector.broadcast %213 : vector<1x1xf32> to vector<1x128xf32>
    %228 = arith.mulf %227, %226 : vector<1x128xf32>
    %cst_72 = arith.constant 1.000000e+00 : f32
    %229 = vector.broadcast %cst_72 : f32 to vector<1x1xf32>
    %230 = arith.subf %229, %213 : vector<1x1xf32>
    %231 = vector.broadcast %230 : vector<1x1xf32> to vector<1x128xf32>
    %232 = arith.mulf %231, %207 : vector<1x128xf32>
    %233 = arith.addf %228, %232 : vector<1x128xf32>
    %c7_i32_73 = arith.constant 7 : i32
    %234 = arith.addf %233, %9 : vector<1x128xf32>
    %cst_74 = arith.constant dense<0xFF800000> : vector<1xf32>
    %235 = vector.multi_reduction <maximumf>, %234, %cst_74 [1] : vector<1x128xf32> to vector<1xf32>
    %236 = vector.shape_cast %235 : vector<1xf32> to vector<1x1xf32>
    %237 = vector.broadcast %236 : vector<1x1xf32> to vector<1x128xf32>
    %238 = arith.subf %234, %237 : vector<1x128xf32>
    %239 = math.exp %238 : vector<1x128xf32>
    %cst_75 = arith.constant dense<0.000000e+00> : vector<1xf32>
    %240 = vector.multi_reduction <add>, %239, %cst_75 [1] : vector<1x128xf32> to vector<1xf32>
    %241 = vector.shape_cast %240 : vector<1xf32> to vector<1x1xf32>
    %242 = math.log %241 : vector<1x1xf32>
    %243 = arith.addf %242, %236 : vector<1x1xf32>
    %244 = arith.subf %49, %243 : vector<1x1xf32>
    %c0_76 = arith.constant 0 : index
    %c0_77 = arith.constant 0 : index
    %c0_78 = arith.constant 0 : index
    %245 = vector.load %arg8[%c0_76, %c0_77, %c0_78] : memref<1x1x1xf32, #tpu.memory_space<vmem>>, vector<1x1x1xf32>
    %246 = vector.shape_cast %245 : vector<1x1x1xf32> to vector<1x1xf32>
    %247 = vector.shape_cast %244 : vector<1x1xf32> to vector<1x1x1xf32>
    tpu.vector_store %arg8[%c0_76, %c0_77, %c0_78], %247 {strides = array<i32>} : memref<1x1x1xf32, #tpu.memory_space<vmem>>, vector<1x1x1xf32>,
    return
  }
  func.func @transform_0(%arg0: i32) -> (i32, i32, i32) {
    %c0_i32 = arith.constant 0 : i32
    %c0_i32_0 = arith.constant 0 : i32
    %c0_i32_1 = arith.constant 0 : i32
    return %arg0, %c0_i32, %c0_i32_0 : i32, i32, i32
  }
  func.func @transform_1(%arg0: i32) -> (i32, i32, i32) {
    %c0_i32 = arith.constant 0 : i32
    %c0_i32_0 = arith.constant 0 : i32
    %c0_i32_1 = arith.constant 0 : i32
    return %arg0, %c0_i32, %c0_i32_0 : i32, i32, i32
  }
  func.func @transform_2(%arg0: i32) -> (i32, i32, i32) {
    %c0_i32 = arith.constant 0 : i32
    %c0_i32_0 = arith.constant 0 : i32
    %c0_i32_1 = arith.constant 0 : i32
    return %arg0, %c0_i32, %c0_i32_0 : i32, i32, i32
  }
  func.func @transform_3(%arg0: i32) -> (i32, i32) {
    %c0_i32 = arith.constant 0 : i32
    %c0_i32_0 = arith.constant 0 : i32
    %c0_i32_1 = arith.constant 0 : i32
    return %c0_i32, %c0_i32_0 : i32, i32
  }
  func.func @transform_4(%arg0: i32) -> (i32, i32) {
    %c0_i32 = arith.constant 0 : i32
    %c0_i32_0 = arith.constant 0 : i32
    %c0_i32_1 = arith.constant 0 : i32
    return %c0_i32, %c0_i32_0 : i32, i32
  }
  func.func @transform_5(%arg0: i32) -> (i32, i32) {
    %c0_i32 = arith.constant 0 : i32
    %c0_i32_0 = arith.constant 0 : i32
    %c0_i32_1 = arith.constant 0 : i32
    return %c0_i32, %c0_i32_0 : i32, i32
  }
  func.func @transform_6(%arg0: i32) -> (i32, i32) {
    %c0_i32 = arith.constant 0 : i32
    %c0_i32_0 = arith.constant 0 : i32
    %c0_i32_1 = arith.constant 0 : i32
    return %c0_i32, %c0_i32_0 : i32, i32
  }
  func.func @transform_7(%arg0: i32) -> (i32, i32, i32) {
    %c0_i32 = arith.constant 0 : i32
    %c0_i32_0 = arith.constant 0 : i32
    %c0_i32_1 = arith.constant 0 : i32
    return %arg0, %c0_i32, %c0_i32_0 : i32, i32, i32
  }
}

</mosaic_0001>

<llo_original>
// kernel: bert_crf_forward.14
$region0: #{bert_crf_forward.14}
  #allocation0 [shape = 'u32[]', space=smem, size = 0x4, offset = 0x4, fixed_abs, tag = 'smem constant byte address 0x4 - core index']
  #allocation1 [shape = 'u32[144,128]{1,0:T(1,128)}', space=vmem, size = 0x12000, scoped, tag = 'internal scratch']
  #allocation2 [shape = 'f32[16,96]{1,0:T(8,128)}', space=vmem, size = 0x2000, scoped, tag = 'scratch operand']
  %s0 = inlined_call_operand.vmem [shape: bf16[16,32], index: 0, kind: input, shape index: {}]
  %s1 = inlined_call_operand.vmem [shape: bf16[32,96], index: 1, kind: input, shape index: {}]
  %s2 = inlined_call_operand.vmem [shape: f32[1,96], index: 2, kind: input, shape index: {}]
  %s3 = inlined_call_operand.vmem [shape: bf16[16,96], index: 3, kind: output, shape index: {}]
  %s4 = sld [smem:[#allocation0]]
  $region30: #{bert_crf_forward.14} parent=0
    _
  %s6 = ssub.s32 1, %s4
  %s7 = scalar_select 0, %s6, %s4
  // Predicated region
  $region2: #{bert_crf_forward.14} parent=0 // pred_check
    _
  $region3: #{bert_crf_forward.14} parent=0 // pred_check_branch
    %9 = sbr.rel (0) target = $region5
  $region4: #{bert_crf_forward.14} parent=0 // pred_region
    _
  $region5: #{bert_crf_forward.14} parent=0 // pred_fallthru
    _
  // Predicated region
  $region6: #{bert_crf_forward.14} parent=0 // pred_check
    _
  $region7: #{bert_crf_forward.14} parent=0 // pred_check_branch
    %11 = sbr.rel (0) target = $region9
  $region8: #{bert_crf_forward.14} parent=0 // pred_region
    _
  $region9: #{bert_crf_forward.14} parent=0 // pred_fallthru
    _
  // Predicated region
  $region10: #{bert_crf_forward.14} parent=0 // pred_check
    _
  $region11: #{bert_crf_forward.14} parent=0 // pred_check_branch
    %13 = sbr.rel (0) target = $region13
  $region12: #{bert_crf_forward.14} parent=0 // pred_region
    _
  $region13: #{bert_crf_forward.14} parent=0 // pred_fallthru
    _
  %p15 = scmp.eq.s32.totalorder 0, 0
  // Predicated region
  $region14: #{bert_crf_forward.14} parent=0 // pred_check
    %p16 = pneg %p15
  $region15: #{bert_crf_forward.14} parent=0 // pred_check_branch
    %18 = sbr.rel (%p16) target = $region17
  $region16: #{bert_crf_forward.14} parent=0 // pred_region
    %vm19 = vcmask 785408
    %20 = vst.msk [vmem:[#allocation2] sm:$0xff] %vm19, 0.0
    %21 = vst.msk [vmem:[#allocation2 + $0x8] sm:$0xff] %vm19, 0.0
  $region17: #{bert_crf_forward.14} parent=0 // pred_fallthru
    _
  %v22 = vld [vmem:[#allocation2] sm:$0xff]
  %v23 = vld [vmem:[#allocation2 + $0x8] sm:$0xff]
  %v24 = vld [vmem:[%s0] sm:$0xf]
  %v25 = vld [vmem:[%s0 + $0x4] sm:$0xf]
  %v26 = vld [vmem:[%s1] sm:$0xf]
  %v27 = vld [vmem:[%s1 + $0x4] sm:$0xf]
  %v28 = vld [vmem:[%s1 + $0x8] sm:$0xf]
  %v29 = vld [vmem:[%s1 + $0xc] sm:$0xf]
  %v32 = vunpack.c.l.b16 %v24
  %v33 = vunpack.c.l.b16 %v25
  %v34 = vpack.c.b16 %v33, %v32
  %v39 = vunpack.c.l.b16 %v26
  %v40 = vunpack.c.l.b16 %v27
  %v41 = vunpack.c.l.b16 %v28
  %v42 = vunpack.c.l.b16 %v29
  %v43 = vpack.c.b16 %v40, %v39
  %v44 = vpack.c.b16 %v42, %v41
  %vm47 = vcmask 261120
  %v49 = vsel %vm47, %v34, 0
  %51 = vmatprep.subr.bf16.mxu0 0
  %52 = vmatpush1.bf16.msra.mxu0 %v43
  %53 = vmatprep.subr.bf16.mxu0 0
  %54 = vmatpush1.bf16.msra.mxu0 %v44
  %55 = vmatprep.subr.bf16.mxu0 0
  %56 = vmatpush1.bf16.msra.mxu0 0
  %57 = vmatprep.subr.bf16.mxu0 0
  %58 = vmatpush1.bf16.msra.mxu0 0
  %59 = vmatprep.subr.bf16.mxu0 0
  %60 = vmatpush1.bf16.msra.mxu0 0
  %61 = vmatprep.subr.bf16.mxu0 0
  %62 = vmatpush1.bf16.msra.mxu0 0
  %63 = vmatprep.subr.bf16.mxu0 0
  %64 = vmatpush1.bf16.msra.mxu0 0
  %65 = vmatprep.subr.bf16.mxu0 0
  %66 = vmatpush1.bf16.msra.mxu0 0
  %67 = vmatprep.subr.bf16.mxu0 0
  %68 = vmatpush1.bf16.msra.mxu0 0
  %69 = vmatprep.subr.bf16.mxu0 0
  %70 = vmatpush1.bf16.msra.mxu0 0
  %71 = vmatprep.subr.bf16.mxu0 0
  %72 = vmatpush1.bf16.msra.mxu0 0
  %73 = vmatprep.subr.bf16.mxu0 0
  %74 = vmatpush1.bf16.msra.mxu0 0
  %75 = vmatprep.subr.bf16.mxu0 0
  %76 = vmatpush1.bf16.msra.mxu0 0
  %77 = vmatprep.subr.bf16.mxu0 0
  %78 = vmatpush1.bf16.msra.mxu0 0
  %79 = vmatprep.subr.bf16.mxu0 0
  %80 = vmatpush1.bf16.msra.mxu0 0
  %81 = vmatprep.subr.bf16.mxu0 0
  %82 = vmatpush1.bf16.msra.mxu0 0
  %83 = vmatprep.mubr.bf16.mxu0 0
  %84 = vmatmul.mubr.bf16.gmra.mrb[0].mxu0 %v49
  %v85 = vpop.f32.mrb[0].mxu0
  %v86 = vadd.f32 0.0, %v85
  %v87 = vpop.f32.mrb[0].mxu0
  %v88 = vpop.f32.mrb[0].mxu0
  %v89 = vadd.f32 0.0, %v88
  %v90 = vpop.f32.mrb[0].mxu0
  %91 = vdwg.mxu0
  %v92 = vadd.f32 %v22, %v86
  %v93 = vadd.f32 %v23, %v89
  %vm94 = vcmask 785408
  %95 = vst.msk [vmem:[#allocation2] sm:$0xff] %vm94, %v92
  %96 = vst.msk [vmem:[#allocation2 + $0x8] sm:$0xff] %vm94, %v93
  // Predicated region
  $region18: #{bert_crf_forward.14} parent=0 // pred_check
    %p97 = pneg %p15
  $region19: #{bert_crf_forward.14} parent=0 // pred_check_branch
    %99 = sbr.rel (%p97) target = $region21
  $region20: #{bert_crf_forward.14} parent=0 // pred_region
    %v100 = vld [vmem:[#allocation2] sm:$0xff]
    %v101 = vld [vmem:[#allocation2 + $0x8] sm:$0xff]
    %v102 = vld [vmem:[%s2] sm:$0x1]
    %v104 = vlaneseq
    %v105 = vshrl.u32 %v104, 7
    %v106 = vsub.s32 0, %v105
    %v107 = vrot.slane %v102, %v106
    %v109 = vadd.f32 %v100, %v107
    %v110 = vadd.f32 %v101, %v107
    %v111 = vpack.c.bf16 %v110, %v109
    %v113 = vunpack.c.l.b16 %v111
    %v114 = vunpack.c.h.b16 %v111
    %v115 = vpack.c.b16 %v113, %v113
    %v116 = vpack.c.b16 %v114, %v114
    %vm119 = vcmask 781312
    %120 = vst.msk [vmem:[%s3] sm:$0xf] %vm119, %v115
    %121 = vst.msk [vmem:[%s3 + $0x4] sm:$0xf] %vm119, %v116
  $region21: #{bert_crf_forward.14} parent=0 // pred_fallthru
    _
  // Predicated region
  $region22: #{bert_crf_forward.14} parent=0 // pred_check
    _
  $region23: #{bert_crf_forward.14} parent=0 // pred_check_branch
    %123 = sbr.rel (0) target = $region25
  $region24: #{bert_crf_forward.14} parent=0 // pred_region
    _
  $region25: #{bert_crf_forward.14} parent=0 // pred_fallthru
    _
  // Predicated region
  $region26: #{bert_crf_forward.14} parent=0 // pred_check
    _
  $region27: #{bert_crf_forward.14} parent=0 // pred_check_branch
    %125 = sbr.rel (0) target = $region29
  $region28: #{bert_crf_forward.14} parent=0 // pred_region
    _
  $region29: #{bert_crf_forward.14} parent=0 // pred_fallthru
    _

// kernel: bert_crf_forward.13
$region0: #{bert_crf_forward.13}
  #allocation0 [shape = 'u32[]', space=smem, size = 0x4, offset = 0x4, fixed_abs, tag = 'smem constant byte address 0x4 - core index']
  #allocation1 [shape = 'u32[144,128]{1,0:T(1,128)}', space=vmem, size = 0x12000, scoped, tag = 'internal scratch']
  %s0 = inlined_call_operand.vmem [shape: f32[16,32], index: 0, kind: input, shape index: {}]
  %s1 = inlined_call_operand.vmem [shape: f32[1,32], index: 1, kind: input, shape index: {}]
  %s2 = inlined_call_operand.vmem [shape: f32[1,32], index: 2, kind: input, shape index: {}]
  %s3 = inlined_call_operand.vmem [shape: f32[16,32], index: 3, kind: output, shape index: {}]
  %s4 = sld [smem:[#allocation0]]
  $region22: #{bert_crf_forward.13} parent=0
    _
  %s6 = ssub.s32 1, %s4
  %s7 = scalar_select 0, %s6, %s4
  // Predicated region
  $region2: #{bert_crf_forward.13} parent=0 // pred_check
    _
  $region3: #{bert_crf_forward.13} parent=0 // pred_check_branch
    %9 = sbr.rel (0) target = $region5
  $region4: #{bert_crf_forward.13} parent=0 // pred_region
    _
  $region5: #{bert_crf_forward.13} parent=0 // pred_fallthru
    _
  // Predicated region
  $region6: #{bert_crf_forward.13} parent=0 // pred_check
    _
  $region7: #{bert_crf_forward.13} parent=0 // pred_check_branch
    %11 = sbr.rel (0) target = $region9
  $region8: #{bert_crf_forward.13} parent=0 // pred_region
    _
  $region9: #{bert_crf_forward.13} parent=0 // pred_fallthru
    _
  // Predicated region
  $region10: #{bert_crf_forward.13} parent=0 // pred_check
    _
  $region11: #{bert_crf_forward.13} parent=0 // pred_check_branch
    %13 = sbr.rel (0) target = $region13
  $region12: #{bert_crf_forward.13} parent=0 // pred_region
    _
  $region13: #{bert_crf_forward.13} parent=0 // pred_fallthru
    _
  %v14 = vld [vmem:[%s0] sm:$0xff]
  %v15 = vld [vmem:[%s0 + $0x8] sm:$0xff]
  %vm16 = vcmask 261120
  %v17 = vsel %vm16, %v14, 0.0
  %18 = vadd.xlane.f32.xlu0 %v17
  %v19 = vpop.xlane.xlu0 %18
  %v20 = vsel %vm16, %v15, 0.0
  %21 = vadd.xlane.f32.xlu0 %v20
  %v22 = vpop.xlane.xlu0 %21
  %v23 = vrcp.pop 32.0
  %v24 = vmul.f32 %v19, %v23
  %v25 = vmul.f32 %v22, %v23
  %v26 = vsub.f32 %v14, %v24
  %v27 = vsub.f32 %v15, %v25
  %v28 = vmul.f32 %v26, %v26
  %v29 = vmul.f32 %v27, %v27
  %v30 = vsel %vm16, %v28, 0.0
  %31 = vadd.xlane.f32.xlu0 %v30
  %v32 = vpop.xlane.xlu0 %31
  %v33 = vsel %vm16, %v29, 0.0
  %34 = vadd.xlane.f32.xlu0 %v33
  %v35 = vpop.xlane.xlu0 %34
  %v36 = vmul.f32 %v32, %v23
  %v37 = vmul.f32 %v35, %v23
  %v38 = vadd.f32 %v36, 1e-12
  %v39 = vadd.f32 %v37, 1e-12
  %v40 = vrsqrt.pop %v38
  %v41 = vrsqrt.pop %v39
  %v42 = vmul.f32 %v26, %v40
  %v43 = vmul.f32 %v27, %v41
  %v44 = vld [vmem:[%s1] sm:$0x1]
  %v46 = vlaneseq
  %v47 = vshrl.u32 %v46, 7
  %v48 = vsub.s32 0, %v47
  %v49 = vrot.slane %v44, %v48
  %v51 = vmul.f32 %v42, %v49
  %v52 = vmul.f32 %v43, %v49
  %v53 = vld [vmem:[%s2] sm:$0x1]
  %v55 = vlaneseq
  %v56 = vshrl.u32 %v55, 7
  %v57 = vsub.s32 0, %v56
  %v58 = vrot.slane %v53, %v57
  %v60 = vadd.f32 %v51, %v58
  %v61 = vadd.f32 %v52, %v58
  %62 = vst.msk [vmem:[%s3] sm:$0xff] %vm16, %v60
  %63 = vst.msk [vmem:[%s3 + $0x8] sm:$0xff] %vm16, %v61
  // Predicated region
  $region14: #{bert_crf_forward.13} parent=0 // pred_check
    _
  $region15: #{bert_crf_forward.13} parent=0 // pred_check_branch
    %65 = sbr.rel (0) target = $region17
  $region16: #{bert_crf_forward.13} parent=0 // pred_region
    _
  $region17: #{bert_crf_forward.13} parent=0 // pred_fallthru
    _
  // Predicated region
  $region18: #{bert_crf_forward.13} parent=0 // pred_check
    _
  $region19: #{bert_crf_forward.13} parent=0 // pred_check_branch
    %67 = sbr.rel (0) target = $region21
  $region20: #{bert_crf_forward.13} parent=0 // pred_region
    _
  $region21: #{bert_crf_forward.13} parent=0 // pred_fallthru
    _

// kernel: bert_crf_forward.15
$region0: #{bert_crf_forward.15}
  #allocation0 [shape = 'u32[]', space=smem, size = 0x4, offset = 0x4, fixed_abs, tag = 'smem constant byte address 0x4 - core index']
  #allocation1 [shape = 'u32[144,128]{1,0:T(1,128)}', space=vmem, size = 0x12000, scoped, tag = 'internal scratch']
  #allocation2 [shape = 'f32[8,1]{1,0:T(8,128)}', space=vmem, size = 0x1000, scoped, tag = 'scratch operand']
  #allocation3 [shape = 'f32[8,1]{1,0:T(8,128)}', space=vmem, size = 0x1000, scoped, tag = 'scratch operand']
  #allocation4 [shape = 'f32[8,16]{1,0:T(8,128)}', space=vmem, size = 0x1000, scoped, tag = 'scratch operand']
  %s0 = inlined_call_operand.vmem [shape: bf16[2,2,8,16], index: 0, kind: input, shape index: {}]
  %s1 = inlined_call_operand.vmem [shape: bf16[2,2,8,16], index: 1, kind: input, shape index: {}]
  %s2 = inlined_call_operand.vmem [shape: bf16[2,2,8,16], index: 2, kind: input, shape index: {}]
  %s3 = inlined_call_operand.vmem [shape: f32[2,1,8], index: 3, kind: input, shape index: {}]
  %s4 = inlined_call_operand.vmem [shape: bf16[2,2,8,16], index: 4, kind: output, shape index: {}]
  %s5 = sld [smem:[#allocation0]]
  $region57: #{bert_crf_forward.15} parent=0
    _
  %s7 = ssub.s32 1, %s5
  %s8 = scalar_select 0, %s7, %s5
  loop: start=0, step=1, limit=6
  $region2: #{bert_crf_forward.15} parent=0 // loop_pre_header
    _
  $region3: #{bert_crf_forward.15} parent=0 // loop_header
    %s10 = sphi 0, %s14
    %p11 = scmp.ge.s32.totalorder %s10, 6
    %s17 = sphi 0, %s43
    %s18 = sphi 0, %s39
    %s19 = sphi 0, %s35
    %s20 = sphi 0, %s31
    %s21 = sphi 0, %s17
    %s22 = sphi 0, %s18
    %s23 = sphi 0, %s19
    %s24 = sphi 0, %s20
    %s25 = sphi 0, %s21
    %s26 = sphi 0, %s22
    %s27 = sphi 0, %s23
    %s28 = sphi 0, %s24
    %s50 = sphi 0, %s52
    %s53 = sphi 0, %s50
    %s54 = sphi 0, %s53
    %s70 = sphi 0, %s54
    %s80 = sphi 0, %s82
    %s83 = sphi 0, %s80
    %s84 = sphi 0, %s83
    %s100 = sphi 0, %s84
    %s110 = sphi 0, %s112
    %s113 = sphi 0, %s110
    %s114 = sphi 0, %s113
    %s130 = sphi 0, %s114
    %s138 = sphi 0, %s140
    %s141 = sphi 0, %s138
    %s142 = sphi 0, %s141
    %s158 = sphi 0, %s142
    %s168 = sphi 0, %s170
    %s171 = sphi 0, %s168
    %s172 = sphi 0, %s171
    %s188 = sphi 0, %s172
  $region4: #{bert_crf_forward.15} parent=0 // loop_header_branch
    %13 = sbr.rel (%p11) target = $region8
  $region5: #{bert_crf_forward.15} parent=0 // loop_body
    %s15 = ssub.s32 %s10, 1
    %s16 = ssub.s32 %s10, 2
    %s29 = sadd.s32 1, %s20
    %p30 = scmp.ge.s32.totalorder %s29, 1
    %s31 = scalar_select %p30, 0, %s29
    %s32 = sadd.s32 1, %s19
    %s33 = scalar_select %p30, %s32, %s19
    %p34 = scmp.ge.s32.totalorder %s33, 1
    %s35 = scalar_select %p34, 0, %s33
    %s36 = sadd.s32 1, %s18
    %s37 = scalar_select %p34, %s36, %s18
    %p38 = scmp.ge.s32.totalorder %s37, 2
    %s39 = scalar_select %p38, 0, %s37
    %s40 = sadd.s32 1, %s17
    %s41 = scalar_select %p38, %s40, %s17
    %p42 = scmp.ge.s32.totalorder %s41, 2
    %s43 = scalar_select %p42, 0, %s41
    %s44 = ssub.s32 %s17, %s43
    %s45 = ssub.s32 %s18, %s39
    %s46 = sor.u32 %s44, %s45
    %s47 = ssub.s32 %s19, %s35
    %s48 = sor.u32 %s46, %s47
    %p49 = scmp.eq.s32.totalorder %s48, 0
    %s51 = sadd.s32 %s50, 1
    %s52 = scalar_select %p49, %s50, %s51
    %p55 = pneg %p49
    %p56 = scmp.eq.s32.totalorder %s10, 3
    %p57 = por %p55, %p56
    %p58 = scmp.ne.s32.totalorder %s50, %s53
    %p59 = scmp.eq.s32.totalorder %s10, 0
    %p60 = por %p58, %p59
    %p61 = scmp.ne.s32.totalorder %s50, %s53
    %p62 = scmp.eq.s32.totalorder %s15, 3
    %p63 = por %p61, %p62
    %p64 = scmp.ne.s32.totalorder %s53, %s54
    %p65 = scmp.eq.s32.totalorder %s15, 0
    %p66 = por %p64, %p65
    %p67 = scmp.ne.s32.totalorder %s53, %s54
    %p68 = scmp.eq.s32.totalorder %s16, 3
    %p69 = por %p67, %p68
    %p71 = scmp.ne.s32.totalorder %s54, %s70
    %p72 = scmp.eq.s32.totalorder %s16, 0
    %p73 = por %p71, %p72
    %s74 = ssub.s32 %s17, %s43
    %s75 = ssub.s32 %s18, %s39
    %s76 = sor.u32 %s74, %s75
    %s77 = ssub.s32 %s20, %s31
    %s78 = sor.u32 %s76, %s77
    %p79 = scmp.eq.s32.totalorder %s78, 0
    %s81 = sadd.s32 %s80, 1
    %s82 = scalar_select %p79, %s80, %s81
    %p85 = pneg %p79
    %p86 = scmp.eq.s32.totalorder %s10, 3
    %p87 = por %p85, %p86
    %p88 = scmp.ne.s32.totalorder %s80, %s83
    %p89 = scmp.eq.s32.totalorder %s10, 0
    %p90 = por %p88, %p89
    %p91 = scmp.ne.s32.totalorder %s80, %s83
    %p92 = scmp.eq.s32.totalorder %s15, 3
    %p93 = por %p91, %p92
    %p94 = scmp.ne.s32.totalorder %s83, %s84
    %p95 = scmp.eq.s32.totalorder %s15, 0
    %p96 = por %p94, %p95
    %p97 = scmp.ne.s32.totalorder %s83, %s84
    %p98 = scmp.eq.s32.totalorder %s16, 3
    %p99 = por %p97, %p98
    %p101 = scmp.ne.s32.totalorder %s84, %s100
    %p102 = scmp.eq.s32.totalorder %s16, 0
    %p103 = por %p101, %p102
    %s104 = ssub.s32 %s17, %s43
    %s105 = ssub.s32 %s18, %s39
    %s106 = sor.u32 %s104, %s105
    %s107 = ssub.s32 %s20, %s31
    %s108 = sor.u32 %s106, %s107
    %p109 = scmp.eq.s32.totalorder %s108, 0
    %s111 = sadd.s32 %s110, 1
    %s112 = scalar_select %p109, %s110, %s111
    %p115 = pneg %p109
    %p116 = scmp.eq.s32.totalorder %s10, 3
    %p117 = por %p115, %p116
    %p118 = scmp.ne.s32.totalorder %s110, %s113
    %p119 = scmp.eq.s32.totalorder %s10, 0
    %p120 = por %p118, %p119
    %p121 = scmp.ne.s32.totalorder %s110, %s113
    %p122 = scmp.eq.s32.totalorder %s15, 3
    %p123 = por %p121, %p122
    %p124 = scmp.ne.s32.totalorder %s113, %s114
    %p125 = scmp.eq.s32.totalorder %s15, 0
    %p126 = por %p124, %p125
    %p127 = scmp.ne.s32.totalorder %s113, %s114
    %p128 = scmp.eq.s32.totalorder %s16, 3
    %p129 = por %p127, %p128
    %p131 = scmp.ne.s32.totalorder %s114, %s130
    %p132 = scmp.eq.s32.totalorder %s16, 0
    %p133 = por %p131, %p132
    %s134 = ssub.s32 %s17, %s43
    %s135 = ssub.s32 %s20, %s31
    %s136 = sor.u32 %s134, %s135
    %p137 = scmp.eq.s32.totalorder %s136, 0
    %s139 = sadd.s32 %s138, 1
    %s140 = scalar_select %p137, %s138, %s139
    %p143 = pneg %p137
    %p144 = scmp.eq.s32.totalorder %s10, 3
    %p145 = por %p143, %p144
    %p146 = scmp.ne.s32.totalorder %s138, %s141
    %p147 = scmp.eq.s32.totalorder %s10, 0
    %p148 = por %p146, %p147
    %p149 = scmp.ne.s32.totalorder %s138, %s141
    %p150 = scmp.eq.s32.totalorder %s15, 3
    %p151 = por %p149, %p150
    %p152 = scmp.ne.s32.totalorder %s141, %s142
    %p153 = scmp.eq.s32.totalorder %s15, 0
    %p154 = por %p152, %p153
    %p155 = scmp.ne.s32.totalorder %s141, %s142
    %p156 = scmp.eq.s32.totalorder %s16, 3
    %p157 = por %p155, %p156
    %p159 = scmp.ne.s32.totalorder %s142, %s158
    %p160 = scmp.eq.s32.totalorder %s16, 0
    %p161 = por %p159, %p160
    %s162 = ssub.s32 %s17, %s43
    %s163 = ssub.s32 %s18, %s39
    %s164 = sor.u32 %s162, %s163
    %s165 = ssub.s32 %s19, %s35
    %s166 = sor.u32 %s164, %s165
    %p167 = scmp.eq.s32.totalorder %s166, 0
    %s169 = sadd.s32 %s168, 1
    %s170 = scalar_select %p167, %s168, %s169
    %p173 = pneg %p167
    %p174 = scmp.eq.s32.totalorder %s10, 3
    %p175 = por %p173, %p174
    %p176 = scmp.ne.s32.totalorder %s168, %s171
    %p177 = scmp.eq.s32.totalorder %s10, 0
    %p178 = por %p176, %p177
    %p179 = scmp.ne.s32.totalorder %s168, %s171
    %p180 = scmp.eq.s32.totalorder %s15, 3
    %p181 = por %p179, %p180
    %p182 = scmp.ne.s32.totalorder %s171, %s172
    %p183 = scmp.eq.s32.totalorder %s15, 0
    %p184 = por %p182, %p183
    %p185 = scmp.ne.s32.totalorder %s171, %s172
    %p186 = scmp.eq.s32.totalorder %s16, 3
    %p187 = por %p185, %p186
    %p189 = scmp.ne.s32.totalorder %s172, %s188
    %p190 = scmp.eq.s32.totalorder %s16, 0
    %p191 = por %p189, %p190
    %p192 = scmp.le.s32.totalorder 1, %s10
    %p193 = scmp.lt.s32.totalorder %s10, 5
    %p194 = pnand %p192, %p193
    %p195 = pneg %p194
    // Predicated region
    $region9: #{bert_crf_forward.15} parent=5 // pred_check
      _
    $region10: #{bert_crf_forward.15} parent=5 // pred_check_branch
      %197 = sbr.rel (%p194) target = $region12
    $region11: #{bert_crf_forward.15} parent=5 // pred_region
      %s198 = ssub.s32 %s10, 1
    $region12: #{bert_crf_forward.15} parent=5 // pred_fallthru
      _
    %p199 = scmp.lt.s32.totalorder %s10, 4
    // Predicated region
    $region13: #{bert_crf_forward.15} parent=5 // pred_check
      %p200 = pneg %p199
    $region14: #{bert_crf_forward.15} parent=5 // pred_check_branch
      %202 = sbr.rel (%p200) target = $region16
    $region15: #{bert_crf_forward.15} parent=5 // pred_region
      // Predicated region
      $region17: #{bert_crf_forward.15} parent=15 // pred_check
        %p203 = pneg %p60
      $region18: #{bert_crf_forward.15} parent=15 // pred_check_branch
        %205 = sbr.rel (%p203) target = $region20
      $region19: #{bert_crf_forward.15} parent=15 // pred_region
        %p206 = scmp.lt.s32.totalorder %s17, 1
        %s207 = scalar_select %p206, %s17, 1
        %p208 = scmp.lt.s32.totalorder %s18, 1
        %s209 = scalar_select %p208, %s18, 1
        %p210 = scmp.lt.s32.totalorder %s19, 0
        %s211 = scalar_select %p210, %s19, 0
        %s212 = sadd.s32 %s211, %s209
        %s213 = smul.addr %s207, 2
        %s214 = sadd.s32 %s212, %s213
        %s215 = smul.addr %s214, 4
        %s216 = scalar_lea.vmem %s0, %s215
      $region20: #{bert_crf_forward.15} parent=15 // pred_fallthru
        _
      // Predicated region
      $region21: #{bert_crf_forward.15} parent=15 // pred_check
        %p217 = pneg %p90
      $region22: #{bert_crf_forward.15} parent=15 // pred_check_branch
        %219 = sbr.rel (%p217) target = $region24
      $region23: #{bert_crf_forward.15} parent=15 // pred_region
        %p220 = scmp.lt.s32.totalorder %s17, 1
        %s221 = scalar_select %p220, %s17, 1
        %p222 = scmp.lt.s32.totalorder %s18, 1
        %s223 = scalar_select %p222, %s18, 1
        %p224 = scmp.lt.s32.totalorder %s20, 0
        %s225 = scalar_select %p224, %s20, 0
        %s226 = sadd.s32 %s225, %s223
        %s227 = smul.addr %s221, 2
        %s228 = sadd.s32 %s226, %s227
        %s229 = smul.addr %s228, 4
        %s230 = scalar_lea.vmem %s1, %s229
      $region24: #{bert_crf_forward.15} parent=15 // pred_fallthru
        _
      // Predicated region
      $region25: #{bert_crf_forward.15} parent=15 // pred_check
        %p231 = pneg %p120
      $region26: #{bert_crf_forward.15} parent=15 // pred_check_branch
        %233 = sbr.rel (%p231) target = $region28
      $region27: #{bert_crf_forward.15} parent=15 // pred_region
        %p234 = scmp.lt.s32.totalorder %s17, 1
        %s235 = scalar_select %p234, %s17, 1
        %p236 = scmp.lt.s32.totalorder %s18, 1
        %s237 = scalar_select %p236, %s18, 1
        %p238 = scmp.lt.s32.totalorder %s20, 0
        %s239 = scalar_select %p238, %s20, 0
        %s240 = sadd.s32 %s239, %s237
        %s241 = smul.addr %s235, 2
        %s242 = sadd.s32 %s240, %s241
        %s243 = smul.addr %s242, 4
        %s244 = scalar_lea.vmem %s2, %s243
      $region28: #{bert_crf_forward.15} parent=15 // pred_fallthru
        _
      // Predicated region
      $region29: #{bert_crf_forward.15} parent=15 // pred_check
        %p245 = pneg %p148
      $region30: #{bert_crf_forward.15} parent=15 // pred_check_branch
        %247 = sbr.rel (%p245) target = $region32
      $region31: #{bert_crf_forward.15} parent=15 // pred_region
        %p248 = scmp.lt.s32.totalorder %s17, 1
        %s249 = scalar_select %p248, %s17, 1
        %p250 = scmp.lt.s32.totalorder %s20, 0
        %s251 = scalar_select %p250, %s20, 0
        %s252 = sadd.s32 %s251, %s249
        %s253 = scalar_lea.vmem %s3, %s252
      $region32: #{bert_crf_forward.15} parent=15 // pred_fallthru
        _
    $region16: #{bert_crf_forward.15} parent=5 // pred_fallthru
      _
    %p254 = scmp.le.s32.totalorder 1, %s10
    %p255 = scmp.lt.s32.totalorder %s10, 5
    %p256 = pnand %p254, %p255
    %p257 = pneg %p256
    // Predicated region
    $region33: #{bert_crf_forward.15} parent=5 // pred_check
      _
    $region34: #{bert_crf_forward.15} parent=5 // pred_check_branch
      %259 = sbr.rel (%p256) target = $region36
    $region35: #{bert_crf_forward.15} parent=5 // pred_region
      %s260 = ssub.s32 %s10, 1
      %p261 = scmp.lt.s32.totalorder %s21, 1
      %s262 = scalar_select %p261, %s21, 1
      %p263 = scmp.lt.s32.totalorder %s22, 1
      %s264 = scalar_select %p263, %s22, 1
      %p265 = scmp.lt.s32.totalorder %s23, 0
      %s266 = scalar_select %p265, %s23, 0
      %s267 = sadd.s32 %s266, %s264
      %s268 = smul.addr %s262, 2
      %s269 = sadd.s32 %s267, %s268
      %s270 = smul.addr %s269, 4
      %s271 = scalar_lea.vmem %s0, %s270
      %p272 = pneg %p66
      %p273 = pneg %p63
      %p274 = scmp.lt.s32.totalorder %s21, 1
      %s275 = scalar_select %p274, %s21, 1
      %p276 = scmp.lt.s32.totalorder %s22, 1
      %s277 = scalar_select %p276, %s22, 1
      %p278 = scmp.lt.s32.totalorder %s24, 0
      %s279 = scalar_select %p278, %s24, 0
      %s280 = sadd.s32 %s279, %s277
      %s281 = smul.addr %s275, 2
      %s282 = sadd.s32 %s280, %s281
      %s283 = smul.addr %s282, 4
      %s284 = scalar_lea.vmem %s1, %s283
      %p285 = pneg %p96
      %p286 = pneg %p93
      %p287 = scmp.lt.s32.totalorder %s21, 1
      %s288 = scalar_select %p287, %s21, 1
      %p289 = scmp.lt.s32.totalorder %s22, 1
      %s290 = scalar_select %p289, %s22, 1
      %p291 = scmp.lt.s32.totalorder %s24, 0
      %s292 = scalar_select %p291, %s24, 0
      %s293 = sadd.s32 %s292, %s290
      %s294 = smul.addr %s288, 2
      %s295 = sadd.s32 %s293, %s294
      %s296 = smul.addr %s295, 4
      %s297 = scalar_lea.vmem %s2, %s296
      %p298 = pneg %p126
      %p299 = pneg %p123
      %p300 = scmp.lt.s32.totalorder %s21, 1
      %s301 = scalar_select %p300, %s21, 1
      %p302 = scmp.lt.s32.totalorder %s24, 0
      %s303 = scalar_select %p302, %s24, 0
      %s304 = sadd.s32 %s303, %s301
      %s305 = scalar_lea.vmem %s3, %s304
      %p306 = pneg %p154
      %p307 = pneg %p151
      %p308 = pneg %p184
      %p309 = pneg %p181
      %p310 = scmp.lt.s32.totalorder %s21, 1
      %s311 = scalar_select %p310, %s21, 1
      %p312 = scmp.lt.s32.totalorder %s22, 1
      %s313 = scalar_select %p312, %s22, 1
      %p314 = scmp.lt.s32.totalorder %s23, 0
      %s315 = scalar_select %p314, %s23, 0
      %s316 = sadd.s32 %s315, %s313
      %s317 = smul.addr %s311, 2
      %s318 = sadd.s32 %s316, %s317
      %s319 = smul.addr %s318, 4
      %s320 = scalar_lea.vmem %s4, %s319
      %p321 = scmp.lt.s32.totalorder %s21, 1
      %s322 = scalar_select %p321, %s21, 1
      %p323 = scmp.lt.s32.totalorder %s22, 1
      %s324 = scalar_select %p323, %s22, 1
      %p325 = scmp.lt.s32.totalorder %s23, 0
      %s326 = scalar_select %p325, %s23, 0
      %s327 = sadd.s32 %s326, %s324
      %s328 = smul.addr %s322, 2
      %s329 = sadd.s32 %s327, %s328
      %s330 = smul.addr %s329, 4
      %s331 = scalar_lea.vmem %s0, %s330
      %p332 = scmp.lt.s32.totalorder %s21, 1
      %s333 = scalar_select %p332, %s21, 1
      %p334 = scmp.lt.s32.totalorder %s22, 1
      %s335 = scalar_select %p334, %s22, 1
      %p336 = scmp.lt.s32.totalorder %s24, 0
      %s337 = scalar_select %p336, %s24, 0
      %s338 = sadd.s32 %s337, %s335
      %s339 = smul.addr %s333, 2
      %s340 = sadd.s32 %s338, %s339
      %s341 = smul.addr %s340, 4
      %s342 = scalar_lea.vmem %s1, %s341
      %p343 = scmp.lt.s32.totalorder %s21, 1
      %s344 = scalar_select %p343, %s21, 1
      %p345 = scmp.lt.s32.totalorder %s22, 1
      %s346 = scalar_select %p345, %s22, 1
      %p347 = scmp.lt.s32.totalorder %s24, 0
      %s348 = scalar_select %p347, %s24, 0
      %s349 = sadd.s32 %s348, %s346
      %s350 = smul.addr %s344, 2
      %s351 = sadd.s32 %s349, %s350
      %s352 = smul.addr %s351, 4
      %s353 = scalar_lea.vmem %s2, %s352
      %p354 = scmp.lt.s32.totalorder %s21, 1
      %s355 = scalar_select %p354, %s21, 1
      %p356 = scmp.lt.s32.totalorder %s24, 0
      %s357 = scalar_select %p356, %s24, 0
      %s358 = sadd.s32 %s357, %s355
      %s359 = scalar_lea.vmem %s3, %s358
      %p360 = scmp.lt.s32.totalorder %s21, 1
      %s361 = scalar_select %p360, %s21, 1
      %p362 = scmp.lt.s32.totalorder %s22, 1
      %s363 = scalar_select %p362, %s22, 1
      %p364 = scmp.lt.s32.totalorder %s23, 0
      %s365 = scalar_select %p364, %s23, 0
      %s366 = sadd.s32 %s365, %s363
      %s367 = smul.addr %s361, 2
      %s368 = sadd.s32 %s366, %s367
      %s369 = smul.addr %s368, 4
      %s370 = scalar_lea.vmem %s4, %s369
      %p372 = scmp.eq.s32.totalorder %s24, 0
      // Predicated region
      $region37: #{bert_crf_forward.15} parent=35 // pred_check
        %p373 = pneg %p372
      $region38: #{bert_crf_forward.15} parent=35 // pred_check_branch
        %375 = sbr.rel (%p373) target = $region40
      $region39: #{bert_crf_forward.15} parent=35 // pred_region
        %vm376 = vcmask 7168
        %377 = vst.msk [vmem:[#allocation2] sm:$0xff] %vm376, -inf
        %378 = vst.msk [vmem:[#allocation3] sm:$0xff] %vm376, 0.0
        %vm379 = vcmask 130048
        %380 = vst.msk [vmem:[#allocation4] sm:$0xff] %vm379, 0.0
      $region40: #{bert_crf_forward.15} parent=35 // pred_fallthru
        _
      %v381 = vld [vmem:[%s331] sm:$0xf]
      %v382 = vld [vmem:[%s342] sm:$0xf]
      %v383 = vld [vmem:[%s353] sm:$0xf]
      %vm384 = vcmask 130048
      %v386 = vsel %vm384, %v381, 0
      %v389 = vsel %vm384, %v382, 0
      %391 = vmatprep.subr.bf16.mxu0 0
      %392 = vmatpush1.bf16.xpose.msra.mxu0 %v389
      %393 = vmatprep.subr.bf16.mxu0 0
      %394 = vmatpush1.bf16.xpose.msra.mxu0 0
      %395 = vmatprep.subr.bf16.mxu0 0
      %396 = vmatpush1.bf16.xpose.msra.mxu0 0
      %397 = vmatprep.subr.bf16.mxu0 0
      %398 = vmatpush1.bf16.xpose.msra.mxu0 0
      %399 = vmatprep.subr.bf16.mxu0 0
      %400 = vmatpush1.bf16.xpose.msra.mxu0 0
      %401 = vmatprep.subr.bf16.mxu0 0
      %402 = vmatpush1.bf16.xpose.msra.mxu0 0
      %403 = vmatprep.subr.bf16.mxu0 0
      %404 = vmatpush1.bf16.xpose.msra.mxu0 0
      %405 = vmatprep.subr.bf16.mxu0 0
      %406 = vmatpush1.bf16.xpose.msra.mxu0 0
      %407 = vmatprep.subr.bf16.mxu0 0
      %408 = vmatpush1.bf16.xpose.msra.mxu0 0
      %409 = vmatprep.subr.bf16.mxu0 0
      %410 = vmatpush1.bf16.xpose.msra.mxu0 0
      %411 = vmatprep.subr.bf16.mxu0 0
      %412 = vmatpush1.bf16.xpose.msra.mxu0 0
      %413 = vmatprep.subr.bf16.mxu0 0
      %414 = vmatpush1.bf16.xpose.msra.mxu0 0
      %415 = vmatprep.subr.bf16.mxu0 0
      %416 = vmatpush1.bf16.xpose.msra.mxu0 0
      %417 = vmatprep.subr.bf16.mxu0 0
      %418 = vmatpush1.bf16.xpose.msra.mxu0 0
      %419 = vmatprep.subr.bf16.mxu0 0
      %420 = vmatpush1.bf16.xpose.msra.mxu0 0
      %421 = vmatprep.subr.bf16.mxu0 0
      %422 = vmatpush1.bf16.xpose.msra.mxu0 0
      %423 = vmatprep.mubr.bf16.mxu0 0
      %424 = vmatmul.mubr.bf16.gmra.mrb[0].mxu0 %v386
      %v425 = vpop.f32.mrb[0].mxu0
      %v426 = vadd.f32 0.0, %v425
      %v427 = vpop.f32.mrb[0].mxu0
      %v428 = vpop.f32.mrb[0].mxu0
      %v429 = vpop.f32.mrb[0].mxu0
      %430 = vdwg.mxu0
      %v431 = vmul.f32 %v426, 0.25
      %v432 = vld [vmem:[%s359] sm:$0x1]
      %v434 = vlaneseq
      %v435 = vshrl.u32 %v434, 7
      %v436 = vsub.s32 0, %v435
      %v437 = vrot.slane %v432, %v436
      %v439 = vadd.f32 %v431, %v437
      %v440 = vld [vmem:[#allocation2] sm:$0xff]
      %vm441 = vcmask 64512
      %v442 = vsel %vm441, %v439, -inf
      %443 = vmax.xlane.f32.xlu0 %v442
      %v444 = vpop.xlane.xlu0 %443
      %v445 = vmax.f32 %v440, %v444
      %v446 = vsub.f32 %v440, %v445
      %v447 = vmul.f32 %v446, 1.442695
      %v448 = vpow.pop %v447
      %450 = vset.pattern.permute.xlu0 0
      %451 = vperm.xlu0 %450, %v445
      %v452 = vpop.permute.xlu0 %451
      %v454 = vsub.f32 %v439, %v452
      %v455 = vmul.f32 %v454, 1.442695
      %v456 = vpow.pop %v455
      %v457 = vld [vmem:[#allocation3] sm:$0xff]
      %v458 = vmul.f32 %v448, %v457
      %v459 = vsel %vm441, %v456, 0.0
      %460 = vadd.xlane.f32.xlu0 %v459
      %v461 = vpop.xlane.xlu0 %460
      %v462 = vadd.f32 %v458, %v461
      %vm463 = vcmask 7168
      %464 = vst.msk [vmem:[#allocation3] sm:$0xff] %vm463, %v462
      %v465 = vld [vmem:[#allocation4] sm:$0xff]
      %467 = vset.pattern.permute.xlu0 0
      %468 = vperm.xlu0 %467, %v448
      %v469 = vpop.permute.xlu0 %468
      %v471 = vmul.f32 %v469, %v465
      %v472 = vpack.c.bf16 %v456, %v456
      %v474 = vsel %vm441, %v472, 0
      %vm476 = vcmask 1043456
      %v478 = vsel %vm476, %v383, 0
      %480 = vmatprep.subr.bf16.mxu0 0
      %481 = vmatpush1.bf16.msra.mxu0 %v478
      %482 = vmatprep.subr.bf16.mxu0 0
      %483 = vmatpush1.bf16.msra.mxu0 0
      %484 = vmatprep.subr.bf16.mxu0 0
      %485 = vmatpush1.bf16.msra.mxu0 0
      %486 = vmatprep.subr.bf16.mxu0 0
      %487 = vmatpush1.bf16.msra.mxu0 0
      %488 = vmatprep.subr.bf16.mxu0 0
      %489 = vmatpush1.bf16.msra.mxu0 0
      %490 = vmatprep.subr.bf16.mxu0 0
      %491 = vmatpush1.bf16.msra.mxu0 0
      %492 = vmatprep.subr.bf16.mxu0 0
      %493 = vmatpush1.bf16.msra.mxu0 0
      %494 = vmatprep.subr.bf16.mxu0 0
      %495 = vmatpush1.bf16.msra.mxu0 0
      %496 = vmatprep.subr.bf16.mxu0 0
      %497 = vmatpush1.bf16.msra.mxu0 0
      %498 = vmatprep.subr.bf16.mxu0 0
      %499 = vmatpush1.bf16.msra.mxu0 0
      %500 = vmatprep.subr.bf16.mxu0 0
      %501 = vmatpush1.bf16.msra.mxu0 0
      %502 = vmatprep.subr.bf16.mxu0 0
      %503 = vmatpush1.bf16.msra.mxu0 0
      %504 = vmatprep.subr.bf16.mxu0 0
      %505 = vmatpush1.bf16.msra.mxu0 0
      %506 = vmatprep.subr.bf16.mxu0 0
      %507 = vmatpush1.bf16.msra.mxu0 0
      %508 = vmatprep.subr.bf16.mxu0 0
      %509 = vmatpush1.bf16.msra.mxu0 0
      %510 = vmatprep.subr.bf16.mxu0 0
      %511 = vmatpush1.bf16.msra.mxu0 0
      %512 = vmatprep.mubr.bf16.mxu0 0
      %513 = vmatmul.mubr.bf16.gmra.mrb[0].mxu0 %v474
      %v514 = vpop.f32.mrb[0].mxu0
      %v515 = vadd.f32 0.0, %v514
      %v516 = vpop.f32.mrb[0].mxu0
      %v517 = vpop.f32.mrb[0].mxu0
      %v518 = vpop.f32.mrb[0].mxu0
      %519 = vdwg.mxu0
      %v520 = vadd.f32 %v471, %v515
      %521 = vst.msk [vmem:[#allocation4] sm:$0xff] %vm384, %v520
      %522 = vst.msk [vmem:[#allocation2] sm:$0xff] %vm463, %v445
      // Predicated region
      $region41: #{bert_crf_forward.15} parent=35 // pred_check
        %p523 = pneg %p372
      $region42: #{bert_crf_forward.15} parent=35 // pred_check_branch
        %525 = sbr.rel (%p523) target = $region44
      $region43: #{bert_crf_forward.15} parent=35 // pred_region
        %v526 = vld [vmem:[#allocation3] sm:$0xff]
        %v527 = vrcp.pop %v526
        %v528 = vld [vmem:[#allocation4] sm:$0xff]
        %530 = vset.pattern.permute.xlu0 0
        %531 = vperm.xlu0 %530, %v527
        %v532 = vpop.permute.xlu0 %531
        %v534 = vmul.f32 %v528, %v532
        %v535 = vpack.c.bf16 %v534, %v534
        %vm536 = vcmask 125952
        %537 = vst.msk [vmem:[%s370] sm:$0xf] %vm536, %v535
      $region44: #{bert_crf_forward.15} parent=35 // pred_fallthru
        _
      %p538 = scmp.lt.s32.totalorder %s21, 1
      %s539 = scalar_select %p538, %s21, 1
      %p540 = scmp.lt.s32.totalorder %s22, 1
      %s541 = scalar_select %p540, %s22, 1
      %p542 = scmp.lt.s32.totalorder %s23, 0
      %s543 = scalar_select %p542, %s23, 0
      %s544 = sadd.s32 %s543, %s541
      %s545 = smul.addr %s539, 2
      %s546 = sadd.s32 %s544, %s545
      %s547 = smul.addr %s546, 4
      %s548 = scalar_lea.vmem %s4, %s547
      // Predicated region
      $region45: #{bert_crf_forward.15} parent=35 // pred_check
        %p549 = pneg %p181
      $region46: #{bert_crf_forward.15} parent=35 // pred_check_branch
        %551 = sbr.rel (%p549) target = $region48
      $region47: #{bert_crf_forward.15} parent=35 // pred_region
        _
      $region48: #{bert_crf_forward.15} parent=35 // pred_fallthru
        _
    $region36: #{bert_crf_forward.15} parent=5 // pred_fallthru
      _
    %p552 = scmp.le.s32.totalorder 2, %s10
    // Predicated region
    $region49: #{bert_crf_forward.15} parent=5 // pred_check
      %p553 = pneg %p552
    $region50: #{bert_crf_forward.15} parent=5 // pred_check_branch
      %555 = sbr.rel (%p553) target = $region52
    $region51: #{bert_crf_forward.15} parent=5 // pred_region
      %s556 = ssub.s32 %s10, 2
      // Predicated region
      $region53: #{bert_crf_forward.15} parent=51 // pred_check
        %p557 = pneg %p187
      $region54: #{bert_crf_forward.15} parent=51 // pred_check_branch
        %559 = sbr.rel (%p557) target = $region56
      $region55: #{bert_crf_forward.15} parent=51 // pred_region
        %p560 = scmp.lt.s32.totalorder %s25, 1
        %s561 = scalar_select %p560, %s25, 1
        %p562 = scmp.lt.s32.totalorder %s26, 1
        %s563 = scalar_select %p562, %s26, 1
        %p564 = scmp.lt.s32.totalorder %s27, 0
        %s565 = scalar_select %p564, %s27, 0
        %s566 = sadd.s32 %s565, %s563
        %s567 = smul.addr %s561, 2
        %s568 = sadd.s32 %s566, %s567
        %s569 = smul.addr %s568, 4
        %s570 = scalar_lea.vmem %s4, %s569
      $region56: #{bert_crf_forward.15} parent=51 // pred_fallthru
        _
    $region52: #{bert_crf_forward.15} parent=5 // pred_fallthru
      _
  $region6: #{bert_crf_forward.15} parent=0 // loop_footer
    %s14 = sadd.s32 1, %s10
  $region7: #{bert_crf_forward.15} parent=0 // loop_footer_branch
    %9 = sbr.rel target = $region3
  $region8: #{bert_crf_forward.15} parent=0 // loop_exit
    _

// kernel: bert_crf_forward.16
$region0: #{bert_crf_forward.16}
  #allocation0 [shape = 'u32[]', space=smem, size = 0x4, offset = 0x4, fixed_abs, tag = 'smem constant byte address 0x4 - core index']
  #allocation1 [shape = 'u32[144,128]{1,0:T(1,128)}', space=vmem, size = 0x12000, scoped, tag = 'internal scratch']
  #allocation2 [shape = 'f32[16,32]{1,0:T(8,128)}', space=vmem, size = 0x2000, scoped, tag = 'scratch operand']
  %s0 = inlined_call_operand.vmem [shape: bf16[16,32], index: 0, kind: input, shape index: {}]
  %s1 = inlined_call_operand.vmem [shape: bf16[32,32], index: 1, kind: input, shape index: {}]
  %s2 = inlined_call_operand.vmem [shape: f32[1,32], index: 2, kind: input, shape index: {}]
  %s3 = inlined_call_operand.vmem [shape: f32[16,32], index: 3, kind: input, shape index: {}]
  %s4 = inlined_call_operand.vmem [shape: f32[1,32], index: 4, kind: input, shape index: {}]
  %s5 = inlined_call_operand.vmem [shape: f32[1,32], index: 5, kind: input, shape index: {}]
  %s6 = inlined_call_operand.vmem [shape: f32[16,32], index: 6, kind: output, shape index: {}]
  %s7 = sld [smem:[#allocation0]]
  $region42: #{bert_crf_forward.16} parent=0
    _
  %s9 = ssub.s32 1, %s7
  %s10 = scalar_select 0, %s9, %s7
  // Predicated region
  $region2: #{bert_crf_forward.16} parent=0 // pred_check
    _
  $region3: #{bert_crf_forward.16} parent=0 // pred_check_branch
    %12 = sbr.rel (0) target = $region5
  $region4: #{bert_crf_forward.16} parent=0 // pred_region
    _
  $region5: #{bert_crf_forward.16} parent=0 // pred_fallthru
    _
  // Predicated region
  $region6: #{bert_crf_forward.16} parent=0 // pred_check
    _
  $region7: #{bert_crf_forward.16} parent=0 // pred_check_branch
    %14 = sbr.rel (0) target = $region9
  $region8: #{bert_crf_forward.16} parent=0 // pred_region
    _
  $region9: #{bert_crf_forward.16} parent=0 // pred_fallthru
    _
  // Predicated region
  $region10: #{bert_crf_forward.16} parent=0 // pred_check
    _
  $region11: #{bert_crf_forward.16} parent=0 // pred_check_branch
    %16 = sbr.rel (0) target = $region13
  $region12: #{bert_crf_forward.16} parent=0 // pred_region
    _
  $region13: #{bert_crf_forward.16} parent=0 // pred_fallthru
    _
  // Predicated region
  $region14: #{bert_crf_forward.16} parent=0 // pred_check
    _
  $region15: #{bert_crf_forward.16} parent=0 // pred_check_branch
    %18 = sbr.rel (0) target = $region17
  $region16: #{bert_crf_forward.16} parent=0 // pred_region
    _
  $region17: #{bert_crf_forward.16} parent=0 // pred_fallthru
    _
  // Predicated region
  $region18: #{bert_crf_forward.16} parent=0 // pred_check
    _
  $region19: #{bert_crf_forward.16} parent=0 // pred_check_branch
    %20 = sbr.rel (0) target = $region21
  $region20: #{bert_crf_forward.16} parent=0 // pred_region
    _
  $region21: #{bert_crf_forward.16} parent=0 // pred_fallthru
    _
  // Predicated region
  $region22: #{bert_crf_forward.16} parent=0 // pred_check
    _
  $region23: #{bert_crf_forward.16} parent=0 // pred_check_branch
    %22 = sbr.rel (0) target = $region25
  $region24: #{bert_crf_forward.16} parent=0 // pred_region
    _
  $region25: #{bert_crf_forward.16} parent=0 // pred_fallthru
    _
  %p24 = scmp.eq.s32.totalorder 0, 0
  // Predicated region
  $region26: #{bert_crf_forward.16} parent=0 // pred_check
    %p25 = pneg %p24
  $region27: #{bert_crf_forward.16} parent=0 // pred_check_branch
    %27 = sbr.rel (%p25) target = $region29
  $region28: #{bert_crf_forward.16} parent=0 // pred_region
    %vm28 = vcmask 261120
    %29 = vst.msk [vmem:[#allocation2] sm:$0xff] %vm28, 0.0
    %30 = vst.msk [vmem:[#allocation2 + $0x8] sm:$0xff] %vm28, 0.0
  $region29: #{bert_crf_forward.16} parent=0 // pred_fallthru
    _
  %v31 = vld [vmem:[#allocation2] sm:$0xff]
  %v32 = vld [vmem:[#allocation2 + $0x8] sm:$0xff]
  %v33 = vld [vmem:[%s0] sm:$0xf]
  %v34 = vld [vmem:[%s0 + $0x4] sm:$0xf]
  %v35 = vld [vmem:[%s1] sm:$0xf]
  %v36 = vld [vmem:[%s1 + $0x4] sm:$0xf]
  %v37 = vld [vmem:[%s1 + $0x8] sm:$0xf]
  %v38 = vld [vmem:[%s1 + $0xc] sm:$0xf]
  %v41 = vunpack.c.l.b16 %v33
  %v42 = vunpack.c.l.b16 %v34
  %v43 = vpack.c.b16 %v42, %v41
  %v48 = vunpack.c.l.b16 %v35
  %v49 = vunpack.c.l.b16 %v36
  %v50 = vunpack.c.l.b16 %v37
  %v51 = vunpack.c.l.b16 %v38
  %v52 = vpack.c.b16 %v49, %v48
  %v53 = vpack.c.b16 %v51, %v50
  %vm56 = vcmask 261120
  %v58 = vsel %vm56, %v43, 0
  %60 = vmatprep.subr.bf16.mxu0 0
  %61 = vmatpush1.bf16.msra.mxu0 %v52
  %62 = vmatprep.subr.bf16.mxu0 0
  %63 = vmatpush1.bf16.msra.mxu0 %v53
  %64 = vmatprep.subr.bf16.mxu0 0
  %65 = vmatpush1.bf16.msra.mxu0 0
  %66 = vmatprep.subr.bf16.mxu0 0
  %67 = vmatpush1.bf16.msra.mxu0 0
  %68 = vmatprep.subr.bf16.mxu0 0
  %69 = vmatpush1.bf16.msra.mxu0 0
  %70 = vmatprep.subr.bf16.mxu0 0
  %71 = vmatpush1.bf16.msra.mxu0 0
  %72 = vmatprep.subr.bf16.mxu0 0
  %73 = vmatpush1.bf16.msra.mxu0 0
  %74 = vmatprep.subr.bf16.mxu0 0
  %75 = vmatpush1.bf16.msra.mxu0 0
  %76 = vmatprep.subr.bf16.mxu0 0
  %77 = vmatpush1.bf16.msra.mxu0 0
  %78 = vmatprep.subr.bf16.mxu0 0
  %79 = vmatpush1.bf16.msra.mxu0 0
  %80 = vmatprep.subr.bf16.mxu0 0
  %81 = vmatpush1.bf16.msra.mxu0 0
  %82 = vmatprep.subr.bf16.mxu0 0
  %83 = vmatpush1.bf16.msra.mxu0 0
  %84 = vmatprep.subr.bf16.mxu0 0
  %85 = vmatpush1.bf16.msra.mxu0 0
  %86 = vmatprep.subr.bf16.mxu0 0
  %87 = vmatpush1.bf16.msra.mxu0 0
  %88 = vmatprep.subr.bf16.mxu0 0
  %89 = vmatpush1.bf16.msra.mxu0 0
  %90 = vmatprep.subr.bf16.mxu0 0
  %91 = vmatpush1.bf16.msra.mxu0 0
  %92 = vmatprep.mubr.bf16.mxu0 0
  %93 = vmatmul.mubr.bf16.gmra.mrb[0].mxu0 %v58
  %v94 = vpop.f32.mrb[0].mxu0
  %v95 = vadd.f32 0.0, %v94
  %v96 = vpop.f32.mrb[0].mxu0
  %v97 = vpop.f32.mrb[0].mxu0
  %v98 = vadd.f32 0.0, %v97
  %v99 = vpop.f32.mrb[0].mxu0
  %100 = vdwg.mxu0
  %v101 = vadd.f32 %v31, %v95
  %v102 = vadd.f32 %v32, %v98
  %103 = vst.msk [vmem:[#allocation2] sm:$0xff] %vm56, %v101
  %104 = vst.msk [vmem:[#allocation2 + $0x8] sm:$0xff] %vm56, %v102
  // Predicated region
  $region30: #{bert_crf_forward.16} parent=0 // pred_check
    %p105 = pneg %p24
  $region31: #{bert_crf_forward.16} parent=0 // pred_check_branch
    %107 = sbr.rel (%p105) target = $region33
  $region32: #{bert_crf_forward.16} parent=0 // pred_region
    %v108 = vld [vmem:[#allocation2] sm:$0xff]
    %v109 = vld [vmem:[#allocation2 + $0x8] sm:$0xff]
    %v110 = vld [vmem:[%s2] sm:$0x1]
    %v112 = vlaneseq
    %v113 = vshrl.u32 %v112, 7
    %v114 = vsub.s32 0, %v113
    %v115 = vrot.slane %v110, %v114
    %v117 = vadd.f32 %v108, %v115
    %v118 = vadd.f32 %v109, %v115
    %v119 = vld [vmem:[%s3] sm:$0xff]
    %v120 = vld [vmem:[%s3 + $0x8] sm:$0xff]
    %v121 = vadd.f32 %v117, %v119
    %v122 = vadd.f32 %v118, %v120
    %v123 = vsel %vm56, %v121, 0.0
    %124 = vadd.xlane.f32.xlu0 %v123
    %v125 = vpop.xlane.xlu0 %124
    %v126 = vsel %vm56, %v122, 0.0
    %127 = vadd.xlane.f32.xlu0 %v126
    %v128 = vpop.xlane.xlu0 %127
    %v129 = vrcp.pop 32.0
    %v130 = vmul.f32 %v125, %v129
    %v131 = vmul.f32 %v128, %v129
    %v132 = vsub.f32 %v121, %v130
    %v133 = vsub.f32 %v122, %v131
    %v134 = vmul.f32 %v132, %v132
    %v135 = vmul.f32 %v133, %v133
    %v136 = vsel %vm56, %v134, 0.0
    %137 = vadd.xlane.f32.xlu0 %v136
    %v138 = vpop.xlane.xlu0 %137
    %v139 = vsel %vm56, %v135, 0.0
    %140 = vadd.xlane.f32.xlu0 %v139
    %v141 = vpop.xlane.xlu0 %140
    %v142 = vmul.f32 %v138, %v129
    %v143 = vmul.f32 %v141, %v129
    %v144 = vadd.f32 %v142, 1e-12
    %v145 = vadd.f32 %v143, 1e-12
    %v146 = vrsqrt.pop %v144
    %v147 = vrsqrt.pop %v145
    %v148 = vmul.f32 %v132, %v146
    %v149 = vmul.f32 %v133, %v147
    %v150 = vld [vmem:[%s4] sm:$0x1]
    %v152 = vlaneseq
    %v153 = vshrl.u32 %v152, 7
    %v154 = vsub.s32 0, %v153
    %v155 = vrot.slane %v150, %v154
    %v157 = vmul.f32 %v148, %v155
    %v158 = vmul.f32 %v149, %v155
    %v159 = vld [vmem:[%s5] sm:$0x1]
    %v161 = vlaneseq
    %v162 = vshrl.u32 %v161, 7
    %v163 = vsub.s32 0, %v162
    %v164 = vrot.slane %v159, %v163
    %v166 = vadd.f32 %v157, %v164
    %v167 = vadd.f32 %v158, %v164
    %168 = vst.msk [vmem:[%s6] sm:$0xff] %vm56, %v166
    %169 = vst.msk [vmem:[%s6 + $0x8] sm:$0xff] %vm56, %v167
  $region33: #{bert_crf_forward.16} parent=0 // pred_fallthru
    _
  // Predicated region
  $region34: #{bert_crf_forward.16} parent=0 // pred_check
    _
  $region35: #{bert_crf_forward.16} parent=0 // pred_check_branch
    %171 = sbr.rel (0) target = $region37
  $region36: #{bert_crf_forward.16} parent=0 // pred_region
    _
  $region37: #{bert_crf_forward.16} parent=0 // pred_fallthru
    _
  // Predicated region
  $region38: #{bert_crf_forward.16} parent=0 // pred_check
    _
  $region39: #{bert_crf_forward.16} parent=0 // pred_check_branch
    %173 = sbr.rel (0) target = $region41
  $region40: #{bert_crf_forward.16} parent=0 // pred_region
    _
  $region41: #{bert_crf_forward.16} parent=0 // pred_fallthru
    _

// kernel: bert_crf_forward.17
$region0: #{bert_crf_forward.17}
  #allocation0 [shape = 'u32[]', space=smem, size = 0x4, offset = 0x4, fixed_abs, tag = 'smem constant byte address 0x4 - core index']
  #allocation1 [shape = 'u32[144,128]{1,0:T(1,128)}', space=vmem, size = 0x12000, scoped, tag = 'internal scratch']
  #allocation2 [shape = 'f32[16,64]{1,0:T(8,128)}', space=vmem, size = 0x2000, scoped, tag = 'scratch operand']
  %s0 = inlined_call_operand.vmem [shape: bf16[16,32], index: 0, kind: input, shape index: {}]
  %s1 = inlined_call_operand.vmem [shape: bf16[32,64], index: 1, kind: input, shape index: {}]
  %s2 = inlined_call_operand.vmem [shape: f32[1,64], index: 2, kind: input, shape index: {}]
  %s3 = inlined_call_operand.vmem [shape: bf16[16,64], index: 3, kind: output, shape index: {}]
  %s4 = sld [smem:[#allocation0]]
  $region30: #{bert_crf_forward.17} parent=0
    _
  %s6 = ssub.s32 1, %s4
  %s7 = scalar_select 0, %s6, %s4
  // Predicated region
  $region2: #{bert_crf_forward.17} parent=0 // pred_check
    _
  $region3: #{bert_crf_forward.17} parent=0 // pred_check_branch
    %9 = sbr.rel (0) target = $region5
  $region4: #{bert_crf_forward.17} parent=0 // pred_region
    _
  $region5: #{bert_crf_forward.17} parent=0 // pred_fallthru
    _
  // Predicated region
  $region6: #{bert_crf_forward.17} parent=0 // pred_check
    _
  $region7: #{bert_crf_forward.17} parent=0 // pred_check_branch
    %11 = sbr.rel (0) target = $region9
  $region8: #{bert_crf_forward.17} parent=0 // pred_region
    _
  $region9: #{bert_crf_forward.17} parent=0 // pred_fallthru
    _
  // Predicated region
  $region10: #{bert_crf_forward.17} parent=0 // pred_check
    _
  $region11: #{bert_crf_forward.17} parent=0 // pred_check_branch
    %13 = sbr.rel (0) target = $region13
  $region12: #{bert_crf_forward.17} parent=0 // pred_region
    _
  $region13: #{bert_crf_forward.17} parent=0 // pred_fallthru
    _
  %p15 = scmp.eq.s32.totalorder 0, 0
  // Predicated region
  $region14: #{bert_crf_forward.17} parent=0 // pred_check
    %p16 = pneg %p15
  $region15: #{bert_crf_forward.17} parent=0 // pred_check_branch
    %18 = sbr.rel (%p16) target = $region17
  $region16: #{bert_crf_forward.17} parent=0 // pred_region
    %vm19 = vcmask 523264
    %20 = vst.msk [vmem:[#allocation2] sm:$0xff] %vm19, 0.0
    %21 = vst.msk [vmem:[#allocation2 + $0x8] sm:$0xff] %vm19, 0.0
  $region17: #{bert_crf_forward.17} parent=0 // pred_fallthru
    _
  %v22 = vld [vmem:[#allocation2] sm:$0xff]
  %v23 = vld [vmem:[#allocation2 + $0x8] sm:$0xff]
  %v24 = vld [vmem:[%s0] sm:$0xf]
  %v25 = vld [vmem:[%s0 + $0x4] sm:$0xf]
  %v26 = vld [vmem:[%s1] sm:$0xf]
  %v27 = vld [vmem:[%s1 + $0x4] sm:$0xf]
  %v28 = vld [vmem:[%s1 + $0x8] sm:$0xf]
  %v29 = vld [vmem:[%s1 + $0xc] sm:$0xf]
  %v32 = vunpack.c.l.b16 %v24
  %v33 = vunpack.c.l.b16 %v25
  %v34 = vpack.c.b16 %v33, %v32
  %v39 = vunpack.c.l.b16 %v26
  %v40 = vunpack.c.l.b16 %v27
  %v41 = vunpack.c.l.b16 %v28
  %v42 = vunpack.c.l.b16 %v29
  %v43 = vpack.c.b16 %v40, %v39
  %v44 = vpack.c.b16 %v42, %v41
  %vm47 = vcmask 261120
  %v49 = vsel %vm47, %v34, 0
  %51 = vmatprep.subr.bf16.mxu0 0
  %52 = vmatpush1.bf16.msra.mxu0 %v43
  %53 = vmatprep.subr.bf16.mxu0 0
  %54 = vmatpush1.bf16.msra.mxu0 %v44
  %55 = vmatprep.subr.bf16.mxu0 0
  %56 = vmatpush1.bf16.msra.mxu0 0
  %57 = vmatprep.subr.bf16.mxu0 0
  %58 = vmatpush1.bf16.msra.mxu0 0
  %59 = vmatprep.subr.bf16.mxu0 0
  %60 = vmatpush1.bf16.msra.mxu0 0
  %61 = vmatprep.subr.bf16.mxu0 0
  %62 = vmatpush1.bf16.msra.mxu0 0
  %63 = vmatprep.subr.bf16.mxu0 0
  %64 = vmatpush1.bf16.msra.mxu0 0
  %65 = vmatprep.subr.bf16.mxu0 0
  %66 = vmatpush1.bf16.msra.mxu0 0
  %67 = vmatprep.subr.bf16.mxu0 0
  %68 = vmatpush1.bf16.msra.mxu0 0
  %69 = vmatprep.subr.bf16.mxu0 0
  %70 = vmatpush1.bf16.msra.mxu0 0
  %71 = vmatprep.subr.bf16.mxu0 0
  %72 = vmatpush1.bf16.msra.mxu0 0
  %73 = vmatprep.subr.bf16.mxu0 0
  %74 = vmatpush1.bf16.msra.mxu0 0
  %75 = vmatprep.subr.bf16.mxu0 0
  %76 = vmatpush1.bf16.msra.mxu0 0
  %77 = vmatprep.subr.bf16.mxu0 0
  %78 = vmatpush1.bf16.msra.mxu0 0
  %79 = vmatprep.subr.bf16.mxu0 0
  %80 = vmatpush1.bf16.msra.mxu0 0
  %81 = vmatprep.subr.bf16.mxu0 0
  %82 = vmatpush1.bf16.msra.mxu0 0
  %83 = vmatprep.mubr.bf16.mxu0 0
  %84 = vmatmul.mubr.bf16.gmra.mrb[0].mxu0 %v49
  %v85 = vpop.f32.mrb[0].mxu0
  %v86 = vadd.f32 0.0, %v85
  %v87 = vpop.f32.mrb[0].mxu0
  %v88 = vpop.f32.mrb[0].mxu0
  %v89 = vadd.f32 0.0, %v88
  %v90 = vpop.f32.mrb[0].mxu0
  %91 = vdwg.mxu0
  %v92 = vadd.f32 %v22, %v86
  %v93 = vadd.f32 %v23, %v89
  %vm94 = vcmask 523264
  %95 = vst.msk [vmem:[#allocation2] sm:$0xff] %vm94, %v92
  %96 = vst.msk [vmem:[#allocation2 + $0x8] sm:$0xff] %vm94, %v93
  // Predicated region
  $region18: #{bert_crf_forward.17} parent=0 // pred_check
    %p97 = pneg %p15
  $region19: #{bert_crf_forward.17} parent=0 // pred_check_branch
    %99 = sbr.rel (%p97) target = $region21
  $region20: #{bert_crf_forward.17} parent=0 // pred_region
    %v100 = vld [vmem:[#allocation2] sm:$0xff]
    %v101 = vld [vmem:[#allocation2 + $0x8] sm:$0xff]
    %v102 = vld [vmem:[%s2] sm:$0x1]
    %v104 = vlaneseq
    %v105 = vshrl.u32 %v104, 7
    %v106 = vsub.s32 0, %v105
    %v107 = vrot.slane %v102, %v106
    %v109 = vadd.f32 %v100, %v107
    %v110 = vadd.f32 %v101, %v107
    %v111 = vmul.f32 %v109, 0.5
    %v112 = vmul.f32 %v110, 0.5
    %v113 = vmul.f32 %v109, 0.044715
    %v114 = vmul.f32 %v110, 0.044715
    %v115 = vmul.f32 %v113, %v109
    %v116 = vmul.f32 %v114, %v110
    %v117 = vmul.f32 %v115, %v109
    %v118 = vmul.f32 %v116, %v110
    %v119 = vadd.f32 %v109, %v117
    %v120 = vadd.f32 %v110, %v118
    %v121 = vmul.f32 %v119, 0.7978846
    %v122 = vmul.f32 %v120, 0.7978846
    %v123 = vtanh.pop %v121
    %v124 = vtanh.pop %v122
    %v125 = vadd.f32 %v123, 1.0
    %v126 = vadd.f32 %v124, 1.0
    %v127 = vmul.f32 %v111, %v125
    %v128 = vmul.f32 %v112, %v126
    %v129 = vpack.c.bf16 %v128, %v127
    %v131 = vunpack.c.l.b16 %v129
    %v132 = vunpack.c.h.b16 %v129
    %v133 = vpack.c.b16 %v131, %v131
    %v134 = vpack.c.b16 %v132, %v132
    %vm137 = vcmask 519168
    %138 = vst.msk [vmem:[%s3] sm:$0xf] %vm137, %v133
    %139 = vst.msk [vmem:[%s3 + $0x4] sm:$0xf] %vm137, %v134
  $region21: #{bert_crf_forward.17} parent=0 // pred_fallthru
    _
  // Predicated region
  $region22: #{bert_crf_forward.17} parent=0 // pred_check
    _
  $region23: #{bert_crf_forward.17} parent=0 // pred_check_branch
    %141 = sbr.rel (0) target = $region25
  $region24: #{bert_crf_forward.17} parent=0 // pred_region
    _
  $region25: #{bert_crf_forward.17} parent=0 // pred_fallthru
    _
  // Predicated region
  $region26: #{bert_crf_forward.17} parent=0 // pred_check
    _
  $region27: #{bert_crf_forward.17} parent=0 // pred_check_branch
    %143 = sbr.rel (0) target = $region29
  $region28: #{bert_crf_forward.17} parent=0 // pred_region
    _
  $region29: #{bert_crf_forward.17} parent=0 // pred_fallthru
    _

// kernel: bert_crf_forward.18
$region0: #{bert_crf_forward.18}
  #allocation0 [shape = 'u32[]', space=smem, size = 0x4, offset = 0x4, fixed_abs, tag = 'smem constant byte address 0x4 - core index']
  #allocation1 [shape = 'u32[144,128]{1,0:T(1,128)}', space=vmem, size = 0x12000, scoped, tag = 'internal scratch']
  #allocation2 [shape = 'f32[16,32]{1,0:T(8,128)}', space=vmem, size = 0x2000, scoped, tag = 'scratch operand']
  %s0 = inlined_call_operand.vmem [shape: bf16[16,64], index: 0, kind: input, shape index: {}]
  %s1 = inlined_call_operand.vmem [shape: bf16[64,32], index: 1, kind: input, shape index: {}]
  %s2 = inlined_call_operand.vmem [shape: f32[1,32], index: 2, kind: input, shape index: {}]
  %s3 = inlined_call_operand.vmem [shape: f32[16,32], index: 3, kind: input, shape index: {}]
  %s4 = inlined_call_operand.vmem [shape: f32[1,32], index: 4, kind: input, shape index: {}]
  %s5 = inlined_call_operand.vmem [shape: f32[1,32], index: 5, kind: input, shape index: {}]
  %s6 = inlined_call_operand.vmem [shape: f32[16,32], index: 6, kind: output, shape index: {}]
  %s7 = sld [smem:[#allocation0]]
  $region42: #{bert_crf_forward.18} parent=0
    _
  %s9 = ssub.s32 1, %s7
  %s10 = scalar_select 0, %s9, %s7
  // Predicated region
  $region2: #{bert_crf_forward.18} parent=0 // pred_check
    _
  $region3: #{bert_crf_forward.18} parent=0 // pred_check_branch
    %12 = sbr.rel (0) target = $region5
  $region4: #{bert_crf_forward.18} parent=0 // pred_region
    _
  $region5: #{bert_crf_forward.18} parent=0 // pred_fallthru
    _
  // Predicated region
  $region6: #{bert_crf_forward.18} parent=0 // pred_check
    _
  $region7: #{bert_crf_forward.18} parent=0 // pred_check_branch
    %14 = sbr.rel (0) target = $region9
  $region8: #{bert_crf_forward.18} parent=0 // pred_region
    _
  $region9: #{bert_crf_forward.18} parent=0 // pred_fallthru
    _
  // Predicated region
  $region10: #{bert_crf_forward.18} parent=0 // pred_check
    _
  $region11: #{bert_crf_forward.18} parent=0 // pred_check_branch
    %16 = sbr.rel (0) target = $region13
  $region12: #{bert_crf_forward.18} parent=0 // pred_region
    _
  $region13: #{bert_crf_forward.18} parent=0 // pred_fallthru
    _
  // Predicated region
  $region14: #{bert_crf_forward.18} parent=0 // pred_check
    _
  $region15: #{bert_crf_forward.18} parent=0 // pred_check_branch
    %18 = sbr.rel (0) target = $region17
  $region16: #{bert_crf_forward.18} parent=0 // pred_region
    _
  $region17: #{bert_crf_forward.18} parent=0 // pred_fallthru
    _
  // Predicated region
  $region18: #{bert_crf_forward.18} parent=0 // pred_check
    _
  $region19: #{bert_crf_forward.18} parent=0 // pred_check_branch
    %20 = sbr.rel (0) target = $region21
  $region20: #{bert_crf_forward.18} parent=0 // pred_region
    _
  $region21: #{bert_crf_forward.18} parent=0 // pred_fallthru
    _
  // Predicated region
  $region22: #{bert_crf_forward.18} parent=0 // pred_check
    _
  $region23: #{bert_crf_forward.18} parent=0 // pred_check_branch
    %22 = sbr.rel (0) target = $region25
  $region24: #{bert_crf_forward.18} parent=0 // pred_region
    _
  $region25: #{bert_crf_forward.18} parent=0 // pred_fallthru
    _
  %p24 = scmp.eq.s32.totalorder 0, 0
  // Predicated region
  $region26: #{bert_crf_forward.18} parent=0 // pred_check
    %p25 = pneg %p24
  $region27: #{bert_crf_forward.18} parent=0 // pred_check_branch
    %27 = sbr.rel (%p25) target = $region29
  $region28: #{bert_crf_forward.18} parent=0 // pred_region
    %vm28 = vcmask 261120
    %29 = vst.msk [vmem:[#allocation2] sm:$0xff] %vm28, 0.0
    %30 = vst.msk [vmem:[#allocation2 + $0x8] sm:$0xff] %vm28, 0.0
  $region29: #{bert_crf_forward.18} parent=0 // pred_fallthru
    _
  %v31 = vld [vmem:[#allocation2] sm:$0xff]
  %v32 = vld [vmem:[#allocation2 + $0x8] sm:$0xff]
  %v33 = vld [vmem:[%s0] sm:$0xf]
  %v34 = vld [vmem:[%s0 + $0x4] sm:$0xf]
  %v35 = vld [vmem:[%s1] sm:$0xf]
  %v36 = vld [vmem:[%s1 + $0x4] sm:$0xf]
  %v37 = vld [vmem:[%s1 + $0x8] sm:$0xf]
  %v38 = vld [vmem:[%s1 + $0xc] sm:$0xf]
  %v39 = vld [vmem:[%s1 + $0x10] sm:$0xf]
  %v40 = vld [vmem:[%s1 + $0x14] sm:$0xf]
  %v41 = vld [vmem:[%s1 + $0x18] sm:$0xf]
  %v42 = vld [vmem:[%s1 + $0x1c] sm:$0xf]
  %v45 = vunpack.c.l.b16 %v33
  %v46 = vunpack.c.l.b16 %v34
  %v47 = vpack.c.b16 %v46, %v45
  %v56 = vunpack.c.l.b16 %v35
  %v57 = vunpack.c.l.b16 %v36
  %v58 = vunpack.c.l.b16 %v37
  %v59 = vunpack.c.l.b16 %v38
  %v60 = vunpack.c.l.b16 %v39
  %v61 = vunpack.c.l.b16 %v40
  %v62 = vunpack.c.l.b16 %v41
  %v63 = vunpack.c.l.b16 %v42
  %v64 = vpack.c.b16 %v57, %v56
  %v65 = vpack.c.b16 %v59, %v58
  %v66 = vpack.c.b16 %v61, %v60
  %v67 = vpack.c.b16 %v63, %v62
  %vm72 = vcmask 523264
  %v74 = vsel %vm72, %v47, 0
  %76 = vmatprep.subr.bf16.mxu0 0
  %77 = vmatpush1.bf16.msra.mxu0 %v64
  %78 = vmatprep.subr.bf16.mxu0 0
  %79 = vmatpush1.bf16.msra.mxu0 %v65
  %80 = vmatprep.subr.bf16.mxu0 0
  %81 = vmatpush1.bf16.msra.mxu0 %v66
  %82 = vmatprep.subr.bf16.mxu0 0
  %83 = vmatpush1.bf16.msra.mxu0 %v67
  %84 = vmatprep.subr.bf16.mxu0 0
  %85 = vmatpush1.bf16.msra.mxu0 0
  %86 = vmatprep.subr.bf16.mxu0 0
  %87 = vmatpush1.bf16.msra.mxu0 0
  %88 = vmatprep.subr.bf16.mxu0 0
  %89 = vmatpush1.bf16.msra.mxu0 0
  %90 = vmatprep.subr.bf16.mxu0 0
  %91 = vmatpush1.bf16.msra.mxu0 0
  %92 = vmatprep.subr.bf16.mxu0 0
  %93 = vmatpush1.bf16.msra.mxu0 0
  %94 = vmatprep.subr.bf16.mxu0 0
  %95 = vmatpush1.bf16.msra.mxu0 0
  %96 = vmatprep.subr.bf16.mxu0 0
  %97 = vmatpush1.bf16.msra.mxu0 0
  %98 = vmatprep.subr.bf16.mxu0 0
  %99 = vmatpush1.bf16.msra.mxu0 0
  %100 = vmatprep.subr.bf16.mxu0 0
  %101 = vmatpush1.bf16.msra.mxu0 0
  %102 = vmatprep.subr.bf16.mxu0 0
  %103 = vmatpush1.bf16.msra.mxu0 0
  %104 = vmatprep.subr.bf16.mxu0 0
  %105 = vmatpush1.bf16.msra.mxu0 0
  %106 = vmatprep.subr.bf16.mxu0 0
  %107 = vmatpush1.bf16.msra.mxu0 0
  %108 = vmatprep.mubr.bf16.mxu0 0
  %109 = vmatmul.mubr.bf16.gmra.mrb[0].mxu0 %v74
  %v110 = vpop.f32.mrb[0].mxu0
  %v111 = vadd.f32 0.0, %v110
  %v112 = vpop.f32.mrb[0].mxu0
  %v113 = vpop.f32.mrb[0].mxu0
  %v114 = vadd.f32 0.0, %v113
  %v115 = vpop.f32.mrb[0].mxu0
  %116 = vdwg.mxu0
  %v117 = vadd.f32 %v31, %v111
  %v118 = vadd.f32 %v32, %v114
  %vm119 = vcmask 261120
  %120 = vst.msk [vmem:[#allocation2] sm:$0xff] %vm119, %v117
  %121 = vst.msk [vmem:[#allocation2 + $0x8] sm:$0xff] %vm119, %v118
  // Predicated region
  $region30: #{bert_crf_forward.18} parent=0 // pred_check
    %p122 = pneg %p24
  $region31: #{bert_crf_forward.18} parent=0 // pred_check_branch
    %124 = sbr.rel (%p122) target = $region33
  $region32: #{bert_crf_forward.18} parent=0 // pred_region
    %v125 = vld [vmem:[#allocation2] sm:$0xff]
    %v126 = vld [vmem:[#allocation2 + $0x8] sm:$0xff]
    %v127 = vld [vmem:[%s2] sm:$0x1]
    %v129 = vlaneseq
    %v130 = vshrl.u32 %v129, 7
    %v131 = vsub.s32 0, %v130
    %v132 = vrot.slane %v127, %v131
    %v134 = vadd.f32 %v125, %v132
    %v135 = vadd.f32 %v126, %v132
    %v136 = vld [vmem:[%s3] sm:$0xff]
    %v137 = vld [vmem:[%s3 + $0x8] sm:$0xff]
    %v138 = vadd.f32 %v134, %v136
    %v139 = vadd.f32 %v135, %v137
    %v140 = vsel %vm119, %v138, 0.0
    %141 = vadd.xlane.f32.xlu0 %v140
    %v142 = vpop.xlane.xlu0 %141
    %v143 = vsel %vm119, %v139, 0.0
    %144 = vadd.xlane.f32.xlu0 %v143
    %v145 = vpop.xlane.xlu0 %144
    %v146 = vrcp.pop 32.0
    %v147 = vmul.f32 %v142, %v146
    %v148 = vmul.f32 %v145, %v146
    %v149 = vsub.f32 %v138, %v147
    %v150 = vsub.f32 %v139, %v148
    %v151 = vmul.f32 %v149, %v149
    %v152 = vmul.f32 %v150, %v150
    %v153 = vsel %vm119, %v151, 0.0
    %154 = vadd.xlane.f32.xlu0 %v153
    %v155 = vpop.xlane.xlu0 %154
    %v156 = vsel %vm119, %v152, 0.0
    %157 = vadd.xlane.f32.xlu0 %v156
    %v158 = vpop.xlane.xlu0 %157
    %v159 = vmul.f32 %v155, %v146
    %v160 = vmul.f32 %v158, %v146
    %v161 = vadd.f32 %v159, 1e-12
    %v162 = vadd.f32 %v160, 1e-12
    %v163 = vrsqrt.pop %v161
    %v164 = vrsqrt.pop %v162
    %v165 = vmul.f32 %v149, %v163
    %v166 = vmul.f32 %v150, %v164
    %v167 = vld [vmem:[%s4] sm:$0x1]
    %v169 = vlaneseq
    %v170 = vshrl.u32 %v169, 7
    %v171 = vsub.s32 0, %v170
    %v172 = vrot.slane %v167, %v171
    %v174 = vmul.f32 %v165, %v172
    %v175 = vmul.f32 %v166, %v172
    %v176 = vld [vmem:[%s5] sm:$0x1]
    %v178 = vlaneseq
    %v179 = vshrl.u32 %v178, 7
    %v180 = vsub.s32 0, %v179
    %v181 = vrot.slane %v176, %v180
    %v183 = vadd.f32 %v174, %v181
    %v184 = vadd.f32 %v175, %v181
    %185 = vst.msk [vmem:[%s6] sm:$0xff] %vm119, %v183
    %186 = vst.msk [vmem:[%s6 + $0x8] sm:$0xff] %vm119, %v184
  $region33: #{bert_crf_forward.18} parent=0 // pred_fallthru
    _
  // Predicated region
  $region34: #{bert_crf_forward.18} parent=0 // pred_check
    _
  $region35: #{bert_crf_forward.18} parent=0 // pred_check_branch
    %188 = sbr.rel (0) target = $region37
  $region36: #{bert_crf_forward.18} parent=0 // pred_region
    _
  $region37: #{bert_crf_forward.18} parent=0 // pred_fallthru
    _
  // Predicated region
  $region38: #{bert_crf_forward.18} parent=0 // pred_check
    _
  $region39: #{bert_crf_forward.18} parent=0 // pred_check_branch
    %190 = sbr.rel (0) target = $region41
  $region40: #{bert_crf_forward.18} parent=0 // pred_region
    _
  $region41: #{bert_crf_forward.18} parent=0 // pred_fallthru
    _

// kernel: bert_crf_forward.24
$region0: #{bert_crf_forward.24}
  #allocation0 [shape = 'u32[]', space=smem, size = 0x4, offset = 0x4, fixed_abs, tag = 'smem constant byte address 0x4 - core index']
  #allocation1 [shape = 'u32[144,128]{1,0:T(1,128)}', space=vmem, size = 0x12000, scoped, tag = 'internal scratch']
  #allocation2 [shape = 'f32[16,128]{1,0:T(8,128)}', space=vmem, size = 0x2000, scoped, tag = 'scratch operand']
  %s0 = inlined_call_operand.vmem [shape: bf16[16,32], index: 0, kind: input, shape index: {}]
  %s1 = inlined_call_operand.vmem [shape: bf16[32,128], index: 1, kind: input, shape index: {}]
  %s2 = inlined_call_operand.vmem [shape: f32[1,128], index: 2, kind: input, shape index: {}]
  %s3 = inlined_call_operand.vmem [shape: f32[16,128], index: 3, kind: output, shape index: {}]
  %s4 = sld [smem:[#allocation0]]
  $region30: #{bert_crf_forward.24} parent=0
    _
  %s6 = ssub.s32 1, %s4
  %s7 = scalar_select 0, %s6, %s4
  // Predicated region
  $region2: #{bert_crf_forward.24} parent=0 // pred_check
    _
  $region3: #{bert_crf_forward.24} parent=0 // pred_check_branch
    %9 = sbr.rel (0) target = $region5
  $region4: #{bert_crf_forward.24} parent=0 // pred_region
    _
  $region5: #{bert_crf_forward.24} parent=0 // pred_fallthru
    _
  // Predicated region
  $region6: #{bert_crf_forward.24} parent=0 // pred_check
    _
  $region7: #{bert_crf_forward.24} parent=0 // pred_check_branch
    %11 = sbr.rel (0) target = $region9
  $region8: #{bert_crf_forward.24} parent=0 // pred_region
    _
  $region9: #{bert_crf_forward.24} parent=0 // pred_fallthru
    _
  // Predicated region
  $region10: #{bert_crf_forward.24} parent=0 // pred_check
    _
  $region11: #{bert_crf_forward.24} parent=0 // pred_check_branch
    %13 = sbr.rel (0) target = $region13
  $region12: #{bert_crf_forward.24} parent=0 // pred_region
    _
  $region13: #{bert_crf_forward.24} parent=0 // pred_fallthru
    _
  %p15 = scmp.eq.s32.totalorder 0, 0
  // Predicated region
  $region14: #{bert_crf_forward.24} parent=0 // pred_check
    %p16 = pneg %p15
  $region15: #{bert_crf_forward.24} parent=0 // pred_check_branch
    %18 = sbr.rel (%p16) target = $region17
  $region16: #{bert_crf_forward.24} parent=0 // pred_region
    %19 = vst [vmem:[#allocation2] sm:$0xff] 0.0
    %20 = vst [vmem:[#allocation2 + $0x8] sm:$0xff] 0.0
  $region17: #{bert_crf_forward.24} parent=0 // pred_fallthru
    _
  %v21 = vld [vmem:[#allocation2] sm:$0xff]
  %v22 = vld [vmem:[#allocation2 + $0x8] sm:$0xff]
  %v23 = vld [vmem:[%s0] sm:$0xf]
  %v24 = vld [vmem:[%s0 + $0x4] sm:$0xf]
  %v25 = vld [vmem:[%s1] sm:$0xf]
  %v26 = vld [vmem:[%s1 + $0x4] sm:$0xf]
  %v27 = vld [vmem:[%s1 + $0x8] sm:$0xf]
  %v28 = vld [vmem:[%s1 + $0xc] sm:$0xf]
  %v31 = vunpack.c.l.b16 %v23
  %v32 = vunpack.c.l.b16 %v24
  %v33 = vpack.c.b16 %v32, %v31
  %v38 = vunpack.c.l.b16 %v25
  %v39 = vunpack.c.l.b16 %v26
  %v40 = vunpack.c.l.b16 %v27
  %v41 = vunpack.c.l.b16 %v28
  %v42 = vpack.c.b16 %v39, %v38
  %v43 = vpack.c.b16 %v41, %v40
  %vm46 = vcmask 261120
  %v48 = vsel %vm46, %v33, 0
  %50 = vmatprep.subr.bf16.mxu0 0
  %51 = vmatpush1.bf16.msra.mxu0 %v42
  %52 = vmatprep.subr.bf16.mxu0 0
  %53 = vmatpush1.bf16.msra.mxu0 %v43
  %54 = vmatprep.subr.bf16.mxu0 0
  %55 = vmatpush1.bf16.msra.mxu0 0
  %56 = vmatprep.subr.bf16.mxu0 0
  %57 = vmatpush1.bf16.msra.mxu0 0
  %58 = vmatprep.subr.bf16.mxu0 0
  %59 = vmatpush1.bf16.msra.mxu0 0
  %60 = vmatprep.subr.bf16.mxu0 0
  %61 = vmatpush1.bf16.msra.mxu0 0
  %62 = vmatprep.subr.bf16.mxu0 0
  %63 = vmatpush1.bf16.msra.mxu0 0
  %64 = vmatprep.subr.bf16.mxu0 0
  %65 = vmatpush1.bf16.msra.mxu0 0
  %66 = vmatprep.subr.bf16.mxu0 0
  %67 = vmatpush1.bf16.msra.mxu0 0
  %68 = vmatprep.subr.bf16.mxu0 0
  %69 = vmatpush1.bf16.msra.mxu0 0
  %70 = vmatprep.subr.bf16.mxu0 0
  %71 = vmatpush1.bf16.msra.mxu0 0
  %72 = vmatprep.subr.bf16.mxu0 0
  %73 = vmatpush1.bf16.msra.mxu0 0
  %74 = vmatprep.subr.bf16.mxu0 0
  %75 = vmatpush1.bf16.msra.mxu0 0
  %76 = vmatprep.subr.bf16.mxu0 0
  %77 = vmatpush1.bf16.msra.mxu0 0
  %78 = vmatprep.subr.bf16.mxu0 0
  %79 = vmatpush1.bf16.msra.mxu0 0
  %80 = vmatprep.subr.bf16.mxu0 0
  %81 = vmatpush1.bf16.msra.mxu0 0
  %82 = vmatprep.mubr.bf16.mxu0 0
  %83 = vmatmul.mubr.bf16.gmra.mrb[0].mxu0 %v48
  %v84 = vpop.f32.mrb[0].mxu0
  %v85 = vadd.f32 0.0, %v84
  %v86 = vpop.f32.mrb[0].mxu0
  %v87 = vpop.f32.mrb[0].mxu0
  %v88 = vadd.f32 0.0, %v87
  %v89 = vpop.f32.mrb[0].mxu0
  %90 = vdwg.mxu0
  %v91 = vadd.f32 %v21, %v85
  %v92 = vadd.f32 %v22, %v88
  %93 = vst [vmem:[#allocation2] sm:$0xff] %v91
  %94 = vst [vmem:[#allocation2 + $0x8] sm:$0xff] %v92
  // Predicated region
  $region18: #{bert_crf_forward.24} parent=0 // pred_check
    %p95 = pneg %p15
  $region19: #{bert_crf_forward.24} parent=0 // pred_check_branch
    %97 = sbr.rel (%p95) target = $region21
  $region20: #{bert_crf_forward.24} parent=0 // pred_region
    %v98 = vld [vmem:[#allocation2] sm:$0xff]
    %v99 = vld [vmem:[#allocation2 + $0x8] sm:$0xff]
    %v100 = vld [vmem:[%s2] sm:$0x1]
    %v102 = vlaneseq
    %v103 = vshrl.u32 %v102, 7
    %v104 = vsub.s32 0, %v103
    %v105 = vrot.slane %v100, %v104
    %v107 = vadd.f32 %v98, %v105
    %v108 = vadd.f32 %v99, %v105
    %109 = vst [vmem:[%s3] sm:$0xff] %v107
    %110 = vst [vmem:[%s3 + $0x8] sm:$0xff] %v108
  $region21: #{bert_crf_forward.24} parent=0 // pred_fallthru
    _
  // Predicated region
  $region22: #{bert_crf_forward.24} parent=0 // pred_check
    _
  $region23: #{bert_crf_forward.24} parent=0 // pred_check_branch
    %112 = sbr.rel (0) target = $region25
  $region24: #{bert_crf_forward.24} parent=0 // pred_region
    _
  $region25: #{bert_crf_forward.24} parent=0 // pred_fallthru
    _
  // Predicated region
  $region26: #{bert_crf_forward.24} parent=0 // pred_check
    _
  $region27: #{bert_crf_forward.24} parent=0 // pred_check_branch
    %114 = sbr.rel (0) target = $region29
  $region28: #{bert_crf_forward.24} parent=0 // pred_region
    _
  $region29: #{bert_crf_forward.24} parent=0 // pred_fallthru
    _

// kernel: bert_crf_forward.25
$region0: #{bert_crf_forward.25}
  #allocation0 [shape = 'u32[]', space=smem, size = 0x4, offset = 0x4, fixed_abs, tag = 'smem constant byte address 0x4 - core index']
  #allocation1 [shape = 'u32[144,128]{1,0:T(1,128)}', space=vmem, size = 0x12000, scoped, tag = 'internal scratch']
  %s0 = inlined_call_operand.vmem [shape: f32[2,8,128], index: 0, kind: input, shape index: {}]
  %s1 = inlined_call_operand.vmem [shape: f32[2,8,128], index: 1, kind: input, shape index: {}]
  %s2 = inlined_call_operand.vmem [shape: f32[2,8,1], index: 2, kind: input, shape index: {}]
  %s3 = inlined_call_operand.vmem [shape: f32[128,128], index: 3, kind: input, shape index: {}]
  %s4 = inlined_call_operand.vmem [shape: f32[128,128], index: 4, kind: input, shape index: {}]
  %s5 = inlined_call_operand.vmem [shape: f32[1,128], index: 5, kind: input, shape index: {}]
  %s6 = inlined_call_operand.vmem [shape: f32[1,128], index: 6, kind: input, shape index: {}]
  %s7 = inlined_call_operand.vmem [shape: f32[2,1,1], index: 7, kind: output, shape index: {}]
  %s8 = sld [smem:[#allocation0]]
  $region61: #{bert_crf_forward.25} parent=0
    _
  %s10 = ssub.s32 1, %s8
  %s11 = scalar_select 0, %s10, %s8
  loop: start=0, step=1, limit=4
  $region2: #{bert_crf_forward.25} parent=0 // loop_pre_header
    _
  $region3: #{bert_crf_forward.25} parent=0 // loop_header
    %s13 = sphi 0, %s17
    %p14 = scmp.ge.s32.totalorder %s13, 4
    %s23 = sphi 0, %s25
    %s26 = sphi 0, %s23
    %s27 = sphi 0, %s26
    %s43 = sphi 0, %s27
    %s49 = sphi 0, %s51
    %s52 = sphi 0, %s49
    %s53 = sphi 0, %s52
    %s69 = sphi 0, %s53
    %s75 = sphi 0, %s77
    %s78 = sphi 0, %s75
    %s79 = sphi 0, %s78
    %s95 = sphi 0, %s79
    %s99 = sphi 0, %s99
    %s101 = sphi 0, %s99
    %s102 = sphi 0, %s101
    %s116 = sphi 0, %s102
    %s120 = sphi 0, %s120
    %s122 = sphi 0, %s120
    %s123 = sphi 0, %s122
    %s137 = sphi 0, %s123
    %s141 = sphi 0, %s141
    %s143 = sphi 0, %s141
    %s144 = sphi 0, %s143
    %s158 = sphi 0, %s144
    %s162 = sphi 0, %s162
    %s164 = sphi 0, %s162
    %s165 = sphi 0, %s164
    %s179 = sphi 0, %s165
    %s185 = sphi 0, %s187
    %s188 = sphi 0, %s185
    %s189 = sphi 0, %s188
    %s205 = sphi 0, %s189
  $region4: #{bert_crf_forward.25} parent=0 // loop_header_branch
    %16 = sbr.rel (%p14) target = $region8
  $region5: #{bert_crf_forward.25} parent=0 // loop_body
    %s18 = ssub.s32 %s13, 1
    %s19 = ssub.s32 %s13, 2
    %s20 = sadd.s32 %s13, 1
    %s21 = ssub.s32 %s13, %s20
    %p22 = scmp.eq.s32.totalorder %s21, 0
    %s24 = sadd.s32 %s23, 1
    %s25 = scalar_select %p22, %s23, %s24
    %p28 = pneg %p22
    %p29 = scmp.eq.s32.totalorder %s13, 1
    %p30 = por %p28, %p29
    %p31 = scmp.ne.s32.totalorder %s23, %s26
    %p32 = scmp.eq.s32.totalorder %s13, 0
    %p33 = por %p31, %p32
    %p34 = scmp.ne.s32.totalorder %s23, %s26
    %p35 = scmp.eq.s32.totalorder %s18, 1
    %p36 = por %p34, %p35
    %p37 = scmp.ne.s32.totalorder %s26, %s27
    %p38 = scmp.eq.s32.totalorder %s18, 0
    %p39 = por %p37, %p38
    %p40 = scmp.ne.s32.totalorder %s26, %s27
    %p41 = scmp.eq.s32.totalorder %s19, 1
    %p42 = por %p40, %p41
    %p44 = scmp.ne.s32.totalorder %s27, %s43
    %p45 = scmp.eq.s32.totalorder %s19, 0
    %p46 = por %p44, %p45
    %s47 = ssub.s32 %s13, %s20
    %p48 = scmp.eq.s32.totalorder %s47, 0
    %s50 = sadd.s32 %s49, 1
    %s51 = scalar_select %p48, %s49, %s50
    %p54 = pneg %p48
    %p55 = scmp.eq.s32.totalorder %s13, 1
    %p56 = por %p54, %p55
    %p57 = scmp.ne.s32.totalorder %s49, %s52
    %p58 = scmp.eq.s32.totalorder %s13, 0
    %p59 = por %p57, %p58
    %p60 = scmp.ne.s32.totalorder %s49, %s52
    %p61 = scmp.eq.s32.totalorder %s18, 1
    %p62 = por %p60, %p61
    %p63 = scmp.ne.s32.totalorder %s52, %s53
    %p64 = scmp.eq.s32.totalorder %s18, 0
    %p65 = por %p63, %p64
    %p66 = scmp.ne.s32.totalorder %s52, %s53
    %p67 = scmp.eq.s32.totalorder %s19, 1
    %p68 = por %p66, %p67
    %p70 = scmp.ne.s32.totalorder %s53, %s69
    %p71 = scmp.eq.s32.totalorder %s19, 0
    %p72 = por %p70, %p71
    %s73 = ssub.s32 %s13, %s20
    %p74 = scmp.eq.s32.totalorder %s73, 0
    %s76 = sadd.s32 %s75, 1
    %s77 = scalar_select %p74, %s75, %s76
    %p80 = pneg %p74
    %p81 = scmp.eq.s32.totalorder %s13, 1
    %p82 = por %p80, %p81
    %p83 = scmp.ne.s32.totalorder %s75, %s78
    %p84 = scmp.eq.s32.totalorder %s13, 0
    %p85 = por %p83, %p84
    %p86 = scmp.ne.s32.totalorder %s75, %s78
    %p87 = scmp.eq.s32.totalorder %s18, 1
    %p88 = por %p86, %p87
    %p89 = scmp.ne.s32.totalorder %s78, %s79
    %p90 = scmp.eq.s32.totalorder %s18, 0
    %p91 = por %p89, %p90
    %p92 = scmp.ne.s32.totalorder %s78, %s79
    %p93 = scmp.eq.s32.totalorder %s19, 1
    %p94 = por %p92, %p93
    %p96 = scmp.ne.s32.totalorder %s79, %s95
    %p97 = scmp.eq.s32.totalorder %s19, 0
    %p98 = por %p96, %p97
    %s100 = sadd.s32 %s99, 1
    %p103 = scmp.eq.s32.totalorder %s13, 1
    %p104 = scmp.ne.s32.totalorder %s99, %s101
    %p105 = scmp.eq.s32.totalorder %s13, 0
    %p106 = por %p104, %p105
    %p107 = scmp.ne.s32.totalorder %s99, %s101
    %p108 = scmp.eq.s32.totalorder %s18, 1
    %p109 = por %p107, %p108
    %p110 = scmp.ne.s32.totalorder %s101, %s102
    %p111 = scmp.eq.s32.totalorder %s18, 0
    %p112 = por %p110, %p111
    %p113 = scmp.ne.s32.totalorder %s101, %s102
    %p114 = scmp.eq.s32.totalorder %s19, 1
    %p115 = por %p113, %p114
    %p117 = scmp.ne.s32.totalorder %s102, %s116
    %p118 = scmp.eq.s32.totalorder %s19, 0
    %p119 = por %p117, %p118
    %s121 = sadd.s32 %s120, 1
    %p124 = scmp.eq.s32.totalorder %s13, 1
    %p125 = scmp.ne.s32.totalorder %s120, %s122
    %p126 = scmp.eq.s32.totalorder %s13, 0
    %p127 = por %p125, %p126
    %p128 = scmp.ne.s32.totalorder %s120, %s122
    %p129 = scmp.eq.s32.totalorder %s18, 1
    %p130 = por %p128, %p129
    %p131 = scmp.ne.s32.totalorder %s122, %s123
    %p132 = scmp.eq.s32.totalorder %s18, 0
    %p133 = por %p131, %p132
    %p134 = scmp.ne.s32.totalorder %s122, %s123
    %p135 = scmp.eq.s32.totalorder %s19, 1
    %p136 = por %p134, %p135
    %p138 = scmp.ne.s32.totalorder %s123, %s137
    %p139 = scmp.eq.s32.totalorder %s19, 0
    %p140 = por %p138, %p139
    %s142 = sadd.s32 %s141, 1
    %p145 = scmp.eq.s32.totalorder %s13, 1
    %p146 = scmp.ne.s32.totalorder %s141, %s143
    %p147 = scmp.eq.s32.totalorder %s13, 0
    %p148 = por %p146, %p147
    %p149 = scmp.ne.s32.totalorder %s141, %s143
    %p150 = scmp.eq.s32.totalorder %s18, 1
    %p151 = por %p149, %p150
    %p152 = scmp.ne.s32.totalorder %s143, %s144
    %p153 = scmp.eq.s32.totalorder %s18, 0
    %p154 = por %p152, %p153
    %p155 = scmp.ne.s32.totalorder %s143, %s144
    %p156 = scmp.eq.s32.totalorder %s19, 1
    %p157 = por %p155, %p156
    %p159 = scmp.ne.s32.totalorder %s144, %s158
    %p160 = scmp.eq.s32.totalorder %s19, 0
    %p161 = por %p159, %p160
    %s163 = sadd.s32 %s162, 1
    %p166 = scmp.eq.s32.totalorder %s13, 1
    %p167 = scmp.ne.s32.totalorder %s162, %s164
    %p168 = scmp.eq.s32.totalorder %s13, 0
    %p169 = por %p167, %p168
    %p170 = scmp.ne.s32.totalorder %s162, %s164
    %p171 = scmp.eq.s32.totalorder %s18, 1
    %p172 = por %p170, %p171
    %p173 = scmp.ne.s32.totalorder %s164, %s165
    %p174 = scmp.eq.s32.totalorder %s18, 0
    %p175 = por %p173, %p174
    %p176 = scmp.ne.s32.totalorder %s164, %s165
    %p177 = scmp.eq.s32.totalorder %s19, 1
    %p178 = por %p176, %p177
    %p180 = scmp.ne.s32.totalorder %s165, %s179
    %p181 = scmp.eq.s32.totalorder %s19, 0
    %p182 = por %p180, %p181
    %s183 = ssub.s32 %s13, %s20
    %p184 = scmp.eq.s32.totalorder %s183, 0
    %s186 = sadd.s32 %s185, 1
    %s187 = scalar_select %p184, %s185, %s186
    %p190 = pneg %p184
    %p191 = scmp.eq.s32.totalorder %s13, 1
    %p192 = por %p190, %p191
    %p193 = scmp.ne.s32.totalorder %s185, %s188
    %p194 = scmp.eq.s32.totalorder %s13, 0
    %p195 = por %p193, %p194
    %p196 = scmp.ne.s32.totalorder %s185, %s188
    %p197 = scmp.eq.s32.totalorder %s18, 1
    %p198 = por %p196, %p197
    %p199 = scmp.ne.s32.totalorder %s188, %s189
    %p200 = scmp.eq.s32.totalorder %s18, 0
    %p201 = por %p199, %p200
    %p202 = scmp.ne.s32.totalorder %s188, %s189
    %p203 = scmp.eq.s32.totalorder %s19, 1
    %p204 = por %p202, %p203
    %p206 = scmp.ne.s32.totalorder %s189, %s205
    %p207 = scmp.eq.s32.totalorder %s19, 0
    %p208 = por %p206, %p207
    %p209 = scmp.le.s32.totalorder 1, %s13
    %p210 = scmp.lt.s32.totalorder %s13, 3
    %p211 = pnand %p209, %p210
    %p212 = pneg %p211
    // Predicated region
    $region9: #{bert_crf_forward.25} parent=5 // pred_check
      _
    $region10: #{bert_crf_forward.25} parent=5 // pred_check_branch
      %214 = sbr.rel (%p211) target = $region12
    $region11: #{bert_crf_forward.25} parent=5 // pred_region
      %s215 = ssub.s32 %s13, 1
      // Predicated region
      $region13: #{bert_crf_forward.25} parent=11 // pred_check
        %p216 = pneg %p112
      $region14: #{bert_crf_forward.25} parent=11 // pred_check_branch
        %218 = sbr.rel (%p216) target = $region16
      $region15: #{bert_crf_forward.25} parent=11 // pred_region
        _
      $region16: #{bert_crf_forward.25} parent=11 // pred_fallthru
        _
      // Predicated region
      $region17: #{bert_crf_forward.25} parent=11 // pred_check
        %p219 = pneg %p133
      $region18: #{bert_crf_forward.25} parent=11 // pred_check_branch
        %221 = sbr.rel (%p219) target = $region20
      $region19: #{bert_crf_forward.25} parent=11 // pred_region
        _
      $region20: #{bert_crf_forward.25} parent=11 // pred_fallthru
        _
      // Predicated region
      $region21: #{bert_crf_forward.25} parent=11 // pred_check
        %p222 = pneg %p154
      $region22: #{bert_crf_forward.25} parent=11 // pred_check_branch
        %224 = sbr.rel (%p222) target = $region24
      $region23: #{bert_crf_forward.25} parent=11 // pred_region
        _
      $region24: #{bert_crf_forward.25} parent=11 // pred_fallthru
        _
      // Predicated region
      $region25: #{bert_crf_forward.25} parent=11 // pred_check
        %p225 = pneg %p175
      $region26: #{bert_crf_forward.25} parent=11 // pred_check_branch
        %227 = sbr.rel (%p225) target = $region28
      $region27: #{bert_crf_forward.25} parent=11 // pred_region
        _
      $region28: #{bert_crf_forward.25} parent=11 // pred_fallthru
        _
    $region12: #{bert_crf_forward.25} parent=5 // pred_fallthru
      _
    %p228 = scmp.lt.s32.totalorder %s13, 2
    // Predicated region
    $region29: #{bert_crf_forward.25} parent=5 // pred_check
      %p229 = pneg %p228
    $region30: #{bert_crf_forward.25} parent=5 // pred_check_branch
      %231 = sbr.rel (%p229) target = $region32
    $region31: #{bert_crf_forward.25} parent=5 // pred_region
      // Predicated region
      $region33: #{bert_crf_forward.25} parent=31 // pred_check
        %p232 = pneg %p33
      $region34: #{bert_crf_forward.25} parent=31 // pred_check_branch
        %234 = sbr.rel (%p232) target = $region36
      $region35: #{bert_crf_forward.25} parent=31 // pred_region
        %p235 = scmp.lt.s32.totalorder %s13, 1
        %s236 = scalar_select %p235, %s13, 1
        %s237 = smul.addr %s236, 8
        %s238 = scalar_lea.vmem %s0, %s237
      $region36: #{bert_crf_forward.25} parent=31 // pred_fallthru
        _
      // Predicated region
      $region37: #{bert_crf_forward.25} parent=31 // pred_check
        %p239 = pneg %p59
      $region38: #{bert_crf_forward.25} parent=31 // pred_check_branch
        %241 = sbr.rel (%p239) target = $region40
      $region39: #{bert_crf_forward.25} parent=31 // pred_region
        %p242 = scmp.lt.s32.totalorder %s13, 1
        %s243 = scalar_select %p242, %s13, 1
        %s244 = smul.addr %s243, 8
        %s245 = scalar_lea.vmem %s1, %s244
      $region40: #{bert_crf_forward.25} parent=31 // pred_fallthru
        _
      // Predicated region
      $region41: #{bert_crf_forward.25} parent=31 // pred_check
        %p246 = pneg %p85
      $region42: #{bert_crf_forward.25} parent=31 // pred_check_branch
        %248 = sbr.rel (%p246) target = $region44
      $region43: #{bert_crf_forward.25} parent=31 // pred_region
        %p249 = scmp.lt.s32.totalorder %s13, 1
        %s250 = scalar_select %p249, %s13, 1
        %s251 = smul.addr %s250, 8
        %s252 = scalar_lea.vmem %s2, %s251
      $region44: #{bert_crf_forward.25} parent=31 // pred_fallthru
        _
    $region32: #{bert_crf_forward.25} parent=5 // pred_fallthru
      _
    %p253 = scmp.le.s32.totalorder 1, %s13
    %p254 = scmp.lt.s32.totalorder %s13, 3
    %p255 = pnand %p253, %p254
    %p256 = pneg %p255
    // Predicated region
    $region45: #{bert_crf_forward.25} parent=5 // pred_check
      _
    $region46: #{bert_crf_forward.25} parent=5 // pred_check_branch
      %258 = sbr.rel (%p255) target = $region48
    $region47: #{bert_crf_forward.25} parent=5 // pred_region
      %s259 = ssub.s32 %s13, 1
      %p260 = scmp.lt.s32.totalorder %s18, 1
      %s261 = scalar_select %p260, %s18, 1
      %s262 = smul.addr %s261, 8
      %s263 = scalar_lea.vmem %s0, %s262
      %p264 = pneg %p39
      %p265 = pneg %p36
      %p266 = scmp.lt.s32.totalorder %s18, 1
      %s267 = scalar_select %p266, %s18, 1
      %s268 = smul.addr %s267, 8
      %s269 = scalar_lea.vmem %s1, %s268
      %p270 = pneg %p65
      %p271 = pneg %p62
      %p272 = scmp.lt.s32.totalorder %s18, 1
      %s273 = scalar_select %p272, %s18, 1
      %s274 = smul.addr %s273, 8
      %s275 = scalar_lea.vmem %s2, %s274
      %p276 = pneg %p91
      %p277 = pneg %p88
      %p278 = pneg %p112
      %p279 = pneg %p109
      %p280 = pneg %p133
      %p281 = pneg %p130
      %p282 = pneg %p154
      %p283 = pneg %p151
      %p284 = pneg %p175
      %p285 = pneg %p172
      %p286 = pneg %p201
      %p287 = pneg %p198
      %p288 = scmp.lt.s32.totalorder %s18, 1
      %s289 = scalar_select %p288, %s18, 1
      %s290 = scalar_lea.vmem %s7, %s289
      %p291 = scmp.lt.s32.totalorder %s18, 1
      %s292 = scalar_select %p291, %s18, 1
      %s293 = smul.addr %s292, 8
      %s294 = scalar_lea.vmem %s0, %s293
      %p295 = scmp.lt.s32.totalorder %s18, 1
      %s296 = scalar_select %p295, %s18, 1
      %s297 = smul.addr %s296, 8
      %s298 = scalar_lea.vmem %s1, %s297
      %p299 = scmp.lt.s32.totalorder %s18, 1
      %s300 = scalar_select %p299, %s18, 1
      %s301 = smul.addr %s300, 8
      %s302 = scalar_lea.vmem %s2, %s301
      %p303 = scmp.lt.s32.totalorder %s18, 1
      %s304 = scalar_select %p303, %s18, 1
      %s305 = scalar_lea.vmem %s7, %s304
      %v306 = vld [vmem:[%s294] sm:$0xff]
      %v307 = vld [vmem:[%s298] sm:$0xff]
      %v308 = vld [vmem:[%s302] sm:$0xff]
      %v309 = vld [vmem:[%s3] sm:$0xff]
      %v310 = vld [vmem:[%s3 + $0x8] sm:$0xff]
      %v311 = vld [vmem:[%s3 + $0x10] sm:$0xff]
      %v312 = vld [vmem:[%s3 + $0x18] sm:$0xff]
      %v313 = vld [vmem:[%s3 + $0x20] sm:$0xff]
      %v314 = vld [vmem:[%s3 + $0x28] sm:$0xff]
      %v315 = vld [vmem:[%s3 + $0x30] sm:$0xff]
      %v316 = vld [vmem:[%s3 + $0x38] sm:$0xff]
      %v317 = vld [vmem:[%s3 + $0x40] sm:$0xff]
      %v318 = vld [vmem:[%s3 + $0x48] sm:$0xff]
      %v319 = vld [vmem:[%s3 + $0x50] sm:$0xff]
      %v320 = vld [vmem:[%s3 + $0x58] sm:$0xff]
      %v321 = vld [vmem:[%s3 + $0x60] sm:$0xff]
      %v322 = vld [vmem:[%s3 + $0x68] sm:$0xff]
      %v323 = vld [vmem:[%s3 + $0x70] sm:$0xff]
      %v324 = vld [vmem:[%s3 + $0x78] sm:$0xff]
      %v325 = vld [vmem:[%s4] sm:$0xff]
      %v326 = vld [vmem:[%s4 + $0x8] sm:$0xff]
      %v327 = vld [vmem:[%s4 + $0x10] sm:$0xff]
      %v328 = vld [vmem:[%s4 + $0x18] sm:$0xff]
      %v329 = vld [vmem:[%s4 + $0x20] sm:$0xff]
      %v330 = vld [vmem:[%s4 + $0x28] sm:$0xff]
      %v331 = vld [vmem:[%s4 + $0x30] sm:$0xff]
      %v332 = vld [vmem:[%s4 + $0x38] sm:$0xff]
      %v333 = vld [vmem:[%s4 + $0x40] sm:$0xff]
      %v334 = vld [vmem:[%s4 + $0x48] sm:$0xff]
      %v335 = vld [vmem:[%s4 + $0x50] sm:$0xff]
      %v336 = vld [vmem:[%s4 + $0x58] sm:$0xff]
      %v337 = vld [vmem:[%s4 + $0x60] sm:$0xff]
      %v338 = vld [vmem:[%s4 + $0x68] sm:$0xff]
      %v339 = vld [vmem:[%s4 + $0x70] sm:$0xff]
      %v340 = vld [vmem:[%s4 + $0x78] sm:$0xff]
      %v341 = vld [vmem:[%s5] sm:$0x1]
      %v342 = vld [vmem:[%s6] sm:$0x1]
      %v343 = vmul.f32 %v307, %v306
      %344 = vadd.xlane.f32.xlu0 %v343
      %v345 = vpop.xlane.xlu0 %344
      %v346 = vmul.f32 %v341, %v307
      %vm347 = vcmask 1040384
      %v348 = vsel %vm347, %v346, 0.0
      %349 = vadd.xlane.f32.xlu0 %v348
      %v350 = vpop.xlane.xlu0 %349
      %351 = vmatprep.subr.mxu0 0.0
      %352 = vmatpush1.msra.mxu0 %v309
      %353 = vmatprep.subr.mxu0 0.0
      %354 = vmatpush1.msra.mxu0 %v310
      %355 = vmatprep.subr.mxu0 0.0
      %356 = vmatpush1.msra.mxu0 %v311
      %357 = vmatprep.subr.mxu0 0.0
      %358 = vmatpush1.msra.mxu0 %v312
      %359 = vmatprep.subr.mxu0 0.0
      %360 = vmatpush1.msra.mxu0 %v313
      %361 = vmatprep.subr.mxu0 0.0
      %362 = vmatpush1.msra.mxu0 %v314
      %363 = vmatprep.subr.mxu0 0.0
      %364 = vmatpush1.msra.mxu0 %v315
      %365 = vmatprep.subr.mxu0 0.0
      %366 = vmatpush1.msra.mxu0 %v316
      %367 = vmatprep.subr.mxu0 0.0
      %368 = vmatpush1.msra.mxu0 %v317
      %369 = vmatprep.subr.mxu0 0.0
      %370 = vmatpush1.msra.mxu0 %v318
      %371 = vmatprep.subr.mxu0 0.0
      %372 = vmatpush1.msra.mxu0 %v319
      %373 = vmatprep.subr.mxu0 0.0
      %374 = vmatpush1.msra.mxu0 %v320
      %375 = vmatprep.subr.mxu0 0.0
      %376 = vmatpush1.msra.mxu0 %v321
      %377 = vmatprep.subr.mxu0 0.0
      %378 = vmatpush1.msra.mxu0 %v322
      %379 = vmatprep.subr.mxu0 0.0
      %380 = vmatpush1.msra.mxu0 %v323
      %381 = vmatprep.subr.mxu0 0.0
      %382 = vmatpush1.msra.mxu0 %v324
      %383 = vmatprep.subr.mxu0 0.0
      %384 = vmatpush1.msra.mxu0 0.0
      %385 = vmatprep.subr.mxu0 0.0
      %386 = vmatpush1.msra.mxu0 0.0
      %387 = vmatprep.subr.mxu0 0.0
      %388 = vmatpush1.msra.mxu0 0.0
      %389 = vmatprep.subr.mxu0 0.0
      %390 = vmatpush1.msra.mxu0 0.0
      %391 = vmatprep.subr.mxu0 0.0
      %392 = vmatpush1.msra.mxu0 0.0
      %393 = vmatprep.subr.mxu0 0.0
      %394 = vmatpush1.msra.mxu0 0.0
      %395 = vmatprep.subr.mxu0 0.0
      %396 = vmatpush1.msra.mxu0 0.0
      %397 = vmatprep.subr.mxu0 0.0
      %398 = vmatpush1.msra.mxu0 0.0
      %399 = vmatprep.subr.mxu0 0.0
      %400 = vmatpush1.msra.mxu0 0.0
      %401 = vmatprep.subr.mxu0 0.0
      %402 = vmatpush1.msra.mxu0 0.0
      %403 = vmatprep.subr.mxu0 0.0
      %404 = vmatpush1.msra.mxu0 0.0
      %405 = vmatprep.subr.mxu0 0.0
      %406 = vmatpush1.msra.mxu0 0.0
      %407 = vmatprep.subr.mxu0 0.0
      %408 = vmatpush1.msra.mxu0 0.0
      %409 = vmatprep.subr.mxu0 0.0
      %410 = vmatpush1.msra.mxu0 0.0
      %411 = vmatprep.subr.mxu0 0.0
      %412 = vmatpush1.msra.mxu0 0.0
      %413 = vmatprep.subr.mxu0 0.0
      %414 = vmatpush1.msra.mxu0 0.0
      %415 = vmatprep.mubr.f32.mxu0 0.0
      %416 = vmatmul.mubr.f32.gmra.mrb[0].mxu0 %v307
      %v417 = vpop.f32.mrb[0].mxu0
      %v418 = vadd.f32 0.0, %v417
      %v419 = vpop.f32.mrb[0].mxu0
      %420 = vdwg.mxu0
      %v422 = vrot.slane %v307, 1
      %v424 = vmul.f32 %v418, %v422
      %vm425 = vcmask 1046528
      %v426 = vsel %vm425, %v424, 0.0
      %427 = vadd.xlane.f32.xlu0 %v426
      %v428 = vpop.xlane.xlu0 %427
      %v430 = vrot.slane %v345, 1
      %v432 = vadd.f32 %v428, %v430
      %v434 = vrot.slane %v308, 1
      %v436 = vmul.f32 %v432, %v434
      %vm437 = vcmask 6144
      %v438 = vsel %vm437, %v436, 0.0
      %v439 = vrot.slane %v438, 4
      %v440 = vadd.f32 %v438, %v439
      %v441 = vrot.slane %v440, 2
      %v442 = vadd.f32 %v440, %v441
      %v443 = vrot.slane %v442, 1
      %v444 = vadd.f32 %v442, %v443
      %vm445 = vcmask 7168
      %v446 = vsel %vm445, %v308, 0.0
      %v447 = vrot.slane %v446, 4
      %v448 = vadd.f32 %v446, %v447
      %v449 = vrot.slane %v448, 2
      %v450 = vadd.f32 %v448, %v449
      %v451 = vrot.slane %v450, 1
      %v452 = vadd.f32 %v450, %v451
      %v453 = vcvt.f32.s32.to.zero.pseudo %v452
      %v454 = vlaneseq
      %v455 = vshrl.u32 %v454, 7
      %v456 = vsub.s32 %v453, 1
      %vm457 = vcmp.eq.s32.totalorder %v455, %v456
      %v458 = vsel %vm457, 1, 0
      %v459 = vcvt.s32.f32 %v458
      %461 = vset.pattern.permute.xlu0 0
      %462 = vperm.xlu0 %461, %v459
      %v463 = vpop.permute.xlu0 %462
      %v465 = vmul.f32 %v463, %v307
      %v466 = vrot.slane %v465, 4
      %v467 = vadd.f32 %v465, %v466
      %v468 = vrot.slane %v467, 2
      %v469 = vadd.f32 %v467, %v468
      %v470 = vrot.slane %v469, 1
      %v471 = vadd.f32 %v469, %v470
      %v472 = vmul.f32 %v471, %v342
      %v473 = vsel %vm347, %v472, 0.0
      %474 = vadd.xlane.f32.xlu0 %v473
      %v475 = vpop.xlane.xlu0 %474
      %v476 = vadd.f32 %v350, %v345
      %v477 = vadd.f32 %v476, %v444
      %v478 = vadd.f32 %v477, %v475
      %v479 = vadd.f32 %v341, %v306
      %v480 = vld [vmem:[%s294 + $0x1] sm:$0x1]
      %v481 = vld [vmem:[%s302 + $0x1] sm:$0x1]
      %v483 = vlaneseq
      %v484 = vshrl.u32 %v483, 7
      %v485 = vsub.s32 0, %v484
      %v486 = vrot.slane %v479, %v485
      %v488 = vadd.f32 %v486, %v325
      %v489 = vadd.f32 %v486, %v326
      %v490 = vadd.f32 %v486, %v327
      %v491 = vadd.f32 %v486, %v328
      %v492 = vadd.f32 %v486, %v329
      %v493 = vadd.f32 %v486, %v330
      %v494 = vadd.f32 %v486, %v331
      %v495 = vadd.f32 %v486, %v332
      %v496 = vadd.f32 %v486, %v333
      %v497 = vadd.f32 %v486, %v334
      %v498 = vadd.f32 %v486, %v335
      %v499 = vadd.f32 %v486, %v336
      %v500 = vadd.f32 %v486, %v337
      %v501 = vadd.f32 %v486, %v338
      %v502 = vadd.f32 %v486, %v339
      %v503 = vadd.f32 %v486, %v340
      %504 = vmax.xlane.f32.xlu0 %v488
      %v505 = vpop.xlane.xlu0 %504
      %506 = vmax.xlane.f32.xlu0 %v489
      %v507 = vpop.xlane.xlu0 %506
      %508 = vmax.xlane.f32.xlu0 %v490
      %v509 = vpop.xlane.xlu0 %508
      %510 = vmax.xlane.f32.xlu0 %v491
      %v511 = vpop.xlane.xlu0 %510
      %512 = vmax.xlane.f32.xlu0 %v492
      %v513 = vpop.xlane.xlu0 %512
      %514 = vmax.xlane.f32.xlu0 %v493
      %v515 = vpop.xlane.xlu0 %514
      %516 = vmax.xlane.f32.xlu0 %v494
      %v517 = vpop.xlane.xlu0 %516
      %518 = vmax.xlane.f32.xlu0 %v495
      %v519 = vpop.xlane.xlu0 %518
      %520 = vmax.xlane.f32.xlu0 %v496
      %v521 = vpop.xlane.xlu0 %520
      %522 = vmax.xlane.f32.xlu0 %v497
      %v523 = vpop.xlane.xlu0 %522
      %524 = vmax.xlane.f32.xlu0 %v498
      %v525 = vpop.xlane.xlu0 %524
      %526 = vmax.xlane.f32.xlu0 %v499
      %v527 = vpop.xlane.xlu0 %526
      %528 = vmax.xlane.f32.xlu0 %v500
      %v529 = vpop.xlane.xlu0 %528
      %530 = vmax.xlane.f32.xlu0 %v501
      %v531 = vpop.xlane.xlu0 %530
      %532 = vmax.xlane.f32.xlu0 %v502
      %v533 = vpop.xlane.xlu0 %532
      %534 = vmax.xlane.f32.xlu0 %v503
      %v535 = vpop.xlane.xlu0 %534
      %v536 = vsub.f32 %v488, %v505
      %v537 = vsub.f32 %v489, %v507
      %v538 = vsub.f32 %v490, %v509
      %v539 = vsub.f32 %v491, %v511
      %v540 = vsub.f32 %v492, %v513
      %v541 = vsub.f32 %v493, %v515
      %v542 = vsub.f32 %v494, %v517
      %v543 = vsub.f32 %v495, %v519
      %v544 = vsub.f32 %v496, %v521
      %v545 = vsub.f32 %v497, %v523
      %v546 = vsub.f32 %v498, %v525
      %v547 = vsub.f32 %v499, %v527
      %v548 = vsub.f32 %v500, %v529
      %v549 = vsub.f32 %v501, %v531
      %v550 = vsub.f32 %v502, %v533
      %v551 = vsub.f32 %v503, %v535
      %v552 = vmul.f32 %v536, 1.442695
      %v553 = vpow.pop %v552
      %v554 = vmul.f32 %v537, 1.442695
      %v555 = vpow.pop %v554
      %v556 = vmul.f32 %v538, 1.442695
      %v557 = vpow.pop %v556
      %v558 = vmul.f32 %v539, 1.442695
      %v559 = vpow.pop %v558
      %v560 = vmul.f32 %v540, 1.442695
      %v561 = vpow.pop %v560
      %v562 = vmul.f32 %v541, 1.442695
      %v563 = vpow.pop %v562
      %v564 = vmul.f32 %v542, 1.442695
      %v565 = vpow.pop %v564
      %v566 = vmul.f32 %v543, 1.442695
      %v567 = vpow.pop %v566
      %v568 = vmul.f32 %v544, 1.442695
      %v569 = vpow.pop %v568
      %v570 = vmul.f32 %v545, 1.442695
      %v571 = vpow.pop %v570
      %v572 = vmul.f32 %v546, 1.442695
      %v573 = vpow.pop %v572
      %v574 = vmul.f32 %v547, 1.442695
      %v575 = vpow.pop %v574
      %v576 = vmul.f32 %v548, 1.442695
      %v577 = vpow.pop %v576
      %v578 = vmul.f32 %v549, 1.442695
      %v579 = vpow.pop %v578
      %v580 = vmul.f32 %v550, 1.442695
      %v581 = vpow.pop %v580
      %v582 = vmul.f32 %v551, 1.442695
      %v583 = vpow.pop %v582
      %584 = vadd.xlane.f32.xlu0 %v553
      %v585 = vpop.xlane.xlu0 %584
      %586 = vadd.xlane.f32.xlu0 %v555
      %v587 = vpop.xlane.xlu0 %586
      %588 = vadd.xlane.f32.xlu0 %v557
      %v589 = vpop.xlane.xlu0 %588
      %590 = vadd.xlane.f32.xlu0 %v559
      %v591 = vpop.xlane.xlu0 %590
      %592 = vadd.xlane.f32.xlu0 %v561
      %v593 = vpop.xlane.xlu0 %592
      %594 = vadd.xlane.f32.xlu0 %v563
      %v595 = vpop.xlane.xlu0 %594
      %596 = vadd.xlane.f32.xlu0 %v565
      %v597 = vpop.xlane.xlu0 %596
      %598 = vadd.xlane.f32.xlu0 %v567
      %v599 = vpop.xlane.xlu0 %598
      %600 = vadd.xlane.f32.xlu0 %v569
      %v601 = vpop.xlane.xlu0 %600
      %602 = vadd.xlane.f32.xlu0 %v571
      %v603 = vpop.xlane.xlu0 %602
      %604 = vadd.xlane.f32.xlu0 %v573
      %v605 = vpop.xlane.xlu0 %604
      %606 = vadd.xlane.f32.xlu0 %v575
      %v607 = vpop.xlane.xlu0 %606
      %608 = vadd.xlane.f32.xlu0 %v577
      %v609 = vpop.xlane.xlu0 %608
      %610 = vadd.xlane.f32.xlu0 %v579
      %v611 = vpop.xlane.xlu0 %610
      %612 = vadd.xlane.f32.xlu0 %v581
      %v613 = vpop.xlane.xlu0 %612
      %614 = vadd.xlane.f32.xlu0 %v583
      %v615 = vpop.xlane.xlu0 %614
      %v616 = vlog2.pop %v585
      %v617 = vmul.f32 %v616, 0.6931472
      %v618 = vlog2.pop %v587
      %v619 = vmul.f32 %v618, 0.6931472
      %v620 = vlog2.pop %v589
      %v621 = vmul.f32 %v620, 0.6931472
      %v622 = vlog2.pop %v591
      %v623 = vmul.f32 %v622, 0.6931472
      %v624 = vlog2.pop %v593
      %v625 = vmul.f32 %v624, 0.6931472
      %v626 = vlog2.pop %v595
      %v627 = vmul.f32 %v626, 0.6931472
      %v628 = vlog2.pop %v597
      %v629 = vmul.f32 %v628, 0.6931472
      %v630 = vlog2.pop %v599
      %v631 = vmul.f32 %v630, 0.6931472
      %v632 = vlog2.pop %v601
      %v633 = vmul.f32 %v632, 0.6931472
      %v634 = vlog2.pop %v603
      %v635 = vmul.f32 %v634, 0.6931472
      %v636 = vlog2.pop %v605
      %v637 = vmul.f32 %v636, 0.6931472
      %v638 = vlog2.pop %v607
      %v639 = vmul.f32 %v638, 0.6931472
      %v640 = vlog2.pop %v609
      %v641 = vmul.f32 %v640, 0.6931472
      %v642 = vlog2.pop %v611
      %v643 = vmul.f32 %v642, 0.6931472
      %v644 = vlog2.pop %v613
      %v645 = vmul.f32 %v644, 0.6931472
      %v646 = vlog2.pop %v615
      %v647 = vmul.f32 %v646, 0.6931472
      %v648 = vadd.f32 %v617, %v505
      %v649 = vadd.f32 %v619, %v507
      %v650 = vadd.f32 %v621, %v509
      %v651 = vadd.f32 %v623, %v511
      %v652 = vadd.f32 %v625, %v513
      %v653 = vadd.f32 %v627, %v515
      %v654 = vadd.f32 %v629, %v517
      %v655 = vadd.f32 %v631, %v519
      %v656 = vadd.f32 %v633, %v521
      %v657 = vadd.f32 %v635, %v523
      %v658 = vadd.f32 %v637, %v525
      %v659 = vadd.f32 %v639, %v527
      %v660 = vadd.f32 %v641, %v529
      %v661 = vadd.f32 %v643, %v531
      %v662 = vadd.f32 %v645, %v533
      %v663 = vadd.f32 %v647, %v535
      %664 = vxpose.xlu0.b32.start [1/16] %v648, 128
      %665 = vxpose.xlu0.b32.cont [2/16] %v649, 128
      %666 = vxpose.xlu0.b32.cont [3/16] %v650, 128
      %667 = vxpose.xlu0.b32.cont [4/16] %v651, 128
      %668 = vxpose.xlu0.b32.cont [5/16] %v652, 128
      %669 = vxpose.xlu0.b32.cont [6/16] %v653, 128
      %670 = vxpose.xlu0.b32.cont [7/16] %v654, 128
      %671 = vxpose.xlu0.b32.cont [8/16] %v655, 128
      %672 = vxpose.xlu0.b32.cont [9/16] %v656, 128
      %673 = vxpose.xlu0.b32.cont [10/16] %v657, 128
      %674 = vxpose.xlu0.b32.cont [11/16] %v658, 128
      %675 = vxpose.xlu0.b32.cont [12/16] %v659, 128
      %676 = vxpose.xlu0.b32.cont [13/16] %v660, 128
      %677 = vxpose.xlu0.b32.cont [14/16] %v661, 128
      %678 = vxpose.xlu0.b32.cont [15/16] %v662, 128
      %679 = vxpose.xlu0.b32.end [16/16] %v663, 128
      %v680 = vpop.trf.xlu0
      %v681 = vpop.trf.xlu0
      %v682 = vpop.trf.xlu0
      %v683 = vpop.trf.xlu0
      %v684 = vpop.trf.xlu0
      %v685 = vpop.trf.xlu0
      %v686 = vpop.trf.xlu0
      %v687 = vpop.trf.xlu0
      %v688 = vpop.trf.xlu0
      %v689 = vpop.trf.xlu0
      %v690 = vpop.trf.xlu0
      %v691 = vpop.trf.xlu0
      %v692 = vpop.trf.xlu0
      %v693 = vpop.trf.xlu0
      %v694 = vpop.trf.xlu0
      %v695 = vpop.trf.xlu0
      %v696 = vadd.f32 %v680, %v480
      %698 = vset.pattern.permute.xlu0 0
      %699 = vperm.xlu0 %698, %v481
      %v700 = vpop.permute.xlu0 %699
      %v702 = vmul.f32 %v700, %v696
      %v703 = vsub.f32 1.0, %v481
      %705 = vset.pattern.permute.xlu0 0
      %706 = vperm.xlu0 %705, %v703
      %v707 = vpop.permute.xlu0 %706
      %v709 = vmul.f32 %v707, %v479
      %v710 = vadd.f32 %v702, %v709
      %v711 = vld [vmem:[%s294 + $0x2] sm:$0x1]
      %v712 = vld [vmem:[%s302 + $0x2] sm:$0x1]
      %v713 = vlaneseq
      %v714 = vshrl.u32 %v713, 7
      %v715 = vsub.s32 0, %v714
      %v716 = vrot.slane %v710, %v715
      %v717 = vadd.f32 %v716, %v325
      %v718 = vadd.f32 %v716, %v326
      %v719 = vadd.f32 %v716, %v327
      %v720 = vadd.f32 %v716, %v328
      %v721 = vadd.f32 %v716, %v329
      %v722 = vadd.f32 %v716, %v330
      %v723 = vadd.f32 %v716, %v331
      %v724 = vadd.f32 %v716, %v332
      %v725 = vadd.f32 %v716, %v333
      %v726 = vadd.f32 %v716, %v334
      %v727 = vadd.f32 %v716, %v335
      %v728 = vadd.f32 %v716, %v336
      %v729 = vadd.f32 %v716, %v337
      %v730 = vadd.f32 %v716, %v338
      %v731 = vadd.f32 %v716, %v339
      %v732 = vadd.f32 %v716, %v340
      %733 = vmax.xlane.f32.xlu0 %v717
      %v734 = vpop.xlane.xlu0 %733
      %735 = vmax.xlane.f32.xlu0 %v718
      %v736 = vpop.xlane.xlu0 %735
      %737 = vmax.xlane.f32.xlu0 %v719
      %v738 = vpop.xlane.xlu0 %737
      %739 = vmax.xlane.f32.xlu0 %v720
      %v740 = vpop.xlane.xlu0 %739
      %741 = vmax.xlane.f32.xlu0 %v721
      %v742 = vpop.xlane.xlu0 %741
      %743 = vmax.xlane.f32.xlu0 %v722
      %v744 = vpop.xlane.xlu0 %743
      %745 = vmax.xlane.f32.xlu0 %v723
      %v746 = vpop.xlane.xlu0 %745
      %747 = vmax.xlane.f32.xlu0 %v724
      %v748 = vpop.xlane.xlu0 %747
      %749 = vmax.xlane.f32.xlu0 %v725
      %v750 = vpop.xlane.xlu0 %749
      %751 = vmax.xlane.f32.xlu0 %v726
      %v752 = vpop.xlane.xlu0 %751
      %753 = vmax.xlane.f32.xlu0 %v727
      %v754 = vpop.xlane.xlu0 %753
      %755 = vmax.xlane.f32.xlu0 %v728
      %v756 = vpop.xlane.xlu0 %755
      %757 = vmax.xlane.f32.xlu0 %v729
      %v758 = vpop.xlane.xlu0 %757
      %759 = vmax.xlane.f32.xlu0 %v730
      %v760 = vpop.xlane.xlu0 %759
      %761 = vmax.xlane.f32.xlu0 %v731
      %v762 = vpop.xlane.xlu0 %761
      %763 = vmax.xlane.f32.xlu0 %v732
      %v764 = vpop.xlane.xlu0 %763
      %v765 = vsub.f32 %v717, %v734
      %v766 = vsub.f32 %v718, %v736
      %v767 = vsub.f32 %v719, %v738
      %v768 = vsub.f32 %v720, %v740
      %v769 = vsub.f32 %v721, %v742
      %v770 = vsub.f32 %v722, %v744
      %v771 = vsub.f32 %v723, %v746
      %v772 = vsub.f32 %v724, %v748
      %v773 = vsub.f32 %v725, %v750
      %v774 = vsub.f32 %v726, %v752
      %v775 = vsub.f32 %v727, %v754
      %v776 = vsub.f32 %v728, %v756
      %v777 = vsub.f32 %v729, %v758
      %v778 = vsub.f32 %v730, %v760
      %v779 = vsub.f32 %v731, %v762
      %v780 = vsub.f32 %v732, %v764
      %v781 = vmul.f32 %v765, 1.442695
      %v782 = vpow.pop %v781
      %v783 = vmul.f32 %v766, 1.442695
      %v784 = vpow.pop %v783
      %v785 = vmul.f32 %v767, 1.442695
      %v786 = vpow.pop %v785
      %v787 = vmul.f32 %v768, 1.442695
      %v788 = vpow.pop %v787
      %v789 = vmul.f32 %v769, 1.442695
      %v790 = vpow.pop %v789
      %v791 = vmul.f32 %v770, 1.442695
      %v792 = vpow.pop %v791
      %v793 = vmul.f32 %v771, 1.442695
      %v794 = vpow.pop %v793
      %v795 = vmul.f32 %v772, 1.442695
      %v796 = vpow.pop %v795
      %v797 = vmul.f32 %v773, 1.442695
      %v798 = vpow.pop %v797
      %v799 = vmul.f32 %v774, 1.442695
      %v800 = vpow.pop %v799
      %v801 = vmul.f32 %v775, 1.442695
      %v802 = vpow.pop %v801
      %v803 = vmul.f32 %v776, 1.442695
      %v804 = vpow.pop %v803
      %v805 = vmul.f32 %v777, 1.442695
      %v806 = vpow.pop %v805
      %v807 = vmul.f32 %v778, 1.442695
      %v808 = vpow.pop %v807
      %v809 = vmul.f32 %v779, 1.442695
      %v810 = vpow.pop %v809
      %v811 = vmul.f32 %v780, 1.442695
      %v812 = vpow.pop %v811
      %813 = vadd.xlane.f32.xlu0 %v782
      %v814 = vpop.xlane.xlu0 %813
      %815 = vadd.xlane.f32.xlu0 %v784
      %v816 = vpop.xlane.xlu0 %815
      %817 = vadd.xlane.f32.xlu0 %v786
      %v818 = vpop.xlane.xlu0 %817
      %819 = vadd.xlane.f32.xlu0 %v788
      %v820 = vpop.xlane.xlu0 %819
      %821 = vadd.xlane.f32.xlu0 %v790
      %v822 = vpop.xlane.xlu0 %821
      %823 = vadd.xlane.f32.xlu0 %v792
      %v824 = vpop.xlane.xlu0 %823
      %825 = vadd.xlane.f32.xlu0 %v794
      %v826 = vpop.xlane.xlu0 %825
      %827 = vadd.xlane.f32.xlu0 %v796
      %v828 = vpop.xlane.xlu0 %827
      %829 = vadd.xlane.f32.xlu0 %v798
      %v830 = vpop.xlane.xlu0 %829
      %831 = vadd.xlane.f32.xlu0 %v800
      %v832 = vpop.xlane.xlu0 %831
      %833 = vadd.xlane.f32.xlu0 %v802
      %v834 = vpop.xlane.xlu0 %833
      %835 = vadd.xlane.f32.xlu0 %v804
      %v836 = vpop.xlane.xlu0 %835
      %837 = vadd.xlane.f32.xlu0 %v806
      %v838 = vpop.xlane.xlu0 %837
      %839 = vadd.xlane.f32.xlu0 %v808
      %v840 = vpop.xlane.xlu0 %839
      %841 = vadd.xlane.f32.xlu0 %v810
      %v842 = vpop.xlane.xlu0 %841
      %843 = vadd.xlane.f32.xlu0 %v812
      %v844 = vpop.xlane.xlu0 %843
      %v845 = vlog2.pop %v814
      %v846 = vmul.f32 %v845, 0.6931472
      %v847 = vlog2.pop %v816
      %v848 = vmul.f32 %v847, 0.6931472
      %v849 = vlog2.pop %v818
      %v850 = vmul.f32 %v849, 0.6931472
      %v851 = vlog2.pop %v820
      %v852 = vmul.f32 %v851, 0.6931472
      %v853 = vlog2.pop %v822
      %v854 = vmul.f32 %v853, 0.6931472
      %v855 = vlog2.pop %v824
      %v856 = vmul.f32 %v855, 0.6931472
      %v857 = vlog2.pop %v826
      %v858 = vmul.f32 %v857, 0.6931472
      %v859 = vlog2.pop %v828
      %v860 = vmul.f32 %v859, 0.6931472
      %v861 = vlog2.pop %v830
      %v862 = vmul.f32 %v861, 0.6931472
      %v863 = vlog2.pop %v832
      %v864 = vmul.f32 %v863, 0.6931472
      %v865 = vlog2.pop %v834
      %v866 = vmul.f32 %v865, 0.6931472
      %v867 = vlog2.pop %v836
      %v868 = vmul.f32 %v867, 0.6931472
      %v869 = vlog2.pop %v838
      %v870 = vmul.f32 %v869, 0.6931472
      %v871 = vlog2.pop %v840
      %v872 = vmul.f32 %v871, 0.6931472
      %v873 = vlog2.pop %v842
      %v874 = vmul.f32 %v873, 0.6931472
      %v875 = vlog2.pop %v844
      %v876 = vmul.f32 %v875, 0.6931472
      %v877 = vadd.f32 %v846, %v734
      %v878 = vadd.f32 %v848, %v736
      %v879 = vadd.f32 %v850, %v738
      %v880 = vadd.f32 %v852, %v740
      %v881 = vadd.f32 %v854, %v742
      %v882 = vadd.f32 %v856, %v744
      %v883 = vadd.f32 %v858, %v746
      %v884 = vadd.f32 %v860, %v748
      %v885 = vadd.f32 %v862, %v750
      %v886 = vadd.f32 %v864, %v752
      %v887 = vadd.f32 %v866, %v754
      %v888 = vadd.f32 %v868, %v756
      %v889 = vadd.f32 %v870, %v758
      %v890 = vadd.f32 %v872, %v760
      %v891 = vadd.f32 %v874, %v762
      %v892 = vadd.f32 %v876, %v764
      %893 = vxpose.xlu0.b32.start [1/16] %v877, 128
      %894 = vxpose.xlu0.b32.cont [2/16] %v878, 128
      %895 = vxpose.xlu0.b32.cont [3/16] %v879, 128
      %896 = vxpose.xlu0.b32.cont [4/16] %v880, 128
      %897 = vxpose.xlu0.b32.cont [5/16] %v881, 128
      %898 = vxpose.xlu0.b32.cont [6/16] %v882, 128
      %899 = vxpose.xlu0.b32.cont [7/16] %v883, 128
      %900 = vxpose.xlu0.b32.cont [8/16] %v884, 128
      %901 = vxpose.xlu0.b32.cont [9/16] %v885, 128
      %902 = vxpose.xlu0.b32.cont [10/16] %v886, 128
      %903 = vxpose.xlu0.b32.cont [11/16] %v887, 128
      %904 = vxpose.xlu0.b32.cont [12/16] %v888, 128
      %905 = vxpose.xlu0.b32.cont [13/16] %v889, 128
      %906 = vxpose.xlu0.b32.cont [14/16] %v890, 128
      %907 = vxpose.xlu0.b32.cont [15/16] %v891, 128
      %908 = vxpose.xlu0.b32.end [16/16] %v892, 128
      %v909 = vpop.trf.xlu0
      %v910 = vpop.trf.xlu0
      %v911 = vpop.trf.xlu0
      %v912 = vpop.trf.xlu0
      %v913 = vpop.trf.xlu0
      %v914 = vpop.trf.xlu0
      %v915 = vpop.trf.xlu0
      %v916 = vpop.trf.xlu0
      %v917 = vpop.trf.xlu0
      %v918 = vpop.trf.xlu0
      %v919 = vpop.trf.xlu0
      %v920 = vpop.trf.xlu0
      %v921 = vpop.trf.xlu0
      %v922 = vpop.trf.xlu0
      %v923 = vpop.trf.xlu0
      %v924 = vpop.trf.xlu0
      %v925 = vadd.f32 %v909, %v711
      %927 = vset.pattern.permute.xlu0 0
      %928 = vperm.xlu0 %927, %v712
      %v929 = vpop.permute.xlu0 %928
      %v931 = vmul.f32 %v929, %v925
      %v932 = vsub.f32 1.0, %v712
      %934 = vset.pattern.permute.xlu0 0
      %935 = vperm.xlu0 %934, %v932
      %v936 = vpop.permute.xlu0 %935
      %v938 = vmul.f32 %v936, %v710
      %v939 = vadd.f32 %v931, %v938
      %v940 = vld [vmem:[%s294 + $0x3] sm:$0x1]
      %v941 = vld [vmem:[%s302 + $0x3] sm:$0x1]
      %v942 = vlaneseq
      %v943 = vshrl.u32 %v942, 7
      %v944 = vsub.s32 0, %v943
      %v945 = vrot.slane %v939, %v944
      %v946 = vadd.f32 %v945, %v325
      %v947 = vadd.f32 %v945, %v326
      %v948 = vadd.f32 %v945, %v327
      %v949 = vadd.f32 %v945, %v328
      %v950 = vadd.f32 %v945, %v329
      %v951 = vadd.f32 %v945, %v330
      %v952 = vadd.f32 %v945, %v331
      %v953 = vadd.f32 %v945, %v332
      %v954 = vadd.f32 %v945, %v333
      %v955 = vadd.f32 %v945, %v334
      %v956 = vadd.f32 %v945, %v335
      %v957 = vadd.f32 %v945, %v336
      %v958 = vadd.f32 %v945, %v337
      %v959 = vadd.f32 %v945, %v338
      %v960 = vadd.f32 %v945, %v339
      %v961 = vadd.f32 %v945, %v340
      %962 = vmax.xlane.f32.xlu0 %v946
      %v963 = vpop.xlane.xlu0 %962
      %964 = vmax.xlane.f32.xlu0 %v947
      %v965 = vpop.xlane.xlu0 %964
      %966 = vmax.xlane.f32.xlu0 %v948
      %v967 = vpop.xlane.xlu0 %966
      %968 = vmax.xlane.f32.xlu0 %v949
      %v969 = vpop.xlane.xlu0 %968
      %970 = vmax.xlane.f32.xlu0 %v950
      %v971 = vpop.xlane.xlu0 %970
      %972 = vmax.xlane.f32.xlu0 %v951
      %v973 = vpop.xlane.xlu0 %972
      %974 = vmax.xlane.f32.xlu0 %v952
      %v975 = vpop.xlane.xlu0 %974
      %976 = vmax.xlane.f32.xlu0 %v953
      %v977 = vpop.xlane.xlu0 %976
      %978 = vmax.xlane.f32.xlu0 %v954
      %v979 = vpop.xlane.xlu0 %978
      %980 = vmax.xlane.f32.xlu0 %v955
      %v981 = vpop.xlane.xlu0 %980
      %982 = vmax.xlane.f32.xlu0 %v956
      %v983 = vpop.xlane.xlu0 %982
      %984 = vmax.xlane.f32.xlu0 %v957
      %v985 = vpop.xlane.xlu0 %984
      %986 = vmax.xlane.f32.xlu0 %v958
      %v987 = vpop.xlane.xlu0 %986
      %988 = vmax.xlane.f32.xlu0 %v959
      %v989 = vpop.xlane.xlu0 %988
      %990 = vmax.xlane.f32.xlu0 %v960
      %v991 = vpop.xlane.xlu0 %990
      %992 = vmax.xlane.f32.xlu0 %v961
      %v993 = vpop.xlane.xlu0 %992
      %v994 = vsub.f32 %v946, %v963
      %v995 = vsub.f32 %v947, %v965
      %v996 = vsub.f32 %v948, %v967
      %v997 = vsub.f32 %v949, %v969
      %v998 = vsub.f32 %v950, %v971
      %v999 = vsub.f32 %v951, %v973
      %v1000 = vsub.f32 %v952, %v975
      %v1001 = vsub.f32 %v953, %v977
      %v1002 = vsub.f32 %v954, %v979
      %v1003 = vsub.f32 %v955, %v981
      %v1004 = vsub.f32 %v956, %v983
      %v1005 = vsub.f32 %v957, %v985
      %v1006 = vsub.f32 %v958, %v987
      %v1007 = vsub.f32 %v959, %v989
      %v1008 = vsub.f32 %v960, %v991
      %v1009 = vsub.f32 %v961, %v993
      %v1010 = vmul.f32 %v994, 1.442695
      %v1011 = vpow.pop %v1010
      %v1012 = vmul.f32 %v995, 1.442695
      %v1013 = vpow.pop %v1012
      %v1014 = vmul.f32 %v996, 1.442695
      %v1015 = vpow.pop %v1014
      %v1016 = vmul.f32 %v997, 1.442695
      %v1017 = vpow.pop %v1016
      %v1018 = vmul.f32 %v998, 1.442695
      %v1019 = vpow.pop %v1018
      %v1020 = vmul.f32 %v999, 1.442695
      %v1021 = vpow.pop %v1020
      %v1022 = vmul.f32 %v1000, 1.442695
      %v1023 = vpow.pop %v1022
      %v1024 = vmul.f32 %v1001, 1.442695
      %v1025 = vpow.pop %v1024
      %v1026 = vmul.f32 %v1002, 1.442695
      %v1027 = vpow.pop %v1026
      %v1028 = vmul.f32 %v1003, 1.442695
      %v1029 = vpow.pop %v1028
      %v1030 = vmul.f32 %v1004, 1.442695
      %v1031 = vpow.pop %v1030
      %v1032 = vmul.f32 %v1005, 1.442695
      %v1033 = vpow.pop %v1032
      %v1034 = vmul.f32 %v1006, 1.442695
      %v1035 = vpow.pop %v1034
      %v1036 = vmul.f32 %v1007, 1.442695
      %v1037 = vpow.pop %v1036
      %v1038 = vmul.f32 %v1008, 1.442695
      %v1039 = vpow.pop %v1038
      %v1040 = vmul.f32 %v1009, 1.442695
      %v1041 = vpow.pop %v1040
      %1042 = vadd.xlane.f32.xlu0 %v1011
      %v1043 = vpop.xlane.xlu0 %1042
      %1044 = vadd.xlane.f32.xlu0 %v1013
      %v1045 = vpop.xlane.xlu0 %1044
      %1046 = vadd.xlane.f32.xlu0 %v1015
      %v1047 = vpop.xlane.xlu0 %1046
      %1048 = vadd.xlane.f32.xlu0 %v1017
      %v1049 = vpop.xlane.xlu0 %1048
      %1050 = vadd.xlane.f32.xlu0 %v1019
      %v1051 = vpop.xlane.xlu0 %1050
      %1052 = vadd.xlane.f32.xlu0 %v1021
      %v1053 = vpop.xlane.xlu0 %1052
      %1054 = vadd.xlane.f32.xlu0 %v1023
      %v1055 = vpop.xlane.xlu0 %1054
      %1056 = vadd.xlane.f32.xlu0 %v1025
      %v1057 = vpop.xlane.xlu0 %1056
      %1058 = vadd.xlane.f32.xlu0 %v1027
      %v1059 = vpop.xlane.xlu0 %1058
      %1060 = vadd.xlane.f32.xlu0 %v1029
      %v1061 = vpop.xlane.xlu0 %1060
      %1062 = vadd.xlane.f32.xlu0 %v1031
      %v1063 = vpop.xlane.xlu0 %1062
      %1064 = vadd.xlane.f32.xlu0 %v1033
      %v1065 = vpop.xlane.xlu0 %1064
      %1066 = vadd.xlane.f32.xlu0 %v1035
      %v1067 = vpop.xlane.xlu0 %1066
      %1068 = vadd.xlane.f32.xlu0 %v1037
      %v1069 = vpop.xlane.xlu0 %1068
      %1070 = vadd.xlane.f32.xlu0 %v1039
      %v1071 = vpop.xlane.xlu0 %1070
      %1072 = vadd.xlane.f32.xlu0 %v1041
      %v1073 = vpop.xlane.xlu0 %1072
      %v1074 = vlog2.pop %v1043
      %v1075 = vmul.f32 %v1074, 0.6931472
      %v1076 = vlog2.pop %v1045
      %v1077 = vmul.f32 %v1076, 0.6931472
      %v1078 = vlog2.pop %v1047
      %v1079 = vmul.f32 %v1078, 0.6931472
      %v1080 = vlog2.pop %v1049
      %v1081 = vmul.f32 %v1080, 0.6931472
      %v1082 = vlog2.pop %v1051
      %v1083 = vmul.f32 %v1082, 0.6931472
      %v1084 = vlog2.pop %v1053
      %v1085 = vmul.f32 %v1084, 0.6931472
      %v1086 = vlog2.pop %v1055
      %v1087 = vmul.f32 %v1086, 0.6931472
      %v1088 = vlog2.pop %v1057
      %v1089 = vmul.f32 %v1088, 0.6931472
      %v1090 = vlog2.pop %v1059
      %v1091 = vmul.f32 %v1090, 0.6931472
      %v1092 = vlog2.pop %v1061
      %v1093 = vmul.f32 %v1092, 0.6931472
      %v1094 = vlog2.pop %v1063
      %v1095 = vmul.f32 %v1094, 0.6931472
      %v1096 = vlog2.pop %v1065
      %v1097 = vmul.f32 %v1096, 0.6931472
      %v1098 = vlog2.pop %v1067
      %v1099 = vmul.f32 %v1098, 0.6931472
      %v1100 = vlog2.pop %v1069
      %v1101 = vmul.f32 %v1100, 0.6931472
      %v1102 = vlog2.pop %v1071
      %v1103 = vmul.f32 %v1102, 0.6931472
      %v1104 = vlog2.pop %v1073
      %v1105 = vmul.f32 %v1104, 0.6931472
      %v1106 = vadd.f32 %v1075, %v963
      %v1107 = vadd.f32 %v1077, %v965
      %v1108 = vadd.f32 %v1079, %v967
      %v1109 = vadd.f32 %v1081, %v969
      %v1110 = vadd.f32 %v1083, %v971
      %v1111 = vadd.f32 %v1085, %v973
      %v1112 = vadd.f32 %v1087, %v975
      %v1113 = vadd.f32 %v1089, %v977
      %v1114 = vadd.f32 %v1091, %v979
      %v1115 = vadd.f32 %v1093, %v981
      %v1116 = vadd.f32 %v1095, %v983
      %v1117 = vadd.f32 %v1097, %v985
      %v1118 = vadd.f32 %v1099, %v987
      %v1119 = vadd.f32 %v1101, %v989
      %v1120 = vadd.f32 %v1103, %v991
      %v1121 = vadd.f32 %v1105, %v993
      %1122 = vxpose.xlu0.b32.start [1/16] %v1106, 128
      %1123 = vxpose.xlu0.b32.cont [2/16] %v1107, 128
      %1124 = vxpose.xlu0.b32.cont [3/16] %v1108, 128
      %1125 = vxpose.xlu0.b32.cont [4/16] %v1109, 128
      %1126 = vxpose.xlu0.b32.cont [5/16] %v1110, 128
      %1127 = vxpose.xlu0.b32.cont [6/16] %v1111, 128
      %1128 = vxpose.xlu0.b32.cont [7/16] %v1112, 128
      %1129 = vxpose.xlu0.b32.cont [8/16] %v1113, 128
      %1130 = vxpose.xlu0.b32.cont [9/16] %v1114, 128
      %1131 = vxpose.xlu0.b32.cont [10/16] %v1115, 128
      %1132 = vxpose.xlu0.b32.cont [11/16] %v1116, 128
      %1133 = vxpose.xlu0.b32.cont [12/16] %v1117, 128
      %1134 = vxpose.xlu0.b32.cont [13/16] %v1118, 128
      %1135 = vxpose.xlu0.b32.cont [14/16] %v1119, 128
      %1136 = vxpose.xlu0.b32.cont [15/16] %v1120, 128
      %1137 = vxpose.xlu0.b32.end [16/16] %v1121, 128
      %v1138 = vpop.trf.xlu0
      %v1139 = vpop.trf.xlu0
      %v1140 = vpop.trf.xlu0
      %v1141 = vpop.trf.xlu0
      %v1142 = vpop.trf.xlu0
      %v1143 = vpop.trf.xlu0
      %v1144 = vpop.trf.xlu0
      %v1145 = vpop.trf.xlu0
      %v1146 = vpop.trf.xlu0
      %v1147 = vpop.trf.xlu0
      %v1148 = vpop.trf.xlu0
      %v1149 = vpop.trf.xlu0
      %v1150 = vpop.trf.xlu0
      %v1151 = vpop.trf.xlu0
      %v1152 = vpop.trf.xlu0
      %v1153 = vpop.trf.xlu0
      %v1154 = vadd.f32 %v1138, %v940
      %1156 = vset.pattern.permute.xlu0 0
      %1157 = vperm.xlu0 %1156, %v941
      %v1158 = vpop.permute.xlu0 %1157
      %v1160 = vmul.f32 %v1158, %v1154
      %v1161 = vsub.f32 1.0, %v941
      %1163 = vset.pattern.permute.xlu0 0
      %1164 = vperm.xlu0 %1163, %v1161
      %v1165 = vpop.permute.xlu0 %1164
      %v1167 = vmul.f32 %v1165, %v939
      %v1168 = vadd.f32 %v1160, %v1167
      %v1169 = vld [vmem:[%s294 + $0x4] sm:$0x1]
      %v1170 = vld [vmem:[%s302 + $0x4] sm:$0x1]
      %v1171 = vlaneseq
      %v1172 = vshrl.u32 %v1171, 7
      %v1173 = vsub.s32 0, %v1172
      %v1174 = vrot.slane %v1168, %v1173
      %v1175 = vadd.f32 %v1174, %v325
      %v1176 = vadd.f32 %v1174, %v326
      %v1177 = vadd.f32 %v1174, %v327
      %v1178 = vadd.f32 %v1174, %v328
      %v1179 = vadd.f32 %v1174, %v329
      %v1180 = vadd.f32 %v1174, %v330
      %v1181 = vadd.f32 %v1174, %v331
      %v1182 = vadd.f32 %v1174, %v332
      %v1183 = vadd.f32 %v1174, %v333
      %v1184 = vadd.f32 %v1174, %v334
      %v1185 = vadd.f32 %v1174, %v335
      %v1186 = vadd.f32 %v1174, %v336
      %v1187 = vadd.f32 %v1174, %v337
      %v1188 = vadd.f32 %v1174, %v338
      %v1189 = vadd.f32 %v1174, %v339
      %v1190 = vadd.f32 %v1174, %v340
      %1191 = vmax.xlane.f32.xlu0 %v1175
      %v1192 = vpop.xlane.xlu0 %1191
      %1193 = vmax.xlane.f32.xlu0 %v1176
      %v1194 = vpop.xlane.xlu0 %1193
      %1195 = vmax.xlane.f32.xlu0 %v1177
      %v1196 = vpop.xlane.xlu0 %1195
      %1197 = vmax.xlane.f32.xlu0 %v1178
      %v1198 = vpop.xlane.xlu0 %1197
      %1199 = vmax.xlane.f32.xlu0 %v1179
      %v1200 = vpop.xlane.xlu0 %1199
      %1201 = vmax.xlane.f32.xlu0 %v1180
      %v1202 = vpop.xlane.xlu0 %1201
      %1203 = vmax.xlane.f32.xlu0 %v1181
      %v1204 = vpop.xlane.xlu0 %1203
      %1205 = vmax.xlane.f32.xlu0 %v1182
      %v1206 = vpop.xlane.xlu0 %1205
      %1207 = vmax.xlane.f32.xlu0 %v1183
      %v1208 = vpop.xlane.xlu0 %1207
      %1209 = vmax.xlane.f32.xlu0 %v1184
      %v1210 = vpop.xlane.xlu0 %1209
      %1211 = vmax.xlane.f32.xlu0 %v1185
      %v1212 = vpop.xlane.xlu0 %1211
      %1213 = vmax.xlane.f32.xlu0 %v1186
      %v1214 = vpop.xlane.xlu0 %1213
      %1215 = vmax.xlane.f32.xlu0 %v1187
      %v1216 = vpop.xlane.xlu0 %1215
      %1217 = vmax.xlane.f32.xlu0 %v1188
      %v1218 = vpop.xlane.xlu0 %1217
      %1219 = vmax.xlane.f32.xlu0 %v1189
      %v1220 = vpop.xlane.xlu0 %1219
      %1221 = vmax.xlane.f32.xlu0 %v1190
      %v1222 = vpop.xlane.xlu0 %1221
      %v1223 = vsub.f32 %v1175, %v1192
      %v1224 = vsub.f32 %v1176, %v1194
      %v1225 = vsub.f32 %v1177, %v1196
      %v1226 = vsub.f32 %v1178, %v1198
      %v1227 = vsub.f32 %v1179, %v1200
      %v1228 = vsub.f32 %v1180, %v1202
      %v1229 = vsub.f32 %v1181, %v1204
      %v1230 = vsub.f32 %v1182, %v1206
      %v1231 = vsub.f32 %v1183, %v1208
      %v1232 = vsub.f32 %v1184, %v1210
      %v1233 = vsub.f32 %v1185, %v1212
      %v1234 = vsub.f32 %v1186, %v1214
      %v1235 = vsub.f32 %v1187, %v1216
      %v1236 = vsub.f32 %v1188, %v1218
      %v1237 = vsub.f32 %v1189, %v1220
      %v1238 = vsub.f32 %v1190, %v1222
      %v1239 = vmul.f32 %v1223, 1.442695
      %v1240 = vpow.pop %v1239
      %v1241 = vmul.f32 %v1224, 1.442695
      %v1242 = vpow.pop %v1241
      %v1243 = vmul.f32 %v1225, 1.442695
      %v1244 = vpow.pop %v1243
      %v1245 = vmul.f32 %v1226, 1.442695
      %v1246 = vpow.pop %v1245
      %v1247 = vmul.f32 %v1227, 1.442695
      %v1248 = vpow.pop %v1247
      %v1249 = vmul.f32 %v1228, 1.442695
      %v1250 = vpow.pop %v1249
      %v1251 = vmul.f32 %v1229, 1.442695
      %v1252 = vpow.pop %v1251
      %v1253 = vmul.f32 %v1230, 1.442695
      %v1254 = vpow.pop %v1253
      %v1255 = vmul.f32 %v1231, 1.442695
      %v1256 = vpow.pop %v1255
      %v1257 = vmul.f32 %v1232, 1.442695
      %v1258 = vpow.pop %v1257
      %v1259 = vmul.f32 %v1233, 1.442695
      %v1260 = vpow.pop %v1259
      %v1261 = vmul.f32 %v1234, 1.442695
      %v1262 = vpow.pop %v1261
      %v1263 = vmul.f32 %v1235, 1.442695
      %v1264 = vpow.pop %v1263
      %v1265 = vmul.f32 %v1236, 1.442695
      %v1266 = vpow.pop %v1265
      %v1267 = vmul.f32 %v1237, 1.442695
      %v1268 = vpow.pop %v1267
      %v1269 = vmul.f32 %v1238, 1.442695
      %v1270 = vpow.pop %v1269
      %1271 = vadd.xlane.f32.xlu0 %v1240
      %v1272 = vpop.xlane.xlu0 %1271
      %1273 = vadd.xlane.f32.xlu0 %v1242
      %v1274 = vpop.xlane.xlu0 %1273
      %1275 = vadd.xlane.f32.xlu0 %v1244
      %v1276 = vpop.xlane.xlu0 %1275
      %1277 = vadd.xlane.f32.xlu0 %v1246
      %v1278 = vpop.xlane.xlu0 %1277
      %1279 = vadd.xlane.f32.xlu0 %v1248
      %v1280 = vpop.xlane.xlu0 %1279
      %1281 = vadd.xlane.f32.xlu0 %v1250
      %v1282 = vpop.xlane.xlu0 %1281
      %1283 = vadd.xlane.f32.xlu0 %v1252
      %v1284 = vpop.xlane.xlu0 %1283
      %1285 = vadd.xlane.f32.xlu0 %v1254
      %v1286 = vpop.xlane.xlu0 %1285
      %1287 = vadd.xlane.f32.xlu0 %v1256
      %v1288 = vpop.xlane.xlu0 %1287
      %1289 = vadd.xlane.f32.xlu0 %v1258
      %v1290 = vpop.xlane.xlu0 %1289
      %1291 = vadd.xlane.f32.xlu0 %v1260
      %v1292 = vpop.xlane.xlu0 %1291
      %1293 = vadd.xlane.f32.xlu0 %v1262
      %v1294 = vpop.xlane.xlu0 %1293
      %1295 = vadd.xlane.f32.xlu0 %v1264
      %v1296 = vpop.xlane.xlu0 %1295
      %1297 = vadd.xlane.f32.xlu0 %v1266
      %v1298 = vpop.xlane.xlu0 %1297
      %1299 = vadd.xlane.f32.xlu0 %v1268
      %v1300 = vpop.xlane.xlu0 %1299
      %1301 = vadd.xlane.f32.xlu0 %v1270
      %v1302 = vpop.xlane.xlu0 %1301
      %v1303 = vlog2.pop %v1272
      %v1304 = vmul.f32 %v1303, 0.6931472
      %v1305 = vlog2.pop %v1274
      %v1306 = vmul.f32 %v1305, 0.6931472
      %v1307 = vlog2.pop %v1276
      %v1308 = vmul.f32 %v1307, 0.6931472
      %v1309 = vlog2.pop %v1278
      %v1310 = vmul.f32 %v1309, 0.6931472
      %v1311 = vlog2.pop %v1280
      %v1312 = vmul.f32 %v1311, 0.6931472
      %v1313 = vlog2.pop %v1282
      %v1314 = vmul.f32 %v1313, 0.6931472
      %v1315 = vlog2.pop %v1284
      %v1316 = vmul.f32 %v1315, 0.6931472
      %v1317 = vlog2.pop %v1286
      %v1318 = vmul.f32 %v1317, 0.6931472
      %v1319 = vlog2.pop %v1288
      %v1320 = vmul.f32 %v1319, 0.6931472
      %v1321 = vlog2.pop %v1290
      %v1322 = vmul.f32 %v1321, 0.6931472
      %v1323 = vlog2.pop %v1292
      %v1324 = vmul.f32 %v1323, 0.6931472
      %v1325 = vlog2.pop %v1294
      %v1326 = vmul.f32 %v1325, 0.6931472
      %v1327 = vlog2.pop %v1296
      %v1328 = vmul.f32 %v1327, 0.6931472
      %v1329 = vlog2.pop %v1298
      %v1330 = vmul.f32 %v1329, 0.6931472
      %v1331 = vlog2.pop %v1300
      %v1332 = vmul.f32 %v1331, 0.6931472
      %v1333 = vlog2.pop %v1302
      %v1334 = vmul.f32 %v1333, 0.6931472
      %v1335 = vadd.f32 %v1304, %v1192
      %v1336 = vadd.f32 %v1306, %v1194
      %v1337 = vadd.f32 %v1308, %v1196
      %v1338 = vadd.f32 %v1310, %v1198
      %v1339 = vadd.f32 %v1312, %v1200
      %v1340 = vadd.f32 %v1314, %v1202
      %v1341 = vadd.f32 %v1316, %v1204
      %v1342 = vadd.f32 %v1318, %v1206
      %v1343 = vadd.f32 %v1320, %v1208
      %v1344 = vadd.f32 %v1322, %v1210
      %v1345 = vadd.f32 %v1324, %v1212
      %v1346 = vadd.f32 %v1326, %v1214
      %v1347 = vadd.f32 %v1328, %v1216
      %v1348 = vadd.f32 %v1330, %v1218
      %v1349 = vadd.f32 %v1332, %v1220
      %v1350 = vadd.f32 %v1334, %v1222
      %1351 = vxpose.xlu0.b32.start [1/16] %v1335, 128
      %1352 = vxpose.xlu0.b32.cont [2/16] %v1336, 128
      %1353 = vxpose.xlu0.b32.cont [3/16] %v1337, 128
      %1354 = vxpose.xlu0.b32.cont [4/16] %v1338, 128
      %1355 = vxpose.xlu0.b32.cont [5/16] %v1339, 128
      %1356 = vxpose.xlu0.b32.cont [6/16] %v1340, 128
      %1357 = vxpose.xlu0.b32.cont [7/16] %v1341, 128
      %1358 = vxpose.xlu0.b32.cont [8/16] %v1342, 128
      %1359 = vxpose.xlu0.b32.cont [9/16] %v1343, 128
      %1360 = vxpose.xlu0.b32.cont [10/16] %v1344, 128
      %1361 = vxpose.xlu0.b32.cont [11/16] %v1345, 128
      %1362 = vxpose.xlu0.b32.cont [12/16] %v1346, 128
      %1363 = vxpose.xlu0.b32.cont [13/16] %v1347, 128
      %1364 = vxpose.xlu0.b32.cont [14/16] %v1348, 128
      %1365 = vxpose.xlu0.b32.cont [15/16] %v1349, 128
      %1366 = vxpose.xlu0.b32.end [16/16] %v1350, 128
      %v1367 = vpop.trf.xlu0
      %v1368 = vpop.trf.xlu0
      %v1369 = vpop.trf.xlu0
      %v1370 = vpop.trf.xlu0
      %v1371 = vpop.trf.xlu0
      %v1372 = vpop.trf.xlu0
      %v1373 = vpop.trf.xlu0
      %v1374 = vpop.trf.xlu0
      %v1375 = vpop.trf.xlu0
      %v1376 = vpop.trf.xlu0
      %v1377 = vpop.trf.xlu0
      %v1378 = vpop.trf.xlu0
      %v1379 = vpop.trf.xlu0
      %v1380 = vpop.trf.xlu0
      %v1381 = vpop.trf.xlu0
      %v1382 = vpop.trf.xlu0
      %v1383 = vadd.f32 %v1367, %v1169
      %1385 = vset.pattern.permute.xlu0 0
      %1386 = vperm.xlu0 %1385, %v1170
      %v1387 = vpop.permute.xlu0 %1386
      %v1389 = vmul.f32 %v1387, %v1383
      %v1390 = vsub.f32 1.0, %v1170
      %1392 = vset.pattern.permute.xlu0 0
      %1393 = vperm.xlu0 %1392, %v1390
      %v1394 = vpop.permute.xlu0 %1393
      %v1396 = vmul.f32 %v1394, %v1168
      %v1397 = vadd.f32 %v1389, %v1396
      %v1398 = vld [vmem:[%s294 + $0x5] sm:$0x1]
      %v1399 = vld [vmem:[%s302 + $0x5] sm:$0x1]
      %v1400 = vlaneseq
      %v1401 = vshrl.u32 %v1400, 7
      %v1402 = vsub.s32 0, %v1401
      %v1403 = vrot.slane %v1397, %v1402
      %v1404 = vadd.f32 %v1403, %v325
      %v1405 = vadd.f32 %v1403, %v326
      %v1406 = vadd.f32 %v1403, %v327
      %v1407 = vadd.f32 %v1403, %v328
      %v1408 = vadd.f32 %v1403, %v329
      %v1409 = vadd.f32 %v1403, %v330
      %v1410 = vadd.f32 %v1403, %v331
      %v1411 = vadd.f32 %v1403, %v332
      %v1412 = vadd.f32 %v1403, %v333
      %v1413 = vadd.f32 %v1403, %v334
      %v1414 = vadd.f32 %v1403, %v335
      %v1415 = vadd.f32 %v1403, %v336
      %v1416 = vadd.f32 %v1403, %v337
      %v1417 = vadd.f32 %v1403, %v338
      %v1418 = vadd.f32 %v1403, %v339
      %v1419 = vadd.f32 %v1403, %v340
      %1420 = vmax.xlane.f32.xlu0 %v1404
      %v1421 = vpop.xlane.xlu0 %1420
      %1422 = vmax.xlane.f32.xlu0 %v1405
      %v1423 = vpop.xlane.xlu0 %1422
      %1424 = vmax.xlane.f32.xlu0 %v1406
      %v1425 = vpop.xlane.xlu0 %1424
      %1426 = vmax.xlane.f32.xlu0 %v1407
      %v1427 = vpop.xlane.xlu0 %1426
      %1428 = vmax.xlane.f32.xlu0 %v1408
      %v1429 = vpop.xlane.xlu0 %1428
      %1430 = vmax.xlane.f32.xlu0 %v1409
      %v1431 = vpop.xlane.xlu0 %1430
      %1432 = vmax.xlane.f32.xlu0 %v1410
      %v1433 = vpop.xlane.xlu0 %1432
      %1434 = vmax.xlane.f32.xlu0 %v1411
      %v1435 = vpop.xlane.xlu0 %1434
      %1436 = vmax.xlane.f32.xlu0 %v1412
      %v1437 = vpop.xlane.xlu0 %1436
      %1438 = vmax.xlane.f32.xlu0 %v1413
      %v1439 = vpop.xlane.xlu0 %1438
      %1440 = vmax.xlane.f32.xlu0 %v1414
      %v1441 = vpop.xlane.xlu0 %1440
      %1442 = vmax.xlane.f32.xlu0 %v1415
      %v1443 = vpop.xlane.xlu0 %1442
      %1444 = vmax.xlane.f32.xlu0 %v1416
      %v1445 = vpop.xlane.xlu0 %1444
      %1446 = vmax.xlane.f32.xlu0 %v1417
      %v1447 = vpop.xlane.xlu0 %1446
      %1448 = vmax.xlane.f32.xlu0 %v1418
      %v1449 = vpop.xlane.xlu0 %1448
      %1450 = vmax.xlane.f32.xlu0 %v1419
      %v1451 = vpop.xlane.xlu0 %1450
      %v1452 = vsub.f32 %v1404, %v1421
      %v1453 = vsub.f32 %v1405, %v1423
      %v1454 = vsub.f32 %v1406, %v1425
      %v1455 = vsub.f32 %v1407, %v1427
      %v1456 = vsub.f32 %v1408, %v1429
      %v1457 = vsub.f32 %v1409, %v1431
      %v1458 = vsub.f32 %v1410, %v1433
      %v1459 = vsub.f32 %v1411, %v1435
      %v1460 = vsub.f32 %v1412, %v1437
      %v1461 = vsub.f32 %v1413, %v1439
      %v1462 = vsub.f32 %v1414, %v1441
      %v1463 = vsub.f32 %v1415, %v1443
      %v1464 = vsub.f32 %v1416, %v1445
      %v1465 = vsub.f32 %v1417, %v1447
      %v1466 = vsub.f32 %v1418, %v1449
      %v1467 = vsub.f32 %v1419, %v1451
      %v1468 = vmul.f32 %v1452, 1.442695
      %v1469 = vpow.pop %v1468
      %v1470 = vmul.f32 %v1453, 1.442695
      %v1471 = vpow.pop %v1470
      %v1472 = vmul.f32 %v1454, 1.442695
      %v1473 = vpow.pop %v1472
      %v1474 = vmul.f32 %v1455, 1.442695
      %v1475 = vpow.pop %v1474
      %v1476 = vmul.f32 %v1456, 1.442695
      %v1477 = vpow.pop %v1476
      %v1478 = vmul.f32 %v1457, 1.442695
      %v1479 = vpow.pop %v1478
      %v1480 = vmul.f32 %v1458, 1.442695
      %v1481 = vpow.pop %v1480
      %v1482 = vmul.f32 %v1459, 1.442695
      %v1483 = vpow.pop %v1482
      %v1484 = vmul.f32 %v1460, 1.442695
      %v1485 = vpow.pop %v1484
      %v1486 = vmul.f32 %v1461, 1.442695
      %v1487 = vpow.pop %v1486
      %v1488 = vmul.f32 %v1462, 1.442695
      %v1489 = vpow.pop %v1488
      %v1490 = vmul.f32 %v1463, 1.442695
      %v1491 = vpow.pop %v1490
      %v1492 = vmul.f32 %v1464, 1.442695
      %v1493 = vpow.pop %v1492
      %v1494 = vmul.f32 %v1465, 1.442695
      %v1495 = vpow.pop %v1494
      %v1496 = vmul.f32 %v1466, 1.442695
      %v1497 = vpow.pop %v1496
      %v1498 = vmul.f32 %v1467, 1.442695
      %v1499 = vpow.pop %v1498
      %1500 = vadd.xlane.f32.xlu0 %v1469
      %v1501 = vpop.xlane.xlu0 %1500
      %1502 = vadd.xlane.f32.xlu0 %v1471
      %v1503 = vpop.xlane.xlu0 %1502
      %1504 = vadd.xlane.f32.xlu0 %v1473
      %v1505 = vpop.xlane.xlu0 %1504
      %1506 = vadd.xlane.f32.xlu0 %v1475
      %v1507 = vpop.xlane.xlu0 %1506
      %1508 = vadd.xlane.f32.xlu0 %v1477
      %v1509 = vpop.xlane.xlu0 %1508
      %1510 = vadd.xlane.f32.xlu0 %v1479
      %v1511 = vpop.xlane.xlu0 %1510
      %1512 = vadd.xlane.f32.xlu0 %v1481
      %v1513 = vpop.xlane.xlu0 %1512
      %1514 = vadd.xlane.f32.xlu0 %v1483
      %v1515 = vpop.xlane.xlu0 %1514
      %1516 = vadd.xlane.f32.xlu0 %v1485
      %v1517 = vpop.xlane.xlu0 %1516
      %1518 = vadd.xlane.f32.xlu0 %v1487
      %v1519 = vpop.xlane.xlu0 %1518
      %1520 = vadd.xlane.f32.xlu0 %v1489
      %v1521 = vpop.xlane.xlu0 %1520
      %1522 = vadd.xlane.f32.xlu0 %v1491
      %v1523 = vpop.xlane.xlu0 %1522
      %1524 = vadd.xlane.f32.xlu0 %v1493
      %v1525 = vpop.xlane.xlu0 %1524
      %1526 = vadd.xlane.f32.xlu0 %v1495
      %v1527 = vpop.xlane.xlu0 %1526
      %1528 = vadd.xlane.f32.xlu0 %v1497
      %v1529 = vpop.xlane.xlu0 %1528
      %1530 = vadd.xlane.f32.xlu0 %v1499
      %v1531 = vpop.xlane.xlu0 %1530
      %v1532 = vlog2.pop %v1501
      %v1533 = vmul.f32 %v1532, 0.6931472
      %v1534 = vlog2.pop %v1503
      %v1535 = vmul.f32 %v1534, 0.6931472
      %v1536 = vlog2.pop %v1505
      %v1537 = vmul.f32 %v1536, 0.6931472
      %v1538 = vlog2.pop %v1507
      %v1539 = vmul.f32 %v1538, 0.6931472
      %v1540 = vlog2.pop %v1509
      %v1541 = vmul.f32 %v1540, 0.6931472
      %v1542 = vlog2.pop %v1511
      %v1543 = vmul.f32 %v1542, 0.6931472
      %v1544 = vlog2.pop %v1513
      %v1545 = vmul.f32 %v1544, 0.6931472
      %v1546 = vlog2.pop %v1515
      %v1547 = vmul.f32 %v1546, 0.6931472
      %v1548 = vlog2.pop %v1517
      %v1549 = vmul.f32 %v1548, 0.6931472
      %v1550 = vlog2.pop %v1519
      %v1551 = vmul.f32 %v1550, 0.6931472
      %v1552 = vlog2.pop %v1521
      %v1553 = vmul.f32 %v1552, 0.6931472
      %v1554 = vlog2.pop %v1523
      %v1555 = vmul.f32 %v1554, 0.6931472
      %v1556 = vlog2.pop %v1525
      %v1557 = vmul.f32 %v1556, 0.6931472
      %v1558 = vlog2.pop %v1527
      %v1559 = vmul.f32 %v1558, 0.6931472
      %v1560 = vlog2.pop %v1529
      %v1561 = vmul.f32 %v1560, 0.6931472
      %v1562 = vlog2.pop %v1531
      %v1563 = vmul.f32 %v1562, 0.6931472
      %v1564 = vadd.f32 %v1533, %v1421
      %v1565 = vadd.f32 %v1535, %v1423
      %v1566 = vadd.f32 %v1537, %v1425
      %v1567 = vadd.f32 %v1539, %v1427
      %v1568 = vadd.f32 %v1541, %v1429
      %v1569 = vadd.f32 %v1543, %v1431
      %v1570 = vadd.f32 %v1545, %v1433
      %v1571 = vadd.f32 %v1547, %v1435
      %v1572 = vadd.f32 %v1549, %v1437
      %v1573 = vadd.f32 %v1551, %v1439
      %v1574 = vadd.f32 %v1553, %v1441
      %v1575 = vadd.f32 %v1555, %v1443
      %v1576 = vadd.f32 %v1557, %v1445
      %v1577 = vadd.f32 %v1559, %v1447
      %v1578 = vadd.f32 %v1561, %v1449
      %v1579 = vadd.f32 %v1563, %v1451
      %1580 = vxpose.xlu0.b32.start [1/16] %v1564, 128
      %1581 = vxpose.xlu0.b32.cont [2/16] %v1565, 128
      %1582 = vxpose.xlu0.b32.cont [3/16] %v1566, 128
      %1583 = vxpose.xlu0.b32.cont [4/16] %v1567, 128
      %1584 = vxpose.xlu0.b32.cont [5/16] %v1568, 128
      %1585 = vxpose.xlu0.b32.cont [6/16] %v1569, 128
      %1586 = vxpose.xlu0.b32.cont [7/16] %v1570, 128
      %1587 = vxpose.xlu0.b32.cont [8/16] %v1571, 128
      %1588 = vxpose.xlu0.b32.cont [9/16] %v1572, 128
      %1589 = vxpose.xlu0.b32.cont [10/16] %v1573, 128
      %1590 = vxpose.xlu0.b32.cont [11/16] %v1574, 128
      %1591 = vxpose.xlu0.b32.cont [12/16] %v1575, 128
      %1592 = vxpose.xlu0.b32.cont [13/16] %v1576, 128
      %1593 = vxpose.xlu0.b32.cont [14/16] %v1577, 128
      %1594 = vxpose.xlu0.b32.cont [15/16] %v1578, 128
      %1595 = vxpose.xlu0.b32.end [16/16] %v1579, 128
      %v1596 = vpop.trf.xlu0
      %v1597 = vpop.trf.xlu0
      %v1598 = vpop.trf.xlu0
      %v1599 = vpop.trf.xlu0
      %v1600 = vpop.trf.xlu0
      %v1601 = vpop.trf.xlu0
      %v1602 = vpop.trf.xlu0
      %v1603 = vpop.trf.xlu0
      %v1604 = vpop.trf.xlu0
      %v1605 = vpop.trf.xlu0
      %v1606 = vpop.trf.xlu0
      %v1607 = vpop.trf.xlu0
      %v1608 = vpop.trf.xlu0
      %v1609 = vpop.trf.xlu0
      %v1610 = vpop.trf.xlu0
      %v1611 = vpop.trf.xlu0
      %v1612 = vadd.f32 %v1596, %v1398
      %1614 = vset.pattern.permute.xlu0 0
      %1615 = vperm.xlu0 %1614, %v1399
      %v1616 = vpop.permute.xlu0 %1615
      %v1618 = vmul.f32 %v1616, %v1612
      %v1619 = vsub.f32 1.0, %v1399
      %1621 = vset.pattern.permute.xlu0 0
      %1622 = vperm.xlu0 %1621, %v1619
      %v1623 = vpop.permute.xlu0 %1622
      %v1625 = vmul.f32 %v1623, %v1397
      %v1626 = vadd.f32 %v1618, %v1625
      %v1627 = vld [vmem:[%s294 + $0x6] sm:$0x1]
      %v1628 = vld [vmem:[%s302 + $0x6] sm:$0x1]
      %v1629 = vlaneseq
      %v1630 = vshrl.u32 %v1629, 7
      %v1631 = vsub.s32 0, %v1630
      %v1632 = vrot.slane %v1626, %v1631
      %v1633 = vadd.f32 %v1632, %v325
      %v1634 = vadd.f32 %v1632, %v326
      %v1635 = vadd.f32 %v1632, %v327
      %v1636 = vadd.f32 %v1632, %v328
      %v1637 = vadd.f32 %v1632, %v329
      %v1638 = vadd.f32 %v1632, %v330
      %v1639 = vadd.f32 %v1632, %v331
      %v1640 = vadd.f32 %v1632, %v332
      %v1641 = vadd.f32 %v1632, %v333
      %v1642 = vadd.f32 %v1632, %v334
      %v1643 = vadd.f32 %v1632, %v335
      %v1644 = vadd.f32 %v1632, %v336
      %v1645 = vadd.f32 %v1632, %v337
      %v1646 = vadd.f32 %v1632, %v338
      %v1647 = vadd.f32 %v1632, %v339
      %v1648 = vadd.f32 %v1632, %v340
      %1649 = vmax.xlane.f32.xlu0 %v1633
      %v1650 = vpop.xlane.xlu0 %1649
      %1651 = vmax.xlane.f32.xlu0 %v1634
      %v1652 = vpop.xlane.xlu0 %1651
      %1653 = vmax.xlane.f32.xlu0 %v1635
      %v1654 = vpop.xlane.xlu0 %1653
      %1655 = vmax.xlane.f32.xlu0 %v1636
      %v1656 = vpop.xlane.xlu0 %1655
      %1657 = vmax.xlane.f32.xlu0 %v1637
      %v1658 = vpop.xlane.xlu0 %1657
      %1659 = vmax.xlane.f32.xlu0 %v1638
      %v1660 = vpop.xlane.xlu0 %1659
      %1661 = vmax.xlane.f32.xlu0 %v1639
      %v1662 = vpop.xlane.xlu0 %1661
      %1663 = vmax.xlane.f32.xlu0 %v1640
      %v1664 = vpop.xlane.xlu0 %1663
      %1665 = vmax.xlane.f32.xlu0 %v1641
      %v1666 = vpop.xlane.xlu0 %1665
      %1667 = vmax.xlane.f32.xlu0 %v1642
      %v1668 = vpop.xlane.xlu0 %1667
      %1669 = vmax.xlane.f32.xlu0 %v1643
      %v1670 = vpop.xlane.xlu0 %1669
      %1671 = vmax.xlane.f32.xlu0 %v1644
      %v1672 = vpop.xlane.xlu0 %1671
      %1673 = vmax.xlane.f32.xlu0 %v1645
      %v1674 = vpop.xlane.xlu0 %1673
      %1675 = vmax.xlane.f32.xlu0 %v1646
      %v1676 = vpop.xlane.xlu0 %1675
      %1677 = vmax.xlane.f32.xlu0 %v1647
      %v1678 = vpop.xlane.xlu0 %1677
      %1679 = vmax.xlane.f32.xlu0 %v1648
      %v1680 = vpop.xlane.xlu0 %1679
      %v1681 = vsub.f32 %v1633, %v1650
      %v1682 = vsub.f32 %v1634, %v1652
      %v1683 = vsub.f32 %v1635, %v1654
      %v1684 = vsub.f32 %v1636, %v1656
      %v1685 = vsub.f32 %v1637, %v1658
      %v1686 = vsub.f32 %v1638, %v1660
      %v1687 = vsub.f32 %v1639, %v1662
      %v1688 = vsub.f32 %v1640, %v1664
      %v1689 = vsub.f32 %v1641, %v1666
      %v1690 = vsub.f32 %v1642, %v1668
      %v1691 = vsub.f32 %v1643, %v1670
      %v1692 = vsub.f32 %v1644, %v1672
      %v1693 = vsub.f32 %v1645, %v1674
      %v1694 = vsub.f32 %v1646, %v1676
      %v1695 = vsub.f32 %v1647, %v1678
      %v1696 = vsub.f32 %v1648, %v1680
      %v1697 = vmul.f32 %v1681, 1.442695
      %v1698 = vpow.pop %v1697
      %v1699 = vmul.f32 %v1682, 1.442695
      %v1700 = vpow.pop %v1699
      %v1701 = vmul.f32 %v1683, 1.442695
      %v1702 = vpow.pop %v1701
      %v1703 = vmul.f32 %v1684, 1.442695
      %v1704 = vpow.pop %v1703
      %v1705 = vmul.f32 %v1685, 1.442695
      %v1706 = vpow.pop %v1705
      %v1707 = vmul.f32 %v1686, 1.442695
      %v1708 = vpow.pop %v1707
      %v1709 = vmul.f32 %v1687, 1.442695
      %v1710 = vpow.pop %v1709
      %v1711 = vmul.f32 %v1688, 1.442695
      %v1712 = vpow.pop %v1711
      %v1713 = vmul.f32 %v1689, 1.442695
      %v1714 = vpow.pop %v1713
      %v1715 = vmul.f32 %v1690, 1.442695
      %v1716 = vpow.pop %v1715
      %v1717 = vmul.f32 %v1691, 1.442695
      %v1718 = vpow.pop %v1717
      %v1719 = vmul.f32 %v1692, 1.442695
      %v1720 = vpow.pop %v1719
      %v1721 = vmul.f32 %v1693, 1.442695
      %v1722 = vpow.pop %v1721
      %v1723 = vmul.f32 %v1694, 1.442695
      %v1724 = vpow.pop %v1723
      %v1725 = vmul.f32 %v1695, 1.442695
      %v1726 = vpow.pop %v1725
      %v1727 = vmul.f32 %v1696, 1.442695
      %v1728 = vpow.pop %v1727
      %1729 = vadd.xlane.f32.xlu0 %v1698
      %v1730 = vpop.xlane.xlu0 %1729
      %1731 = vadd.xlane.f32.xlu0 %v1700
      %v1732 = vpop.xlane.xlu0 %1731
      %1733 = vadd.xlane.f32.xlu0 %v1702
      %v1734 = vpop.xlane.xlu0 %1733
      %1735 = vadd.xlane.f32.xlu0 %v1704
      %v1736 = vpop.xlane.xlu0 %1735
      %1737 = vadd.xlane.f32.xlu0 %v1706
      %v1738 = vpop.xlane.xlu0 %1737
      %1739 = vadd.xlane.f32.xlu0 %v1708
      %v1740 = vpop.xlane.xlu0 %1739
      %1741 = vadd.xlane.f32.xlu0 %v1710
      %v1742 = vpop.xlane.xlu0 %1741
      %1743 = vadd.xlane.f32.xlu0 %v1712
      %v1744 = vpop.xlane.xlu0 %1743
      %1745 = vadd.xlane.f32.xlu0 %v1714
      %v1746 = vpop.xlane.xlu0 %1745
      %1747 = vadd.xlane.f32.xlu0 %v1716
      %v1748 = vpop.xlane.xlu0 %1747
      %1749 = vadd.xlane.f32.xlu0 %v1718
      %v1750 = vpop.xlane.xlu0 %1749
      %1751 = vadd.xlane.f32.xlu0 %v1720
      %v1752 = vpop.xlane.xlu0 %1751
      %1753 = vadd.xlane.f32.xlu0 %v1722
      %v1754 = vpop.xlane.xlu0 %1753
      %1755 = vadd.xlane.f32.xlu0 %v1724
      %v1756 = vpop.xlane.xlu0 %1755
      %1757 = vadd.xlane.f32.xlu0 %v1726
      %v1758 = vpop.xlane.xlu0 %1757
      %1759 = vadd.xlane.f32.xlu0 %v1728
      %v1760 = vpop.xlane.xlu0 %1759
      %v1761 = vlog2.pop %v1730
      %v1762 = vmul.f32 %v1761, 0.6931472
      %v1763 = vlog2.pop %v1732
      %v1764 = vmul.f32 %v1763, 0.6931472
      %v1765 = vlog2.pop %v1734
      %v1766 = vmul.f32 %v1765, 0.6931472
      %v1767 = vlog2.pop %v1736
      %v1768 = vmul.f32 %v1767, 0.6931472
      %v1769 = vlog2.pop %v1738
      %v1770 = vmul.f32 %v1769, 0.6931472
      %v1771 = vlog2.pop %v1740
      %v1772 = vmul.f32 %v1771, 0.6931472
      %v1773 = vlog2.pop %v1742
      %v1774 = vmul.f32 %v1773, 0.6931472
      %v1775 = vlog2.pop %v1744
      %v1776 = vmul.f32 %v1775, 0.6931472
      %v1777 = vlog2.pop %v1746
      %v1778 = vmul.f32 %v1777, 0.6931472
      %v1779 = vlog2.pop %v1748
      %v1780 = vmul.f32 %v1779, 0.6931472
      %v1781 = vlog2.pop %v1750
      %v1782 = vmul.f32 %v1781, 0.6931472
      %v1783 = vlog2.pop %v1752
      %v1784 = vmul.f32 %v1783, 0.6931472
      %v1785 = vlog2.pop %v1754
      %v1786 = vmul.f32 %v1785, 0.6931472
      %v1787 = vlog2.pop %v1756
      %v1788 = vmul.f32 %v1787, 0.6931472
      %v1789 = vlog2.pop %v1758
      %v1790 = vmul.f32 %v1789, 0.6931472
      %v1791 = vlog2.pop %v1760
      %v1792 = vmul.f32 %v1791, 0.6931472
      %v1793 = vadd.f32 %v1762, %v1650
      %v1794 = vadd.f32 %v1764, %v1652
      %v1795 = vadd.f32 %v1766, %v1654
      %v1796 = vadd.f32 %v1768, %v1656
      %v1797 = vadd.f32 %v1770, %v1658
      %v1798 = vadd.f32 %v1772, %v1660
      %v1799 = vadd.f32 %v1774, %v1662
      %v1800 = vadd.f32 %v1776, %v1664
      %v1801 = vadd.f32 %v1778, %v1666
      %v1802 = vadd.f32 %v1780, %v1668
      %v1803 = vadd.f32 %v1782, %v1670
      %v1804 = vadd.f32 %v1784, %v1672
      %v1805 = vadd.f32 %v1786, %v1674
      %v1806 = vadd.f32 %v1788, %v1676
      %v1807 = vadd.f32 %v1790, %v1678
      %v1808 = vadd.f32 %v1792, %v1680
      %1809 = vxpose.xlu0.b32.start [1/16] %v1793, 128
      %1810 = vxpose.xlu0.b32.cont [2/16] %v1794, 128
      %1811 = vxpose.xlu0.b32.cont [3/16] %v1795, 128
      %1812 = vxpose.xlu0.b32.cont [4/16] %v1796, 128
      %1813 = vxpose.xlu0.b32.cont [5/16] %v1797, 128
      %1814 = vxpose.xlu0.b32.cont [6/16] %v1798, 128
      %1815 = vxpose.xlu0.b32.cont [7/16] %v1799, 128
      %1816 = vxpose.xlu0.b32.cont [8/16] %v1800, 128
      %1817 = vxpose.xlu0.b32.cont [9/16] %v1801, 128
      %1818 = vxpose.xlu0.b32.cont [10/16] %v1802, 128
      %1819 = vxpose.xlu0.b32.cont [11/16] %v1803, 128
      %1820 = vxpose.xlu0.b32.cont [12/16] %v1804, 128
      %1821 = vxpose.xlu0.b32.cont [13/16] %v1805, 128
      %1822 = vxpose.xlu0.b32.cont [14/16] %v1806, 128
      %1823 = vxpose.xlu0.b32.cont [15/16] %v1807, 128
      %1824 = vxpose.xlu0.b32.end [16/16] %v1808, 128
      %v1825 = vpop.trf.xlu0
      %v1826 = vpop.trf.xlu0
      %v1827 = vpop.trf.xlu0
      %v1828 = vpop.trf.xlu0
      %v1829 = vpop.trf.xlu0
      %v1830 = vpop.trf.xlu0
      %v1831 = vpop.trf.xlu0
      %v1832 = vpop.trf.xlu0
      %v1833 = vpop.trf.xlu0
      %v1834 = vpop.trf.xlu0
      %v1835 = vpop.trf.xlu0
      %v1836 = vpop.trf.xlu0
      %v1837 = vpop.trf.xlu0
      %v1838 = vpop.trf.xlu0
      %v1839 = vpop.trf.xlu0
      %v1840 = vpop.trf.xlu0
      %v1841 = vadd.f32 %v1825, %v1627
      %1843 = vset.pattern.permute.xlu0 0
      %1844 = vperm.xlu0 %1843, %v1628
      %v1845 = vpop.permute.xlu0 %1844
      %v1847 = vmul.f32 %v1845, %v1841
      %v1848 = vsub.f32 1.0, %v1628
      %1850 = vset.pattern.permute.xlu0 0
      %1851 = vperm.xlu0 %1850, %v1848
      %v1852 = vpop.permute.xlu0 %1851
      %v1854 = vmul.f32 %v1852, %v1626
      %v1855 = vadd.f32 %v1847, %v1854
      %v1856 = vld [vmem:[%s294 + $0x7] sm:$0x1]
      %v1857 = vld [vmem:[%s302 + $0x7] sm:$0x1]
      %v1858 = vlaneseq
      %v1859 = vshrl.u32 %v1858, 7
      %v1860 = vsub.s32 0, %v1859
      %v1861 = vrot.slane %v1855, %v1860
      %v1862 = vadd.f32 %v1861, %v325
      %v1863 = vadd.f32 %v1861, %v326
      %v1864 = vadd.f32 %v1861, %v327
      %v1865 = vadd.f32 %v1861, %v328
      %v1866 = vadd.f32 %v1861, %v329
      %v1867 = vadd.f32 %v1861, %v330
      %v1868 = vadd.f32 %v1861, %v331
      %v1869 = vadd.f32 %v1861, %v332
      %v1870 = vadd.f32 %v1861, %v333
      %v1871 = vadd.f32 %v1861, %v334
      %v1872 = vadd.f32 %v1861, %v335
      %v1873 = vadd.f32 %v1861, %v336
      %v1874 = vadd.f32 %v1861, %v337
      %v1875 = vadd.f32 %v1861, %v338
      %v1876 = vadd.f32 %v1861, %v339
      %v1877 = vadd.f32 %v1861, %v340
      %1878 = vmax.xlane.f32.xlu0 %v1862
      %v1879 = vpop.xlane.xlu0 %1878
      %1880 = vmax.xlane.f32.xlu0 %v1863
      %v1881 = vpop.xlane.xlu0 %1880
      %1882 = vmax.xlane.f32.xlu0 %v1864
      %v1883 = vpop.xlane.xlu0 %1882
      %1884 = vmax.xlane.f32.xlu0 %v1865
      %v1885 = vpop.xlane.xlu0 %1884
      %1886 = vmax.xlane.f32.xlu0 %v1866
      %v1887 = vpop.xlane.xlu0 %1886
      %1888 = vmax.xlane.f32.xlu0 %v1867
      %v1889 = vpop.xlane.xlu0 %1888
      %1890 = vmax.xlane.f32.xlu0 %v1868
      %v1891 = vpop.xlane.xlu0 %1890
      %1892 = vmax.xlane.f32.xlu0 %v1869
      %v1893 = vpop.xlane.xlu0 %1892
      %1894 = vmax.xlane.f32.xlu0 %v1870
      %v1895 = vpop.xlane.xlu0 %1894
      %1896 = vmax.xlane.f32.xlu0 %v1871
      %v1897 = vpop.xlane.xlu0 %1896
      %1898 = vmax.xlane.f32.xlu0 %v1872
      %v1899 = vpop.xlane.xlu0 %1898
      %1900 = vmax.xlane.f32.xlu0 %v1873
      %v1901 = vpop.xlane.xlu0 %1900
      %1902 = vmax.xlane.f32.xlu0 %v1874
      %v1903 = vpop.xlane.xlu0 %1902
      %1904 = vmax.xlane.f32.xlu0 %v1875
      %v1905 = vpop.xlane.xlu0 %1904
      %1906 = vmax.xlane.f32.xlu0 %v1876
      %v1907 = vpop.xlane.xlu0 %1906
      %1908 = vmax.xlane.f32.xlu0 %v1877
      %v1909 = vpop.xlane.xlu0 %1908
      %v1910 = vsub.f32 %v1862, %v1879
      %v1911 = vsub.f32 %v1863, %v1881
      %v1912 = vsub.f32 %v1864, %v1883
      %v1913 = vsub.f32 %v1865, %v1885
      %v1914 = vsub.f32 %v1866, %v1887
      %v1915 = vsub.f32 %v1867, %v1889
      %v1916 = vsub.f32 %v1868, %v1891
      %v1917 = vsub.f32 %v1869, %v1893
      %v1918 = vsub.f32 %v1870, %v1895
      %v1919 = vsub.f32 %v1871, %v1897
      %v1920 = vsub.f32 %v1872, %v1899
      %v1921 = vsub.f32 %v1873, %v1901
      %v1922 = vsub.f32 %v1874, %v1903
      %v1923 = vsub.f32 %v1875, %v1905
      %v1924 = vsub.f32 %v1876, %v1907
      %v1925 = vsub.f32 %v1877, %v1909
      %v1926 = vmul.f32 %v1910, 1.442695
      %v1927 = vpow.pop %v1926
      %v1928 = vmul.f32 %v1911, 1.442695
      %v1929 = vpow.pop %v1928
      %v1930 = vmul.f32 %v1912, 1.442695
      %v1931 = vpow.pop %v1930
      %v1932 = vmul.f32 %v1913, 1.442695
      %v1933 = vpow.pop %v1932
      %v1934 = vmul.f32 %v1914, 1.442695
      %v1935 = vpow.pop %v1934
      %v1936 = vmul.f32 %v1915, 1.442695
      %v1937 = vpow.pop %v1936
      %v1938 = vmul.f32 %v1916, 1.442695
      %v1939 = vpow.pop %v1938
      %v1940 = vmul.f32 %v1917, 1.442695
      %v1941 = vpow.pop %v1940
      %v1942 = vmul.f32 %v1918, 1.442695
      %v1943 = vpow.pop %v1942
      %v1944 = vmul.f32 %v1919, 1.442695
      %v1945 = vpow.pop %v1944
      %v1946 = vmul.f32 %v1920, 1.442695
      %v1947 = vpow.pop %v1946
      %v1948 = vmul.f32 %v1921, 1.442695
      %v1949 = vpow.pop %v1948
      %v1950 = vmul.f32 %v1922, 1.442695
      %v1951 = vpow.pop %v1950
      %v1952 = vmul.f32 %v1923, 1.442695
      %v1953 = vpow.pop %v1952
      %v1954 = vmul.f32 %v1924, 1.442695
      %v1955 = vpow.pop %v1954
      %v1956 = vmul.f32 %v1925, 1.442695
      %v1957 = vpow.pop %v1956
      %1958 = vadd.xlane.f32.xlu0 %v1927
      %v1959 = vpop.xlane.xlu0 %1958
      %1960 = vadd.xlane.f32.xlu0 %v1929
      %v1961 = vpop.xlane.xlu0 %1960
      %1962 = vadd.xlane.f32.xlu0 %v1931
      %v1963 = vpop.xlane.xlu0 %1962
      %1964 = vadd.xlane.f32.xlu0 %v1933
      %v1965 = vpop.xlane.xlu0 %1964
      %1966 = vadd.xlane.f32.xlu0 %v1935
      %v1967 = vpop.xlane.xlu0 %1966
      %1968 = vadd.xlane.f32.xlu0 %v1937
      %v1969 = vpop.xlane.xlu0 %1968
      %1970 = vadd.xlane.f32.xlu0 %v1939
      %v1971 = vpop.xlane.xlu0 %1970
      %1972 = vadd.xlane.f32.xlu0 %v1941
      %v1973 = vpop.xlane.xlu0 %1972
      %1974 = vadd.xlane.f32.xlu0 %v1943
      %v1975 = vpop.xlane.xlu0 %1974
      %1976 = vadd.xlane.f32.xlu0 %v1945
      %v1977 = vpop.xlane.xlu0 %1976
      %1978 = vadd.xlane.f32.xlu0 %v1947
      %v1979 = vpop.xlane.xlu0 %1978
      %1980 = vadd.xlane.f32.xlu0 %v1949
      %v1981 = vpop.xlane.xlu0 %1980
      %1982 = vadd.xlane.f32.xlu0 %v1951
      %v1983 = vpop.xlane.xlu0 %1982
      %1984 = vadd.xlane.f32.xlu0 %v1953
      %v1985 = vpop.xlane.xlu0 %1984
      %1986 = vadd.xlane.f32.xlu0 %v1955
      %v1987 = vpop.xlane.xlu0 %1986
      %1988 = vadd.xlane.f32.xlu0 %v1957
      %v1989 = vpop.xlane.xlu0 %1988
      %v1990 = vlog2.pop %v1959
      %v1991 = vmul.f32 %v1990, 0.6931472
      %v1992 = vlog2.pop %v1961
      %v1993 = vmul.f32 %v1992, 0.6931472
      %v1994 = vlog2.pop %v1963
      %v1995 = vmul.f32 %v1994, 0.6931472
      %v1996 = vlog2.pop %v1965
      %v1997 = vmul.f32 %v1996, 0.6931472
      %v1998 = vlog2.pop %v1967
      %v1999 = vmul.f32 %v1998, 0.6931472
      %v2000 = vlog2.pop %v1969
      %v2001 = vmul.f32 %v2000, 0.6931472
      %v2002 = vlog2.pop %v1971
      %v2003 = vmul.f32 %v2002, 0.6931472
      %v2004 = vlog2.pop %v1973
      %v2005 = vmul.f32 %v2004, 0.6931472
      %v2006 = vlog2.pop %v1975
      %v2007 = vmul.f32 %v2006, 0.6931472
      %v2008 = vlog2.pop %v1977
      %v2009 = vmul.f32 %v2008, 0.6931472
      %v2010 = vlog2.pop %v1979
      %v2011 = vmul.f32 %v2010, 0.6931472
      %v2012 = vlog2.pop %v1981
      %v2013 = vmul.f32 %v2012, 0.6931472
      %v2014 = vlog2.pop %v1983
      %v2015 = vmul.f32 %v2014, 0.6931472
      %v2016 = vlog2.pop %v1985
      %v2017 = vmul.f32 %v2016, 0.6931472
      %v2018 = vlog2.pop %v1987
      %v2019 = vmul.f32 %v2018, 0.6931472
      %v2020 = vlog2.pop %v1989
      %v2021 = vmul.f32 %v2020, 0.6931472
      %v2022 = vadd.f32 %v1991, %v1879
      %v2023 = vadd.f32 %v1993, %v1881
      %v2024 = vadd.f32 %v1995, %v1883
      %v2025 = vadd.f32 %v1997, %v1885
      %v2026 = vadd.f32 %v1999, %v1887
      %v2027 = vadd.f32 %v2001, %v1889
      %v2028 = vadd.f32 %v2003, %v1891
      %v2029 = vadd.f32 %v2005, %v1893
      %v2030 = vadd.f32 %v2007, %v1895
      %v2031 = vadd.f32 %v2009, %v1897
      %v2032 = vadd.f32 %v2011, %v1899
      %v2033 = vadd.f32 %v2013, %v1901
      %v2034 = vadd.f32 %v2015, %v1903
      %v2035 = vadd.f32 %v2017, %v1905
      %v2036 = vadd.f32 %v2019, %v1907
      %v2037 = vadd.f32 %v2021, %v1909
      %2038 = vxpose.xlu0.b32.start [1/16] %v2022, 128
      %2039 = vxpose.xlu0.b32.cont [2/16] %v2023, 128
      %2040 = vxpose.xlu0.b32.cont [3/16] %v2024, 128
      %2041 = vxpose.xlu0.b32.cont [4/16] %v2025, 128
      %2042 = vxpose.xlu0.b32.cont [5/16] %v2026, 128
      %2043 = vxpose.xlu0.b32.cont [6/16] %v2027, 128
      %2044 = vxpose.xlu0.b32.cont [7/16] %v2028, 128
      %2045 = vxpose.xlu0.b32.cont [8/16] %v2029, 128
      %2046 = vxpose.xlu0.b32.cont [9/16] %v2030, 128
      %2047 = vxpose.xlu0.b32.cont [10/16] %v2031, 128
      %2048 = vxpose.xlu0.b32.cont [11/16] %v2032, 128
      %2049 = vxpose.xlu0.b32.cont [12/16] %v2033, 128
      %2050 = vxpose.xlu0.b32.cont [13/16] %v2034, 128
      %2051 = vxpose.xlu0.b32.cont [14/16] %v2035, 128
      %2052 = vxpose.xlu0.b32.cont [15/16] %v2036, 128
      %2053 = vxpose.xlu0.b32.end [16/16] %v2037, 128
      %v2054 = vpop.trf.xlu0
      %v2055 = vpop.trf.xlu0
      %v2056 = vpop.trf.xlu0
      %v2057 = vpop.trf.xlu0
      %v2058 = vpop.trf.xlu0
      %v2059 = vpop.trf.xlu0
      %v2060 = vpop.trf.xlu0
      %v2061 = vpop.trf.xlu0
      %v2062 = vpop.trf.xlu0
      %v2063 = vpop.trf.xlu0
      %v2064 = vpop.trf.xlu0
      %v2065 = vpop.trf.xlu0
      %v2066 = vpop.trf.xlu0
      %v2067 = vpop.trf.xlu0
      %v2068 = vpop.trf.xlu0
      %v2069 = vpop.trf.xlu0
      %v2070 = vadd.f32 %v2054, %v1856
      %2072 = vset.pattern.permute.xlu0 0
      %2073 = vperm.xlu0 %2072, %v1857
      %v2074 = vpop.permute.xlu0 %2073
      %v2076 = vmul.f32 %v2074, %v2070
      %v2077 = vsub.f32 1.0, %v1857
      %2079 = vset.pattern.permute.xlu0 0
      %2080 = vperm.xlu0 %2079, %v2077
      %v2081 = vpop.permute.xlu0 %2080
      %v2083 = vmul.f32 %v2081, %v1855
      %v2084 = vadd.f32 %v2076, %v2083
      %v2085 = vadd.f32 %v2084, %v342
      %v2086 = vsel %vm347, %v2085, -inf
      %2087 = vmax.xlane.f32.xlu0 %v2086
      %v2088 = vpop.xlane.xlu0 %2087
      %v2089 = vsub.f32 %v2085, %v2088
      %v2090 = vmul.f32 %v2089, 1.442695
      %v2091 = vpow.pop %v2090
      %v2092 = vsel %vm347, %v2091, 0.0
      %2093 = vadd.xlane.f32.xlu0 %v2092
      %v2094 = vpop.xlane.xlu0 %2093
      %v2095 = vlog2.pop %v2094
      %v2096 = vmul.f32 %v2095, 0.6931472
      %v2097 = vadd.f32 %v2096, %v2088
      %v2098 = vsub.f32 %v478, %v2097
      %vm2099 = vcmask 0
      %2100 = vst.msk [vmem:[%s305] sm:$0x1] %vm2099, %v2098
      %p2101 = scmp.lt.s32.totalorder %s18, 1
      %s2102 = scalar_select %p2101, %s18, 1
      %s2103 = scalar_lea.vmem %s7, %s2102
      // Predicated region
      $region49: #{bert_crf_forward.25} parent=47 // pred_check
        %p2104 = pneg %p198
      $region50: #{bert_crf_forward.25} parent=47 // pred_check_branch
        %2106 = sbr.rel (%p2104) target = $region52
      $region51: #{bert_crf_forward.25} parent=47 // pred_region
        _
      $region52: #{bert_crf_forward.25} parent=47 // pred_fallthru
        _
    $region48: #{bert_crf_forward.25} parent=5 // pred_fallthru
      _
    %p2107 = scmp.le.s32.totalorder 2, %s13
    // Predicated region
    $region53: #{bert_crf_forward.25} parent=5 // pred_check
      %p2108 = pneg %p2107
    $region54: #{bert_crf_forward.25} parent=5 // pred_check_branch
      %2110 = sbr.rel (%p2108) target = $region56
    $region55: #{bert_crf_forward.25} parent=5 // pred_region
      %s2111 = ssub.s32 %s13, 2
      // Predicated region
      $region57: #{bert_crf_forward.25} parent=55 // pred_check
        %p2112 = pneg %p204
      $region58: #{bert_crf_forward.25} parent=55 // pred_check_branch
        %2114 = sbr.rel (%p2112) target = $region60
      $region59: #{bert_crf_forward.25} parent=55 // pred_region
        %p2115 = scmp.lt.s32.totalorder %s19, 1
        %s2116 = scalar_select %p2115, %s19, 1
        %s2117 = scalar_lea.vmem %s7, %s2116
      $region60: #{bert_crf_forward.25} parent=55 // pred_fallthru
        _
    $region56: #{bert_crf_forward.25} parent=5 // pred_fallthru
      _
  $region6: #{bert_crf_forward.25} parent=0 // loop_footer
    %s17 = sadd.s32 1, %s13
  $region7: #{bert_crf_forward.25} parent=0 // loop_footer_branch
    %12 = sbr.rel target = $region3
  $region8: #{bert_crf_forward.25} parent=0 // loop_exit
    _

</llo_original>
